<compile_context>
chip_gen: v5e
topology: v5e:2x2
jax: 0.10.0
libtpu: 0.0.40
codegen_flags: <defaults>
</compile_context>

<pallas_src>
import numpy as np
import jax
import jax.numpy as jnp
from jax.experimental import pallas as pl
from jax.experimental.pallas import tpu as pltpu


# ----------------------------------------------------------------------------
# Host-side constant selection tensors used to pre-scatter the conv weights
# into dense matmul form (built once with numpy, independent of the weights).
# ----------------------------------------------------------------------------
def _build_sel1():
    # [d=(dy,dx) pool offset, p=(ry,rx) output parity, g=(qy,qx) block shift,
    #  s=(sy,sx) stride-4 sub-grid row, ki, kj]
    sel = np.zeros((4, 4, 4, 16, 5, 5), np.float32)
    for dy in range(2):
        for dx in range(2):
            d = dy * 2 + dx
            for ry in range(2):
                for rx in range(2):
                    p = ry * 2 + rx
                    for ki in range(5):
                        for kj in range(5):
                            qy, sy = divmod(2 * ry + dy + ki, 4)
                            qx, sx = divmod(2 * rx + dx + kj, 4)
                            sel[d, p, qy * 2 + qx, sy * 4 + sx, ki, kj] = 1.0
    return sel


def _build_sel2():
    # [d=(dy,dx) pool offset, o=(qy,qx) block shift, p=(ry,rx) parity, ki, kj]
    sel = np.zeros((4, 9, 4, 5, 5), np.float32)
    for dy in range(2):
        for dx in range(2):
            d = dy * 2 + dx
            for ki in range(5):
                for kj in range(5):
                    qy, ry = divmod(dy + ki, 2)
                    qx, rx = divmod(dx + kj, 2)
                    sel[d, qy * 3 + qx, ry * 2 + rx, ki, kj] = 1.0
    return sel


_SEL1 = _build_sel1()
_SEL2 = _build_sel2()


# ----------------------------------------------------------------------------
# One-time weight repacking (kept OUT of the per-step traced forward).
# ----------------------------------------------------------------------------
def prepare_params(params):
    (w1, b1, w2, b2, wf1, bf1, wf2, bf2, wf3, bf3, wo, bo) = params
    f32, bf16 = jnp.float32, jnp.bfloat16

    # conv1: rows d*24 + p*6 + c, cols g*16 + s
    w1_all = jnp.einsum('dpgskl,ckl->dpcgs', jnp.asarray(_SEL1),
                        w1.reshape(6, 5, 5).astype(f32)).reshape(96, 64)
    b1_t = jnp.tile(b1.astype(f32).reshape(1, 6), (4, 1)).reshape(24, 1)

    # conv2: rows d*16 + co (out channels zero-padded 12->16), cols o*24+p*6+ci
    w2_all = jnp.einsum('dopkl,mnkl->dmopn', jnp.asarray(_SEL2),
                        w2.astype(f32))                       # (4,12,9,4,6)
    w2_all = jnp.pad(w2_all, ((0, 0), (0, 4), (0, 0), (0, 0), (0, 0)))
    w2_all = w2_all.reshape(64, 216)
    b2_t = jnp.pad(b2.astype(f32), (0, 4)).reshape(16, 1)

    # fc1: cols (i*5+j)*16 + co (channel groups zero-padded 12->16)
    wf1_r = wf1.astype(f32).reshape(120, 12, 5, 5).transpose(0, 2, 3, 1)
    wf1_r = jnp.pad(wf1_r, ((0, 0), (0, 0), (0, 0), (0, 4))).reshape(120, 400)

    # out: rows zero-padded 1 -> 8 so the final store is one clean full block
    wo_p = jnp.pad(wo.astype(f32), ((0, 7), (0, 0)))          # (8, 16)
    bo_p = jnp.pad(bo.astype(f32).reshape(1, 1), ((0, 7), (0, 0)))

    return (w1_all.astype(bf16), b1_t,
            w2_all.astype(bf16), b2_t,
            wf1_r.astype(bf16), bf1.astype(f32).reshape(120, 1),
            wf2.astype(bf16), bf2.astype(f32).reshape(60, 1),
            wf3.astype(bf16), bf3.astype(f32).reshape(16, 1),
            wo_p.astype(bf16), bo_p)


# ----------------------------------------------------------------------------
# The fused kernel (one grid step = Bt samples, sample index lane-minor).
# ----------------------------------------------------------------------------
def _lenet_kernel(x_ref, w1_ref, b1_ref, w2_ref, b2_ref, wf1_ref, bf1_ref,
                  wf2_ref, bf2_ref, wf3_ref, bf3_ref, wo_ref, bo_ref,
                  o_ref, x1_s, p1_s, x2_s, d_s, f_s):
    f32 = jnp.float32
    bf16 = jnp.bfloat16
    Bt = f_s.shape[-1]          # samples per grid step
    L1 = x1_s.shape[-1]         # 55*Bt : lanes carrying valid pooled1 blocks
    L2 = x2_s.shape[-1]         # 37*Bt : lanes carrying valid pooled2 blocks

    # ---- stage 1: conv1 as ONE (96,64)x(64,L1) dot + pool + bias + ReLU -----
    for g, off in enumerate((0, Bt, 8 * Bt, 9 * Bt)):          # (qy,qx) shifts
        x1_s[g * 16:(g + 1) * 16, :] = x_ref[0, :, off:off + L1]
    c1 = jnp.dot(w1_ref[...], x1_s[...], preferred_element_type=f32)   # (96,L1)
    p1 = jnp.maximum(jnp.maximum(c1[0:24], c1[24:48]),
                     jnp.maximum(c1[48:72], c1[72:96]))
    p1_s[...] = jnp.maximum(p1 + b1_ref[...], 0.0)                     # f32

    # ---- stage 2: conv2 as ONE (64,216)x(216,L2) dot + pool + bias + ReLU ---
    for o, off in enumerate((0, Bt, 2 * Bt, 8 * Bt, 9 * Bt, 10 * Bt,
                             16 * Bt, 17 * Bt, 18 * Bt)):
        x2_s[o * 24:(o + 1) * 24, :] = p1_s[:, off:off + L2]
    c2 = jnp.dot(w2_ref[...], x2_s[...].astype(bf16),
                 preferred_element_type=f32)                           # (64,L2)
    p2 = jnp.maximum(jnp.maximum(c2[0:16], c2[16:32]),
                     jnp.maximum(c2[32:48], c2[48:64]))
    d_s[...] = jnp.maximum(p2 + b2_ref[...], 0.0).astype(bf16)         # (16,L2)

    # ---- fc head on a dense (400, Bt) gathered feature slab -----------------
    for o in range(25):
        i, j = divmod(o, 5)
        off = (i * 8 + j) * Bt
        f_s[o * 16:(o + 1) * 16, :] = d_s[:, off:off + Bt]
    a = jnp.dot(wf1_ref[...], f_s[...], preferred_element_type=f32) + bf1_ref[...]
    a = jnp.maximum(a, 0.0).astype(bf16)                               # (120,Bt)
    a = jnp.dot(wf2_ref[...], a, preferred_element_type=f32) + bf2_ref[...]
    a = jnp.maximum(a, 0.0).astype(bf16)                               # (60,Bt)
    a = jnp.dot(wf3_ref[...], a, preferred_element_type=f32) + bf3_ref[...]
    a = jnp.maximum(a, 0.0).astype(bf16)                               # (16,Bt)
    y = jnp.dot(wo_ref[...], a, preferred_element_type=f32) + bo_ref[...]  # (8,Bt)
    o_ref[0, :, :] = y                                                 # row 0 = result


# ----------------------------------------------------------------------------
# Wrapper
# ----------------------------------------------------------------------------
def network_forward(x, kernel_params, *, batch_tile=32):
    """LeNet forward.  `batch_tile` samples per grid step (must be even).
    On v7x pick batch_tile <= B/2 so the 'parallel' axis spans both cores."""
    (w1_all, b1_t, w2_all, b2_t, wf1_r, bf1_t,
     wf2_t, bf2_t, wf3_t, bf3_t, wo_t, bo_t) = kernel_params
    B = x.shape[0]
    assert x.shape[1:] == (1, 32, 32), x.shape
    Bt = batch_tile
    assert Bt % 2 == 0, "batch_tile must be even so 64*Bt is a multiple of 128"
    nb = (B + Bt - 1) // Bt
    Bp = nb * Bt
    LB = 64 * Bt
    L1 = 55 * Bt
    L2 = 37 * Bt

    xp = jnp.pad(x.astype(jnp.float32), ((0, Bp - B), (0, 0), (0, 0), (0, 0)))
    # stride-4 space-to-depth with the sample index lane-minor:
    #   x4[n, sy*4+sx, (u*8+v)*Bt + t] = x[n*Bt + t, 0, 4u+sy, 4v+sx]
    x4 = (xp.reshape(nb, Bt, 8, 4, 8, 4)
            .transpose(0, 3, 5, 2, 4, 1)
            .reshape(nb, 16, LB)
            .astype(jnp.bfloat16))

    def cspec(shape):
        return pl.BlockSpec(shape, lambda i, _n=len(shape): (0,) * _n)

    out = pl.pallas_call(
        _lenet_kernel,
        out_shape=jax.ShapeDtypeStruct((nb, 8, Bt), jnp.float32),
        grid=(nb,),
        in_specs=[
            pl.BlockSpec((1, 16, LB), lambda i: (i, 0, 0)),
            cspec((96, 64)), cspec((24, 1)),
            cspec((64, 216)), cspec((16, 1)),
            cspec((120, 400)), cspec((120, 1)),
            cspec((60, 120)), cspec((60, 1)),
            cspec((16, 60)), cspec((16, 1)),
            cspec((8, 16)), cspec((8, 1)),
        ],
        out_specs=pl.BlockSpec((1, 8, Bt), lambda i: (i, 0, 0)),
        scratch_shapes=[
            pltpu.VMEM((64, L1), jnp.bfloat16),    # conv1 shifted-input concat
            pltpu.VMEM((24, L1), jnp.float32),     # pooled1 activations
            pltpu.VMEM((216, L2), jnp.float32),    # conv2 shifted-input concat
            pltpu.VMEM((16, L2), jnp.bfloat16),    # pooled2 activations (12->16)
            pltpu.VMEM((400, Bt), jnp.bfloat16),   # gathered fc1 features
        ],
        compiler_params=pltpu.CompilerParams(
            dimension_semantics=("parallel",),
            vmem_limit_bytes=32 * 1024 * 1024),
    )(x4, w1_all, b1_t, w2_all, b2_t, wf1_r, bf1_t,
      wf2_t, bf2_t, wf3_t, bf3_t, wo_t, bo_t)

    y = out[:, 0, :].reshape(Bp, 1)
    return y[:B]


# ----------------------------------------------------------------------------
# Pure-JAX reference (mirrors the PyTorch forward)
# ----------------------------------------------------------------------------
def reference_forward(x, params):
    (w1, b1, w2, b2, wf1, bf1, wf2, bf2, wf3, bf3, wo, bo) = params
    dn = ("NCHW", "OIHW", "NCHW")

    def maxpool2(t):
        init = jnp.array(-jnp.inf, dtype=t.dtype)
        return jax.lax.reduce_window(t, init, jax.lax.max,
                                     (1, 1, 2, 2), (1, 1, 2, 2), "VALID")

    t = jax.lax.conv_general_dilated(x, w1, (1, 1), "VALID", dimension_numbers=dn)
    t = maxpool2(jax.nn.relu(t + b1[None, :, None, None]))
    t = jax.lax.conv_general_dilated(t, w2, (1, 1), "VALID", dimension_numbers=dn)
    t = maxpool2(jax.nn.relu(t + b2[None, :, None, None]))
    t = t.reshape(t.shape[0], -1)
    t = jax.nn.relu(t @ wf1.T + bf1)
    t = jax.nn.relu(t @ wf2.T + bf2)
    t = jax.nn.relu(t @ wf3.T + bf3)
    return t @ wo.T + bo


if __name__ == "__main__":
    key = jax.random.PRNGKey(0)
    keys = jax.random.split(key, 13)

    def uinit(k, shape, fan_in):
        bound = 1.0 / np.sqrt(fan_in)
        return jax.random.uniform(k, shape, jnp.float32, -bound, bound)

    params = (
        uinit(keys[0], (6, 1, 5, 5), 25),   uinit(keys[1], (6,), 25),      # conv1
        uinit(keys[2], (12, 6, 5, 5), 150), uinit(keys[3], (12,), 150),    # conv2
        uinit(keys[4], (120, 300), 300),    uinit(keys[5], (120,), 300),   # fc1
        uinit(keys[6], (60, 120), 120),     uinit(keys[7], (60,), 120),    # fc2
        uinit(keys[8], (16, 60), 60),       uinit(keys[9], (16,), 60),     # fc3
        uinit(keys[10], (1, 16), 16),       uinit(keys[11], (1,), 16),     # out
    )
    B = 50                                   # -> nb = 2 grid steps at Bt = 32
    x = jax.random.normal(keys[12], (B, 1, 32, 32), jnp.float32)

    kparams = prepare_params(params)                 # one-time weight repack
    out = jax.block_until_ready(jax.jit(network_forward)(x, kparams))
    assert out.shape == (B, 1), out.shape

    ref = reference_forward(x, params)
    np.testing.assert_allclose(np.asarray(out), np.asarray(ref),
                               rtol=5e-2, atol=5e-2)
    print("KERNEL_OK")
</pallas_src>

<mosaic_0001>
module attributes {stable_mosaic.version = 11 : i64} {
  func.func @_lenet_kernel(%arg0: i32, %arg1: memref<1x16x2048xbf16, #tpu.memory_space<vmem>>, %arg2: memref<96x64xbf16, #tpu.memory_space<vmem>>, %arg3: memref<24x1xf32, #tpu.memory_space<vmem>>, %arg4: memref<64x216xbf16, #tpu.memory_space<vmem>>, %arg5: memref<16x1xf32, #tpu.memory_space<vmem>>, %arg6: memref<120x400xbf16, #tpu.memory_space<vmem>>, %arg7: memref<120x1xf32, #tpu.memory_space<vmem>>, %arg8: memref<60x120xbf16, #tpu.memory_space<vmem>>, %arg9: memref<60x1xf32, #tpu.memory_space<vmem>>, %arg10: memref<16x60xbf16, #tpu.memory_space<vmem>>, %arg11: memref<16x1xf32, #tpu.memory_space<vmem>>, %arg12: memref<8x16xbf16, #tpu.memory_space<vmem>>, %arg13: memref<8x1xf32, #tpu.memory_space<vmem>>, %arg14: memref<1x8x32xf32, #tpu.memory_space<vmem>>, %arg15: memref<64x1760xbf16, #tpu.memory_space<vmem>>, %arg16: memref<24x1760xf32, #tpu.memory_space<vmem>>, %arg17: memref<216x1184xf32, #tpu.memory_space<vmem>>, %arg18: memref<16x1184xbf16, #tpu.memory_space<vmem>>, %arg19: memref<400x32xbf16, #tpu.memory_space<vmem>>) attributes {dimension_semantics = [#tpu.dimension_semantics<parallel>], iteration_bounds = array<i64: 2>, scalar_prefetch = 0 : i64, scratch_operands = 5 : i64, tpu.core_type = #tpu.core_type<tc>, window_params = [{transform_indices = @transform_0, window_bounds = array<i64: 1, 16, 2048>}, {pipeline_mode = #tpu.pipeline_mode<synchronous>, transform_indices = @transform_1, window_bounds = array<i64: 96, 64>}, {pipeline_mode = #tpu.pipeline_mode<synchronous>, transform_indices = @transform_2, window_bounds = array<i64: 24, 1>}, {pipeline_mode = #tpu.pipeline_mode<synchronous>, transform_indices = @transform_3, window_bounds = array<i64: 64, 216>}, {pipeline_mode = #tpu.pipeline_mode<synchronous>, transform_indices = @transform_4, window_bounds = array<i64: 16, 1>}, {pipeline_mode = #tpu.pipeline_mode<synchronous>, transform_indices = @transform_5, window_bounds = array<i64: 120, 400>}, {pipeline_mode = #tpu.pipeline_mode<synchronous>, transform_indices = @transform_6, window_bounds = array<i64: 120, 1>}, {pipeline_mode = #tpu.pipeline_mode<synchronous>, transform_indices = @transform_7, window_bounds = array<i64: 60, 120>}, {pipeline_mode = #tpu.pipeline_mode<synchronous>, transform_indices = @transform_8, window_bounds = array<i64: 60, 1>}, {pipeline_mode = #tpu.pipeline_mode<synchronous>, transform_indices = @transform_9, window_bounds = array<i64: 16, 60>}, {pipeline_mode = #tpu.pipeline_mode<synchronous>, transform_indices = @transform_10, window_bounds = array<i64: 16, 1>}, {pipeline_mode = #tpu.pipeline_mode<synchronous>, transform_indices = @transform_11, window_bounds = array<i64: 8, 16>}, {pipeline_mode = #tpu.pipeline_mode<synchronous>, transform_indices = @transform_12, window_bounds = array<i64: 8, 1>}, {transform_indices = @transform_13, window_bounds = array<i64: 1, 8, 32>}]} {
    %c0 = arith.constant 0 : index
    %c0_0 = arith.constant 0 : index
    %c0_1 = arith.constant 0 : index
    %0 = vector.load %arg1[%c0, %c0_0, %c0_1] : memref<1x16x2048xbf16, #tpu.memory_space<vmem>>, vector<1x16x1760xbf16>
    %1 = vector.shape_cast %0 : vector<1x16x1760xbf16> to vector<16x1760xbf16>
    %c0_2 = arith.constant 0 : index
    %c0_3 = arith.constant 0 : index
    %2 = vector.load %arg15[%c0_2, %c0_3] : memref<64x1760xbf16, #tpu.memory_space<vmem>>, vector<16x1760xbf16>
    tpu.vector_store %arg15[%c0_2, %c0_3], %1 {strides = array<i32>} : memref<64x1760xbf16, #tpu.memory_space<vmem>>, vector<16x1760xbf16>,
    %c0_4 = arith.constant 0 : index
    %c0_5 = arith.constant 0 : index
    %c32 = arith.constant 32 : index
    %3 = vector.load %arg1[%c0_4, %c0_5, %c32] : memref<1x16x2048xbf16, #tpu.memory_space<vmem>>, vector<1x16x1760xbf16>
    %4 = vector.shape_cast %3 : vector<1x16x1760xbf16> to vector<16x1760xbf16>
    %c16 = arith.constant 16 : index
    %c0_6 = arith.constant 0 : index
    %5 = vector.load %arg15[%c16, %c0_6] : memref<64x1760xbf16, #tpu.memory_space<vmem>>, vector<16x1760xbf16>
    tpu.vector_store %arg15[%c16, %c0_6], %4 {strides = array<i32>} : memref<64x1760xbf16, #tpu.memory_space<vmem>>, vector<16x1760xbf16>,
    %c0_7 = arith.constant 0 : index
    %c0_8 = arith.constant 0 : index
    %c256 = arith.constant 256 : index
    %6 = vector.load %arg1[%c0_7, %c0_8, %c256] : memref<1x16x2048xbf16, #tpu.memory_space<vmem>>, vector<1x16x1760xbf16>
    %7 = vector.shape_cast %6 : vector<1x16x1760xbf16> to vector<16x1760xbf16>
    %c32_9 = arith.constant 32 : index
    %c0_10 = arith.constant 0 : index
    %8 = vector.load %arg15[%c32_9, %c0_10] : memref<64x1760xbf16, #tpu.memory_space<vmem>>, vector<16x1760xbf16>
    tpu.vector_store %arg15[%c32_9, %c0_10], %7 {strides = array<i32>} : memref<64x1760xbf16, #tpu.memory_space<vmem>>, vector<16x1760xbf16>,
    %c0_11 = arith.constant 0 : index
    %c0_12 = arith.constant 0 : index
    %c288 = arith.constant 288 : index
    %9 = vector.load %arg1[%c0_11, %c0_12, %c288] : memref<1x16x2048xbf16, #tpu.memory_space<vmem>>, vector<1x16x1760xbf16>
    %10 = vector.shape_cast %9 : vector<1x16x1760xbf16> to vector<16x1760xbf16>
    %c48 = arith.constant 48 : index
    %c0_13 = arith.constant 0 : index
    %11 = vector.load %arg15[%c48, %c0_13] : memref<64x1760xbf16, #tpu.memory_space<vmem>>, vector<16x1760xbf16>
    tpu.vector_store %arg15[%c48, %c0_13], %10 {strides = array<i32>} : memref<64x1760xbf16, #tpu.memory_space<vmem>>, vector<16x1760xbf16>,
    %c0_14 = arith.constant 0 : index
    %c0_15 = arith.constant 0 : index
    %12 = vector.load %arg2[%c0_14, %c0_15] : memref<96x64xbf16, #tpu.memory_space<vmem>>, vector<96x64xbf16>
    %c0_16 = arith.constant 0 : index
    %c0_17 = arith.constant 0 : index
    %13 = vector.load %arg15[%c0_16, %c0_17] : memref<64x1760xbf16, #tpu.memory_space<vmem>>, vector<64x1760xbf16>
    %cst = arith.constant dense<0.000000e+00> : vector<96x1760xf32>
    %14 = tpu.matmul %12, %13, %cst {dimension_numbers = #tpu.dot_dimension_numbers<[1], [0], [0], [1], [0, 0, 1, 1], [], []>} : vector<96x64xbf16>, vector<64x1760xbf16>, vector<96x1760xf32> -> vector<96x1760xf32>
    %15 = vector.extract_strided_slice %14 {offsets = [0, 0], sizes = [24, 1760], strides = [1, 1]} : vector<96x1760xf32> to vector<24x1760xf32>
    %16 = vector.extract_strided_slice %14 {offsets = [24, 0], sizes = [24, 1760], strides = [1, 1]} : vector<96x1760xf32> to vector<24x1760xf32>
    %17 = arith.maximumf %15, %16 : vector<24x1760xf32>
    %18 = vector.extract_strided_slice %14 {offsets = [48, 0], sizes = [24, 1760], strides = [1, 1]} : vector<96x1760xf32> to vector<24x1760xf32>
    %19 = vector.extract_strided_slice %14 {offsets = [72, 0], sizes = [24, 1760], strides = [1, 1]} : vector<96x1760xf32> to vector<24x1760xf32>
    %20 = arith.maximumf %18, %19 : vector<24x1760xf32>
    %21 = arith.maximumf %17, %20 : vector<24x1760xf32>
    %c0_18 = arith.constant 0 : index
    %c0_19 = arith.constant 0 : index
    %22 = vector.load %arg3[%c0_18, %c0_19] : memref<24x1xf32, #tpu.memory_space<vmem>>, vector<24x1xf32>
    %23 = vector.broadcast %22 : vector<24x1xf32> to vector<24x1760xf32>
    %24 = arith.addf %21, %23 : vector<24x1760xf32>
    %cst_20 = arith.constant 0.000000e+00 : f32
    %25 = vector.broadcast %cst_20 : f32 to vector<24x1760xf32>
    %26 = arith.maximumf %24, %25 : vector<24x1760xf32>
    %c0_21 = arith.constant 0 : index
    %c0_22 = arith.constant 0 : index
    %27 = vector.load %arg16[%c0_21, %c0_22] : memref<24x1760xf32, #tpu.memory_space<vmem>>, vector<24x1760xf32>
    tpu.vector_store %arg16[%c0_21, %c0_22], %26 {strides = array<i32>} : memref<24x1760xf32, #tpu.memory_space<vmem>>, vector<24x1760xf32>,
    %c0_23 = arith.constant 0 : index
    %c0_24 = arith.constant 0 : index
    %28 = vector.load %arg16[%c0_23, %c0_24] : memref<24x1760xf32, #tpu.memory_space<vmem>>, vector<24x1184xf32>
    %c0_25 = arith.constant 0 : index
    %c0_26 = arith.constant 0 : index
    %29 = vector.load %arg17[%c0_25, %c0_26] : memref<216x1184xf32, #tpu.memory_space<vmem>>, vector<24x1184xf32>
    tpu.vector_store %arg17[%c0_25, %c0_26], %28 {strides = array<i32>} : memref<216x1184xf32, #tpu.memory_space<vmem>>, vector<24x1184xf32>,
    %c0_27 = arith.constant 0 : index
    %c32_28 = arith.constant 32 : index
    %30 = vector.load %arg16[%c0_27, %c32_28] : memref<24x1760xf32, #tpu.memory_space<vmem>>, vector<24x1184xf32>
    %c24 = arith.constant 24 : index
    %c0_29 = arith.constant 0 : index
    %31 = vector.load %arg17[%c24, %c0_29] : memref<216x1184xf32, #tpu.memory_space<vmem>>, vector<24x1184xf32>
    tpu.vector_store %arg17[%c24, %c0_29], %30 {strides = array<i32>} : memref<216x1184xf32, #tpu.memory_space<vmem>>, vector<24x1184xf32>,
    %c0_30 = arith.constant 0 : index
    %c64 = arith.constant 64 : index
    %32 = vector.load %arg16[%c0_30, %c64] : memref<24x1760xf32, #tpu.memory_space<vmem>>, vector<24x1184xf32>
    %c48_31 = arith.constant 48 : index
    %c0_32 = arith.constant 0 : index
    %33 = vector.load %arg17[%c48_31, %c0_32] : memref<216x1184xf32, #tpu.memory_space<vmem>>, vector<24x1184xf32>
    tpu.vector_store %arg17[%c48_31, %c0_32], %32 {strides = array<i32>} : memref<216x1184xf32, #tpu.memory_space<vmem>>, vector<24x1184xf32>,
    %c0_33 = arith.constant 0 : index
    %c256_34 = arith.constant 256 : index
    %34 = vector.load %arg16[%c0_33, %c256_34] : memref<24x1760xf32, #tpu.memory_space<vmem>>, vector<24x1184xf32>
    %c72 = arith.constant 72 : index
    %c0_35 = arith.constant 0 : index
    %35 = vector.load %arg17[%c72, %c0_35] : memref<216x1184xf32, #tpu.memory_space<vmem>>, vector<24x1184xf32>
    tpu.vector_store %arg17[%c72, %c0_35], %34 {strides = array<i32>} : memref<216x1184xf32, #tpu.memory_space<vmem>>, vector<24x1184xf32>,
    %c0_36 = arith.constant 0 : index
    %c288_37 = arith.constant 288 : index
    %36 = vector.load %arg16[%c0_36, %c288_37] : memref<24x1760xf32, #tpu.memory_space<vmem>>, vector<24x1184xf32>
    %c96 = arith.constant 96 : index
    %c0_38 = arith.constant 0 : index
    %37 = vector.load %arg17[%c96, %c0_38] : memref<216x1184xf32, #tpu.memory_space<vmem>>, vector<24x1184xf32>
    tpu.vector_store %arg17[%c96, %c0_38], %36 {strides = array<i32>} : memref<216x1184xf32, #tpu.memory_space<vmem>>, vector<24x1184xf32>,
    %c0_39 = arith.constant 0 : index
    %c320 = arith.constant 320 : index
    %38 = vector.load %arg16[%c0_39, %c320] : memref<24x1760xf32, #tpu.memory_space<vmem>>, vector<24x1184xf32>
    %c120 = arith.constant 120 : index
    %c0_40 = arith.constant 0 : index
    %39 = vector.load %arg17[%c120, %c0_40] : memref<216x1184xf32, #tpu.memory_space<vmem>>, vector<24x1184xf32>
    tpu.vector_store %arg17[%c120, %c0_40], %38 {strides = array<i32>} : memref<216x1184xf32, #tpu.memory_space<vmem>>, vector<24x1184xf32>,
    %c0_41 = arith.constant 0 : index
    %c512 = arith.constant 512 : index
    %40 = vector.load %arg16[%c0_41, %c512] : memref<24x1760xf32, #tpu.memory_space<vmem>>, vector<24x1184xf32>
    %c144 = arith.constant 144 : index
    %c0_42 = arith.constant 0 : index
    %41 = vector.load %arg17[%c144, %c0_42] : memref<216x1184xf32, #tpu.memory_space<vmem>>, vector<24x1184xf32>
    tpu.vector_store %arg17[%c144, %c0_42], %40 {strides = array<i32>} : memref<216x1184xf32, #tpu.memory_space<vmem>>, vector<24x1184xf32>,
    %c0_43 = arith.constant 0 : index
    %c544 = arith.constant 544 : index
    %42 = vector.load %arg16[%c0_43, %c544] : memref<24x1760xf32, #tpu.memory_space<vmem>>, vector<24x1184xf32>
    %c168 = arith.constant 168 : index
    %c0_44 = arith.constant 0 : index
    %43 = vector.load %arg17[%c168, %c0_44] : memref<216x1184xf32, #tpu.memory_space<vmem>>, vector<24x1184xf32>
    tpu.vector_store %arg17[%c168, %c0_44], %42 {strides = array<i32>} : memref<216x1184xf32, #tpu.memory_space<vmem>>, vector<24x1184xf32>,
    %c0_45 = arith.constant 0 : index
    %c576 = arith.constant 576 : index
    %44 = vector.load %arg16[%c0_45, %c576] : memref<24x1760xf32, #tpu.memory_space<vmem>>, vector<24x1184xf32>
    %c192 = arith.constant 192 : index
    %c0_46 = arith.constant 0 : index
    %45 = vector.load %arg17[%c192, %c0_46] : memref<216x1184xf32, #tpu.memory_space<vmem>>, vector<24x1184xf32>
    tpu.vector_store %arg17[%c192, %c0_46], %44 {strides = array<i32>} : memref<216x1184xf32, #tpu.memory_space<vmem>>, vector<24x1184xf32>,
    %c0_47 = arith.constant 0 : index
    %c0_48 = arith.constant 0 : index
    %46 = vector.load %arg4[%c0_47, %c0_48] : memref<64x216xbf16, #tpu.memory_space<vmem>>, vector<64x216xbf16>
    %c0_49 = arith.constant 0 : index
    %c0_50 = arith.constant 0 : index
    %47 = vector.load %arg17[%c0_49, %c0_50] : memref<216x1184xf32, #tpu.memory_space<vmem>>, vector<216x1184xf32>
    %48 = arith.truncf %47 : vector<216x1184xf32> to vector<216x1184xbf16>
    %cst_51 = arith.constant dense<0.000000e+00> : vector<64x1184xf32>
    %49 = tpu.matmul %46, %48, %cst_51 {dimension_numbers = #tpu.dot_dimension_numbers<[1], [0], [0], [1], [0, 0, 1, 1], [], []>} : vector<64x216xbf16>, vector<216x1184xbf16>, vector<64x1184xf32> -> vector<64x1184xf32>
    %50 = vector.extract_strided_slice %49 {offsets = [0, 0], sizes = [16, 1184], strides = [1, 1]} : vector<64x1184xf32> to vector<16x1184xf32>
    %51 = vector.extract_strided_slice %49 {offsets = [16, 0], sizes = [16, 1184], strides = [1, 1]} : vector<64x1184xf32> to vector<16x1184xf32>
    %52 = arith.maximumf %50, %51 : vector<16x1184xf32>
    %53 = vector.extract_strided_slice %49 {offsets = [32, 0], sizes = [16, 1184], strides = [1, 1]} : vector<64x1184xf32> to vector<16x1184xf32>
    %54 = vector.extract_strided_slice %49 {offsets = [48, 0], sizes = [16, 1184], strides = [1, 1]} : vector<64x1184xf32> to vector<16x1184xf32>
    %55 = arith.maximumf %53, %54 : vector<16x1184xf32>
    %56 = arith.maximumf %52, %55 : vector<16x1184xf32>
    %c0_52 = arith.constant 0 : index
    %c0_53 = arith.constant 0 : index
    %57 = vector.load %arg5[%c0_52, %c0_53] : memref<16x1xf32, #tpu.memory_space<vmem>>, vector<16x1xf32>
    %58 = vector.broadcast %57 : vector<16x1xf32> to vector<16x1184xf32>
    %59 = arith.addf %56, %58 : vector<16x1184xf32>
    %cst_54 = arith.constant 0.000000e+00 : f32
    %60 = vector.broadcast %cst_54 : f32 to vector<16x1184xf32>
    %61 = arith.maximumf %59, %60 : vector<16x1184xf32>
    %62 = arith.truncf %61 : vector<16x1184xf32> to vector<16x1184xbf16>
    %c0_55 = arith.constant 0 : index
    %c0_56 = arith.constant 0 : index
    %63 = vector.load %arg18[%c0_55, %c0_56] : memref<16x1184xbf16, #tpu.memory_space<vmem>>, vector<16x1184xbf16>
    tpu.vector_store %arg18[%c0_55, %c0_56], %62 {strides = array<i32>} : memref<16x1184xbf16, #tpu.memory_space<vmem>>, vector<16x1184xbf16>,
    %c0_57 = arith.constant 0 : index
    %c0_58 = arith.constant 0 : index
    %64 = vector.load %arg18[%c0_57, %c0_58] : memref<16x1184xbf16, #tpu.memory_space<vmem>>, vector<16x32xbf16>
    %c0_59 = arith.constant 0 : index
    %c0_60 = arith.constant 0 : index
    %65 = vector.load %arg19[%c0_59, %c0_60] : memref<400x32xbf16, #tpu.memory_space<vmem>>, vector<16x32xbf16>
    tpu.vector_store %arg19[%c0_59, %c0_60], %64 {strides = array<i32>} : memref<400x32xbf16, #tpu.memory_space<vmem>>, vector<16x32xbf16>,
    %c0_61 = arith.constant 0 : index
    %c32_62 = arith.constant 32 : index
    %66 = vector.load %arg18[%c0_61, %c32_62] : memref<16x1184xbf16, #tpu.memory_space<vmem>>, vector<16x32xbf16>
    %c16_63 = arith.constant 16 : index
    %c0_64 = arith.constant 0 : index
    %67 = vector.load %arg19[%c16_63, %c0_64] : memref<400x32xbf16, #tpu.memory_space<vmem>>, vector<16x32xbf16>
    tpu.vector_store %arg19[%c16_63, %c0_64], %66 {strides = array<i32>} : memref<400x32xbf16, #tpu.memory_space<vmem>>, vector<16x32xbf16>,
    %c0_65 = arith.constant 0 : index
    %c64_66 = arith.constant 64 : index
    %68 = vector.load %arg18[%c0_65, %c64_66] : memref<16x1184xbf16, #tpu.memory_space<vmem>>, vector<16x32xbf16>
    %c32_67 = arith.constant 32 : index
    %c0_68 = arith.constant 0 : index
    %69 = vector.load %arg19[%c32_67, %c0_68] : memref<400x32xbf16, #tpu.memory_space<vmem>>, vector<16x32xbf16>
    tpu.vector_store %arg19[%c32_67, %c0_68], %68 {strides = array<i32>} : memref<400x32xbf16, #tpu.memory_space<vmem>>, vector<16x32xbf16>,
    %c0_69 = arith.constant 0 : index
    %c96_70 = arith.constant 96 : index
    %70 = vector.load %arg18[%c0_69, %c96_70] : memref<16x1184xbf16, #tpu.memory_space<vmem>>, vector<16x32xbf16>
    %c48_71 = arith.constant 48 : index
    %c0_72 = arith.constant 0 : index
    %71 = vector.load %arg19[%c48_71, %c0_72] : memref<400x32xbf16, #tpu.memory_space<vmem>>, vector<16x32xbf16>
    tpu.vector_store %arg19[%c48_71, %c0_72], %70 {strides = array<i32>} : memref<400x32xbf16, #tpu.memory_space<vmem>>, vector<16x32xbf16>,
    %c0_73 = arith.constant 0 : index
    %c128 = arith.constant 128 : index
    %72 = vector.load %arg18[%c0_73, %c128] : memref<16x1184xbf16, #tpu.memory_space<vmem>>, vector<16x32xbf16>
    %c64_74 = arith.constant 64 : index
    %c0_75 = arith.constant 0 : index
    %73 = vector.load %arg19[%c64_74, %c0_75] : memref<400x32xbf16, #tpu.memory_space<vmem>>, vector<16x32xbf16>
    tpu.vector_store %arg19[%c64_74, %c0_75], %72 {strides = array<i32>} : memref<400x32xbf16, #tpu.memory_space<vmem>>, vector<16x32xbf16>,
    %c0_76 = arith.constant 0 : index
    %c256_77 = arith.constant 256 : index
    %74 = vector.load %arg18[%c0_76, %c256_77] : memref<16x1184xbf16, #tpu.memory_space<vmem>>, vector<16x32xbf16>
    %c80 = arith.constant 80 : index
    %c0_78 = arith.constant 0 : index
    %75 = vector.load %arg19[%c80, %c0_78] : memref<400x32xbf16, #tpu.memory_space<vmem>>, vector<16x32xbf16>
    tpu.vector_store %arg19[%c80, %c0_78], %74 {strides = array<i32>} : memref<400x32xbf16, #tpu.memory_space<vmem>>, vector<16x32xbf16>,
    %c0_79 = arith.constant 0 : index
    %c288_80 = arith.constant 288 : index
    %76 = vector.load %arg18[%c0_79, %c288_80] : memref<16x1184xbf16, #tpu.memory_space<vmem>>, vector<16x32xbf16>
    %c96_81 = arith.constant 96 : index
    %c0_82 = arith.constant 0 : index
    %77 = vector.load %arg19[%c96_81, %c0_82] : memref<400x32xbf16, #tpu.memory_space<vmem>>, vector<16x32xbf16>
    tpu.vector_store %arg19[%c96_81, %c0_82], %76 {strides = array<i32>} : memref<400x32xbf16, #tpu.memory_space<vmem>>, vector<16x32xbf16>,
    %c0_83 = arith.constant 0 : index
    %c320_84 = arith.constant 320 : index
    %78 = vector.load %arg18[%c0_83, %c320_84] : memref<16x1184xbf16, #tpu.memory_space<vmem>>, vector<16x32xbf16>
    %c112 = arith.constant 112 : index
    %c0_85 = arith.constant 0 : index
    %79 = vector.load %arg19[%c112, %c0_85] : memref<400x32xbf16, #tpu.memory_space<vmem>>, vector<16x32xbf16>
    tpu.vector_store %arg19[%c112, %c0_85], %78 {strides = array<i32>} : memref<400x32xbf16, #tpu.memory_space<vmem>>, vector<16x32xbf16>,
    %c0_86 = arith.constant 0 : index
    %c352 = arith.constant 352 : index
    %80 = vector.load %arg18[%c0_86, %c352] : memref<16x1184xbf16, #tpu.memory_space<vmem>>, vector<16x32xbf16>
    %c128_87 = arith.constant 128 : index
    %c0_88 = arith.constant 0 : index
    %81 = vector.load %arg19[%c128_87, %c0_88] : memref<400x32xbf16, #tpu.memory_space<vmem>>, vector<16x32xbf16>
    tpu.vector_store %arg19[%c128_87, %c0_88], %80 {strides = array<i32>} : memref<400x32xbf16, #tpu.memory_space<vmem>>, vector<16x32xbf16>,
    %c0_89 = arith.constant 0 : index
    %c384 = arith.constant 384 : index
    %82 = vector.load %arg18[%c0_89, %c384] : memref<16x1184xbf16, #tpu.memory_space<vmem>>, vector<16x32xbf16>
    %c144_90 = arith.constant 144 : index
    %c0_91 = arith.constant 0 : index
    %83 = vector.load %arg19[%c144_90, %c0_91] : memref<400x32xbf16, #tpu.memory_space<vmem>>, vector<16x32xbf16>
    tpu.vector_store %arg19[%c144_90, %c0_91], %82 {strides = array<i32>} : memref<400x32xbf16, #tpu.memory_space<vmem>>, vector<16x32xbf16>,
    %c0_92 = arith.constant 0 : index
    %c512_93 = arith.constant 512 : index
    %84 = vector.load %arg18[%c0_92, %c512_93] : memref<16x1184xbf16, #tpu.memory_space<vmem>>, vector<16x32xbf16>
    %c160 = arith.constant 160 : index
    %c0_94 = arith.constant 0 : index
    %85 = vector.load %arg19[%c160, %c0_94] : memref<400x32xbf16, #tpu.memory_space<vmem>>, vector<16x32xbf16>
    tpu.vector_store %arg19[%c160, %c0_94], %84 {strides = array<i32>} : memref<400x32xbf16, #tpu.memory_space<vmem>>, vector<16x32xbf16>,
    %c0_95 = arith.constant 0 : index
    %c544_96 = arith.constant 544 : index
    %86 = vector.load %arg18[%c0_95, %c544_96] : memref<16x1184xbf16, #tpu.memory_space<vmem>>, vector<16x32xbf16>
    %c176 = arith.constant 176 : index
    %c0_97 = arith.constant 0 : index
    %87 = vector.load %arg19[%c176, %c0_97] : memref<400x32xbf16, #tpu.memory_space<vmem>>, vector<16x32xbf16>
    tpu.vector_store %arg19[%c176, %c0_97], %86 {strides = array<i32>} : memref<400x32xbf16, #tpu.memory_space<vmem>>, vector<16x32xbf16>,
    %c0_98 = arith.constant 0 : index
    %c576_99 = arith.constant 576 : index
    %88 = vector.load %arg18[%c0_98, %c576_99] : memref<16x1184xbf16, #tpu.memory_space<vmem>>, vector<16x32xbf16>
    %c192_100 = arith.constant 192 : index
    %c0_101 = arith.constant 0 : index
    %89 = vector.load %arg19[%c192_100, %c0_101] : memref<400x32xbf16, #tpu.memory_space<vmem>>, vector<16x32xbf16>
    tpu.vector_store %arg19[%c192_100, %c0_101], %88 {strides = array<i32>} : memref<400x32xbf16, #tpu.memory_space<vmem>>, vector<16x32xbf16>,
    %c0_102 = arith.constant 0 : index
    %c608 = arith.constant 608 : index
    %90 = vector.load %arg18[%c0_102, %c608] : memref<16x1184xbf16, #tpu.memory_space<vmem>>, vector<16x32xbf16>
    %c208 = arith.constant 208 : index
    %c0_103 = arith.constant 0 : index
    %91 = vector.load %arg19[%c208, %c0_103] : memref<400x32xbf16, #tpu.memory_space<vmem>>, vector<16x32xbf16>
    tpu.vector_store %arg19[%c208, %c0_103], %90 {strides = array<i32>} : memref<400x32xbf16, #tpu.memory_space<vmem>>, vector<16x32xbf16>,
    %c0_104 = arith.constant 0 : index
    %c640 = arith.constant 640 : index
    %92 = vector.load %arg18[%c0_104, %c640] : memref<16x1184xbf16, #tpu.memory_space<vmem>>, vector<16x32xbf16>
    %c224 = arith.constant 224 : index
    %c0_105 = arith.constant 0 : index
    %93 = vector.load %arg19[%c224, %c0_105] : memref<400x32xbf16, #tpu.memory_space<vmem>>, vector<16x32xbf16>
    tpu.vector_store %arg19[%c224, %c0_105], %92 {strides = array<i32>} : memref<400x32xbf16, #tpu.memory_space<vmem>>, vector<16x32xbf16>,
    %c0_106 = arith.constant 0 : index
    %c768 = arith.constant 768 : index
    %94 = vector.load %arg18[%c0_106, %c768] : memref<16x1184xbf16, #tpu.memory_space<vmem>>, vector<16x32xbf16>
    %c240 = arith.constant 240 : index
    %c0_107 = arith.constant 0 : index
    %95 = vector.load %arg19[%c240, %c0_107] : memref<400x32xbf16, #tpu.memory_space<vmem>>, vector<16x32xbf16>
    tpu.vector_store %arg19[%c240, %c0_107], %94 {strides = array<i32>} : memref<400x32xbf16, #tpu.memory_space<vmem>>, vector<16x32xbf16>,
    %c0_108 = arith.constant 0 : index
    %c800 = arith.constant 800 : index
    %96 = vector.load %arg18[%c0_108, %c800] : memref<16x1184xbf16, #tpu.memory_space<vmem>>, vector<16x32xbf16>
    %c256_109 = arith.constant 256 : index
    %c0_110 = arith.constant 0 : index
    %97 = vector.load %arg19[%c256_109, %c0_110] : memref<400x32xbf16, #tpu.memory_space<vmem>>, vector<16x32xbf16>
    tpu.vector_store %arg19[%c256_109, %c0_110], %96 {strides = array<i32>} : memref<400x32xbf16, #tpu.memory_space<vmem>>, vector<16x32xbf16>,
    %c0_111 = arith.constant 0 : index
    %c832 = arith.constant 832 : index
    %98 = vector.load %arg18[%c0_111, %c832] : memref<16x1184xbf16, #tpu.memory_space<vmem>>, vector<16x32xbf16>
    %c272 = arith.constant 272 : index
    %c0_112 = arith.constant 0 : index
    %99 = vector.load %arg19[%c272, %c0_112] : memref<400x32xbf16, #tpu.memory_space<vmem>>, vector<16x32xbf16>
    tpu.vector_store %arg19[%c272, %c0_112], %98 {strides = array<i32>} : memref<400x32xbf16, #tpu.memory_space<vmem>>, vector<16x32xbf16>,
    %c0_113 = arith.constant 0 : index
    %c864 = arith.constant 864 : index
    %100 = vector.load %arg18[%c0_113, %c864] : memref<16x1184xbf16, #tpu.memory_space<vmem>>, vector<16x32xbf16>
    %c288_114 = arith.constant 288 : index
    %c0_115 = arith.constant 0 : index
    %101 = vector.load %arg19[%c288_114, %c0_115] : memref<400x32xbf16, #tpu.memory_space<vmem>>, vector<16x32xbf16>
    tpu.vector_store %arg19[%c288_114, %c0_115], %100 {strides = array<i32>} : memref<400x32xbf16, #tpu.memory_space<vmem>>, vector<16x32xbf16>,
    %c0_116 = arith.constant 0 : index
    %c896 = arith.constant 896 : index
    %102 = vector.load %arg18[%c0_116, %c896] : memref<16x1184xbf16, #tpu.memory_space<vmem>>, vector<16x32xbf16>
    %c304 = arith.constant 304 : index
    %c0_117 = arith.constant 0 : index
    %103 = vector.load %arg19[%c304, %c0_117] : memref<400x32xbf16, #tpu.memory_space<vmem>>, vector<16x32xbf16>
    tpu.vector_store %arg19[%c304, %c0_117], %102 {strides = array<i32>} : memref<400x32xbf16, #tpu.memory_space<vmem>>, vector<16x32xbf16>,
    %c0_118 = arith.constant 0 : index
    %c1024 = arith.constant 1024 : index
    %104 = vector.load %arg18[%c0_118, %c1024] : memref<16x1184xbf16, #tpu.memory_space<vmem>>, vector<16x32xbf16>
    %c320_119 = arith.constant 320 : index
    %c0_120 = arith.constant 0 : index
    %105 = vector.load %arg19[%c320_119, %c0_120] : memref<400x32xbf16, #tpu.memory_space<vmem>>, vector<16x32xbf16>
    tpu.vector_store %arg19[%c320_119, %c0_120], %104 {strides = array<i32>} : memref<400x32xbf16, #tpu.memory_space<vmem>>, vector<16x32xbf16>,
    %c0_121 = arith.constant 0 : index
    %c1056 = arith.constant 1056 : index
    %106 = vector.load %arg18[%c0_121, %c1056] : memref<16x1184xbf16, #tpu.memory_space<vmem>>, vector<16x32xbf16>
    %c336 = arith.constant 336 : index
    %c0_122 = arith.constant 0 : index
    %107 = vector.load %arg19[%c336, %c0_122] : memref<400x32xbf16, #tpu.memory_space<vmem>>, vector<16x32xbf16>
    tpu.vector_store %arg19[%c336, %c0_122], %106 {strides = array<i32>} : memref<400x32xbf16, #tpu.memory_space<vmem>>, vector<16x32xbf16>,
    %c0_123 = arith.constant 0 : index
    %c1088 = arith.constant 1088 : index
    %108 = vector.load %arg18[%c0_123, %c1088] : memref<16x1184xbf16, #tpu.memory_space<vmem>>, vector<16x32xbf16>
    %c352_124 = arith.constant 352 : index
    %c0_125 = arith.constant 0 : index
    %109 = vector.load %arg19[%c352_124, %c0_125] : memref<400x32xbf16, #tpu.memory_space<vmem>>, vector<16x32xbf16>
    tpu.vector_store %arg19[%c352_124, %c0_125], %108 {strides = array<i32>} : memref<400x32xbf16, #tpu.memory_space<vmem>>, vector<16x32xbf16>,
    %c0_126 = arith.constant 0 : index
    %c1120 = arith.constant 1120 : index
    %110 = vector.load %arg18[%c0_126, %c1120] : memref<16x1184xbf16, #tpu.memory_space<vmem>>, vector<16x32xbf16>
    %c368 = arith.constant 368 : index
    %c0_127 = arith.constant 0 : index
    %111 = vector.load %arg19[%c368, %c0_127] : memref<400x32xbf16, #tpu.memory_space<vmem>>, vector<16x32xbf16>
    tpu.vector_store %arg19[%c368, %c0_127], %110 {strides = array<i32>} : memref<400x32xbf16, #tpu.memory_space<vmem>>, vector<16x32xbf16>,
    %c0_128 = arith.constant 0 : index
    %c1152 = arith.constant 1152 : index
    %112 = vector.load %arg18[%c0_128, %c1152] : memref<16x1184xbf16, #tpu.memory_space<vmem>>, vector<16x32xbf16>
    %c384_129 = arith.constant 384 : index
    %c0_130 = arith.constant 0 : index
    %113 = vector.load %arg19[%c384_129, %c0_130] : memref<400x32xbf16, #tpu.memory_space<vmem>>, vector<16x32xbf16>
    tpu.vector_store %arg19[%c384_129, %c0_130], %112 {strides = array<i32>} : memref<400x32xbf16, #tpu.memory_space<vmem>>, vector<16x32xbf16>,
    %c0_131 = arith.constant 0 : index
    %c0_132 = arith.constant 0 : index
    %114 = vector.load %arg6[%c0_131, %c0_132] : memref<120x400xbf16, #tpu.memory_space<vmem>>, vector<120x400xbf16>
    %c0_133 = arith.constant 0 : index
    %c0_134 = arith.constant 0 : index
    %115 = vector.load %arg19[%c0_133, %c0_134] : memref<400x32xbf16, #tpu.memory_space<vmem>>, vector<400x32xbf16>
    %cst_135 = arith.constant dense<0.000000e+00> : vector<120x32xf32>
    %116 = tpu.matmul %114, %115, %cst_135 {dimension_numbers = #tpu.dot_dimension_numbers<[1], [0], [0], [1], [0, 0, 1, 1], [], []>} : vector<120x400xbf16>, vector<400x32xbf16>, vector<120x32xf32> -> vector<120x32xf32>
    %c0_136 = arith.constant 0 : index
    %c0_137 = arith.constant 0 : index
    %117 = vector.load %arg7[%c0_136, %c0_137] : memref<120x1xf32, #tpu.memory_space<vmem>>, vector<120x1xf32>
    %118 = vector.broadcast %117 : vector<120x1xf32> to vector<120x32xf32>
    %119 = arith.addf %116, %118 : vector<120x32xf32>
    %cst_138 = arith.constant 0.000000e+00 : f32
    %120 = vector.broadcast %cst_138 : f32 to vector<120x32xf32>
    %121 = arith.maximumf %119, %120 : vector<120x32xf32>
    %122 = arith.truncf %121 : vector<120x32xf32> to vector<120x32xbf16>
    %c0_139 = arith.constant 0 : index
    %c0_140 = arith.constant 0 : index
    %123 = vector.load %arg8[%c0_139, %c0_140] : memref<60x120xbf16, #tpu.memory_space<vmem>>, vector<60x120xbf16>
    %cst_141 = arith.constant dense<0.000000e+00> : vector<60x32xf32>
    %124 = tpu.matmul %123, %122, %cst_141 {dimension_numbers = #tpu.dot_dimension_numbers<[1], [0], [0], [1], [0, 0, 1, 1], [], []>} : vector<60x120xbf16>, vector<120x32xbf16>, vector<60x32xf32> -> vector<60x32xf32>
    %c0_142 = arith.constant 0 : index
    %c0_143 = arith.constant 0 : index
    %125 = vector.load %arg9[%c0_142, %c0_143] : memref<60x1xf32, #tpu.memory_space<vmem>>, vector<60x1xf32>
    %126 = vector.broadcast %125 : vector<60x1xf32> to vector<60x32xf32>
    %127 = arith.addf %124, %126 : vector<60x32xf32>
    %cst_144 = arith.constant 0.000000e+00 : f32
    %128 = vector.broadcast %cst_144 : f32 to vector<60x32xf32>
    %129 = arith.maximumf %127, %128 : vector<60x32xf32>
    %130 = arith.truncf %129 : vector<60x32xf32> to vector<60x32xbf16>
    %c0_145 = arith.constant 0 : index
    %c0_146 = arith.constant 0 : index
    %131 = vector.load %arg10[%c0_145, %c0_146] : memref<16x60xbf16, #tpu.memory_space<vmem>>, vector<16x60xbf16>
    %cst_147 = arith.constant dense<0.000000e+00> : vector<16x32xf32>
    %132 = tpu.matmul %131, %130, %cst_147 {dimension_numbers = #tpu.dot_dimension_numbers<[1], [0], [0], [1], [0, 0, 1, 1], [], []>} : vector<16x60xbf16>, vector<60x32xbf16>, vector<16x32xf32> -> vector<16x32xf32>
    %c0_148 = arith.constant 0 : index
    %c0_149 = arith.constant 0 : index
    %133 = vector.load %arg11[%c0_148, %c0_149] : memref<16x1xf32, #tpu.memory_space<vmem>>, vector<16x1xf32>
    %134 = vector.broadcast %133 : vector<16x1xf32> to vector<16x32xf32>
    %135 = arith.addf %132, %134 : vector<16x32xf32>
    %cst_150 = arith.constant 0.000000e+00 : f32
    %136 = vector.broadcast %cst_150 : f32 to vector<16x32xf32>
    %137 = arith.maximumf %135, %136 : vector<16x32xf32>
    %138 = arith.truncf %137 : vector<16x32xf32> to vector<16x32xbf16>
    %c0_151 = arith.constant 0 : index
    %c0_152 = arith.constant 0 : index
    %139 = vector.load %arg12[%c0_151, %c0_152] : memref<8x16xbf16, #tpu.memory_space<vmem>>, vector<8x16xbf16>
    %cst_153 = arith.constant dense<0.000000e+00> : vector<8x32xf32>
    %140 = tpu.matmul %139, %138, %cst_153 {dimension_numbers = #tpu.dot_dimension_numbers<[1], [0], [0], [1], [0, 0, 1, 1], [], []>} : vector<8x16xbf16>, vector<16x32xbf16>, vector<8x32xf32> -> vector<8x32xf32>
    %c0_154 = arith.constant 0 : index
    %c0_155 = arith.constant 0 : index
    %141 = vector.load %arg13[%c0_154, %c0_155] : memref<8x1xf32, #tpu.memory_space<vmem>>, vector<8x1xf32>
    %142 = vector.broadcast %141 : vector<8x1xf32> to vector<8x32xf32>
    %143 = arith.addf %140, %142 : vector<8x32xf32>
    %c0_156 = arith.constant 0 : index
    %c0_157 = arith.constant 0 : index
    %c0_158 = arith.constant 0 : index
    %144 = vector.load %arg14[%c0_156, %c0_157, %c0_158] : memref<1x8x32xf32, #tpu.memory_space<vmem>>, vector<1x8x32xf32>
    %145 = vector.shape_cast %144 : vector<1x8x32xf32> to vector<8x32xf32>
    %146 = vector.shape_cast %143 : vector<8x32xf32> to vector<1x8x32xf32>
    tpu.vector_store %arg14[%c0_156, %c0_157, %c0_158], %146 {strides = array<i32>} : memref<1x8x32xf32, #tpu.memory_space<vmem>>, vector<1x8x32xf32>,
    return
  }
  func.func @transform_0(%arg0: i32) -> (i32, i32, i32) {
    %c0_i32 = arith.constant 0 : i32
    %c0_i32_0 = arith.constant 0 : i32
    %c0_i32_1 = arith.constant 0 : i32
    return %arg0, %c0_i32, %c0_i32_0 : i32, i32, i32
  }
  func.func @transform_1(%arg0: i32) -> (i32, i32) {
    %c0_i32 = arith.constant 0 : i32
    %c0_i32_0 = arith.constant 0 : i32
    %c0_i32_1 = arith.constant 0 : i32
    return %c0_i32, %c0_i32_0 : i32, i32
  }
  func.func @transform_2(%arg0: i32) -> (i32, i32) {
    %c0_i32 = arith.constant 0 : i32
    %c0_i32_0 = arith.constant 0 : i32
    %c0_i32_1 = arith.constant 0 : i32
    return %c0_i32, %c0_i32_0 : i32, i32
  }
  func.func @transform_3(%arg0: i32) -> (i32, i32) {
    %c0_i32 = arith.constant 0 : i32
    %c0_i32_0 = arith.constant 0 : i32
    %c0_i32_1 = arith.constant 0 : i32
    return %c0_i32, %c0_i32_0 : i32, i32
  }
  func.func @transform_4(%arg0: i32) -> (i32, i32) {
    %c0_i32 = arith.constant 0 : i32
    %c0_i32_0 = arith.constant 0 : i32
    %c0_i32_1 = arith.constant 0 : i32
    return %c0_i32, %c0_i32_0 : i32, i32
  }
  func.func @transform_5(%arg0: i32) -> (i32, i32) {
    %c0_i32 = arith.constant 0 : i32
    %c0_i32_0 = arith.constant 0 : i32
    %c0_i32_1 = arith.constant 0 : i32
    return %c0_i32, %c0_i32_0 : i32, i32
  }
  func.func @transform_6(%arg0: i32) -> (i32, i32) {
    %c0_i32 = arith.constant 0 : i32
    %c0_i32_0 = arith.constant 0 : i32
    %c0_i32_1 = arith.constant 0 : i32
    return %c0_i32, %c0_i32_0 : i32, i32
  }
  func.func @transform_7(%arg0: i32) -> (i32, i32) {
    %c0_i32 = arith.constant 0 : i32
    %c0_i32_0 = arith.constant 0 : i32
    %c0_i32_1 = arith.constant 0 : i32
    return %c0_i32, %c0_i32_0 : i32, i32
  }
  func.func @transform_8(%arg0: i32) -> (i32, i32) {
    %c0_i32 = arith.constant 0 : i32
    %c0_i32_0 = arith.constant 0 : i32
    %c0_i32_1 = arith.constant 0 : i32
    return %c0_i32, %c0_i32_0 : i32, i32
  }
  func.func @transform_9(%arg0: i32) -> (i32, i32) {
    %c0_i32 = arith.constant 0 : i32
    %c0_i32_0 = arith.constant 0 : i32
    %c0_i32_1 = arith.constant 0 : i32
    return %c0_i32, %c0_i32_0 : i32, i32
  }
  func.func @transform_10(%arg0: i32) -> (i32, i32) {
    %c0_i32 = arith.constant 0 : i32
    %c0_i32_0 = arith.constant 0 : i32
    %c0_i32_1 = arith.constant 0 : i32
    return %c0_i32, %c0_i32_0 : i32, i32
  }
  func.func @transform_11(%arg0: i32) -> (i32, i32) {
    %c0_i32 = arith.constant 0 : i32
    %c0_i32_0 = arith.constant 0 : i32
    %c0_i32_1 = arith.constant 0 : i32
    return %c0_i32, %c0_i32_0 : i32, i32
  }
  func.func @transform_12(%arg0: i32) -> (i32, i32) {
    %c0_i32 = arith.constant 0 : i32
    %c0_i32_0 = arith.constant 0 : i32
    %c0_i32_1 = arith.constant 0 : i32
    return %c0_i32, %c0_i32_0 : i32, i32
  }
  func.func @transform_13(%arg0: i32) -> (i32, i32, i32) {
    %c0_i32 = arith.constant 0 : i32
    %c0_i32_0 = arith.constant 0 : i32
    %c0_i32_1 = arith.constant 0 : i32
    return %arg0, %c0_i32, %c0_i32_0 : i32, i32, i32
  }
}

</mosaic_0001>

<llo_original>
// kernel: squeeze.1
$region0: #{squeeze.1}
  %s0 = inlined_call_operand.vmem [shape: f32[2,32], index: 0, kind: input, shape index: {}]
  %s1 = inlined_call_operand.hbm [shape: f32[64,1], index: 1, kind: output, shape index: {}]
  $region1: #{squeeze.1} parent=0
    #allocation0 [shape = 'u8[512]{0}', space=vmem, size = 0x400, scoped, tag = 'operand span for operand 1']
    #allocation1 [shape = 's32[1]{0}', space=sflag, size = 0x4, scoped, tag = 'scoped memory for squeeze.1']
    #allocation2 [shape = 'u8[4096]{0}', space=vmem, size = 0x1000, scoped, tag = 'scoped mem for output reshape']
    #allocation3 [shape = 'u8[4096]{0}', space=vmem, size = 0x1000, scoped, tag = 'scoped mem for input reshape']
    %2 = vsyncpa [#allocation1], 0
    %s4 = ssub.s32 4, 1
    %v5 = vld [vmem:[%s0] sm:%s4]
    %6 = vst [vmem:[#allocation3] sm:%s4] %v5
    %v7 = vld [vmem:[#allocation3] sm:$0x1]
    %vm8 = vcmask 261120
    %9 = vst.msk [vmem:[#allocation2] sm:$0x1] %vm8, %v7
    %s10 = scalar_lea.vmem [#allocation3], 1
    %v11 = vld [vmem:[%s10] sm:$0x1]
    %12 = vrot.lane.b32.xlu0 %v11, 32
    %v13 = vpop.permute.xlu0 %12
    %vm14 = vcmask 523520
    %15 = vst.msk [vmem:[#allocation2] sm:$0x1] %vm14, %v13
    %s17 = ssub.s32 2, 1
    %v18 = vld [vmem:[#allocation2] sm:%s17]
    %s20 = ssub.s32 2, 1
    %21 = vst [vmem:[#allocation0] sm:%s20] %v18
    %23 = vsyncadd [#allocation1], 0
    %s25 = sshll.u32 [#allocation0], 4
    %s26 = int_to_ptr.vmem [resolvable:$true] %s25
    %s27 = sshll.u32 %s1, 4
    %s28 = int_to_ptr.hbm [resolvable:$true] %s27
    %30 = dma.vmem_to_hbm [thread:$0]  %s26, 16, %s28, [#allocation1]
    %32 = dma.done [#allocation1], 16
    %33 = vsyncpa [#allocation1], 1

// kernel: network_forward.1
$region0: #{network_forward.1}
  #allocation0 [shape = 'u32[]', space=smem, size = 0x4, offset = 0x4, fixed_abs, tag = 'smem constant byte address 0x4 - core index']
  #allocation1 [shape = 'u32[72,128]{1,0:T(1,128)}', space=vmem, size = 0x9000, scoped, tag = 'internal scratch']
  #allocation2 [shape = 'bf16[64,1760]{1,0:T(8,128)(2,1)}', space=vmem, size = 0x38000, scoped, tag = 'scratch operand']
  #allocation3 [shape = 'f32[24,1760]{1,0:T(8,128)}', space=vmem, size = 0x2a000, scoped, tag = 'scratch operand']
  #allocation4 [shape = 'f32[216,1184]{1,0:T(8,128)}', space=vmem, size = 0x10e000, scoped, tag = 'scratch operand']
  #allocation5 [shape = 'bf16[16,1184]{1,0:T(8,128)(2,1)}', space=vmem, size = 0xa000, scoped, tag = 'scratch operand']
  #allocation6 [shape = 'bf16[400,32]{1,0:T(8,128)(2,1)}', space=vmem, size = 0x19000, scoped, tag = 'scratch operand']
  %s0 = inlined_call_operand.vmem [shape: bf16[2,16,2048], index: 0, kind: input, shape index: {}]
  %s1 = inlined_call_operand.vmem [shape: bf16[96,64], index: 1, kind: input, shape index: {}]
  %s2 = inlined_call_operand.vmem [shape: f32[24,1], index: 2, kind: input, shape index: {}]
  %s3 = inlined_call_operand.vmem [shape: bf16[64,216], index: 3, kind: input, shape index: {}]
  %s4 = inlined_call_operand.vmem [shape: f32[16,1], index: 4, kind: input, shape index: {}]
  %s5 = inlined_call_operand.vmem [shape: bf16[120,400], index: 5, kind: input, shape index: {}]
  %s6 = inlined_call_operand.vmem [shape: f32[120,1], index: 6, kind: input, shape index: {}]
  %s7 = inlined_call_operand.vmem [shape: bf16[60,120], index: 7, kind: input, shape index: {}]
  %s8 = inlined_call_operand.vmem [shape: f32[60,1], index: 8, kind: input, shape index: {}]
  %s9 = inlined_call_operand.vmem [shape: bf16[16,60], index: 9, kind: input, shape index: {}]
  %s10 = inlined_call_operand.vmem [shape: f32[16,1], index: 10, kind: input, shape index: {}]
  %s11 = inlined_call_operand.vmem [shape: bf16[8,16], index: 11, kind: input, shape index: {}]
  %s12 = inlined_call_operand.vmem [shape: f32[8,1], index: 12, kind: input, shape index: {}]
  %s13 = inlined_call_operand.vmem [shape: f32[2,8,32], index: 13, kind: output, shape index: {}]
  %s14 = sld [smem:[#allocation0]]
  $region85: #{network_forward.1} parent=0
    _
  %s16 = ssub.s32 1, %s14
  %s17 = scalar_select 0, %s16, %s14
  loop: start=0, step=1, limit=4
  $region2: #{network_forward.1} parent=0 // loop_pre_header
    _
  $region3: #{network_forward.1} parent=0 // loop_header
    %s19 = sphi 0, %s23
    %p20 = scmp.ge.s32.totalorder %s19, 4
    %s29 = sphi 0, %s31
    %s32 = sphi 0, %s29
    %s33 = sphi 0, %s32
    %s49 = sphi 0, %s33
    %s53 = sphi 0, %s53
    %s55 = sphi 0, %s53
    %s56 = sphi 0, %s55
    %s70 = sphi 0, %s56
    %s74 = sphi 0, %s74
    %s76 = sphi 0, %s74
    %s77 = sphi 0, %s76
    %s91 = sphi 0, %s77
    %s95 = sphi 0, %s95
    %s97 = sphi 0, %s95
    %s98 = sphi 0, %s97
    %s112 = sphi 0, %s98
    %s116 = sphi 0, %s116
    %s118 = sphi 0, %s116
    %s119 = sphi 0, %s118
    %s133 = sphi 0, %s119
    %s137 = sphi 0, %s137
    %s139 = sphi 0, %s137
    %s140 = sphi 0, %s139
    %s154 = sphi 0, %s140
    %s158 = sphi 0, %s158
    %s160 = sphi 0, %s158
    %s161 = sphi 0, %s160
    %s175 = sphi 0, %s161
    %s179 = sphi 0, %s179
    %s181 = sphi 0, %s179
    %s182 = sphi 0, %s181
    %s196 = sphi 0, %s182
    %s200 = sphi 0, %s200
    %s202 = sphi 0, %s200
    %s203 = sphi 0, %s202
    %s217 = sphi 0, %s203
    %s221 = sphi 0, %s221
    %s223 = sphi 0, %s221
    %s224 = sphi 0, %s223
    %s238 = sphi 0, %s224
    %s242 = sphi 0, %s242
    %s244 = sphi 0, %s242
    %s245 = sphi 0, %s244
    %s259 = sphi 0, %s245
    %s263 = sphi 0, %s263
    %s265 = sphi 0, %s263
    %s266 = sphi 0, %s265
    %s280 = sphi 0, %s266
    %s284 = sphi 0, %s284
    %s286 = sphi 0, %s284
    %s287 = sphi 0, %s286
    %s301 = sphi 0, %s287
    %s307 = sphi 0, %s309
    %s310 = sphi 0, %s307
    %s311 = sphi 0, %s310
    %s327 = sphi 0, %s311
  $region4: #{network_forward.1} parent=0 // loop_header_branch
    %22 = sbr.rel (%p20) target = $region8
  $region5: #{network_forward.1} parent=0 // loop_body
    %s24 = ssub.s32 %s19, 1
    %s25 = ssub.s32 %s19, 2
    %s26 = sadd.s32 %s19, 1
    %s27 = ssub.s32 %s19, %s26
    %p28 = scmp.eq.s32.totalorder %s27, 0
    %s30 = sadd.s32 %s29, 1
    %s31 = scalar_select %p28, %s29, %s30
    %p34 = pneg %p28
    %p35 = scmp.eq.s32.totalorder %s19, 1
    %p36 = por %p34, %p35
    %p37 = scmp.ne.s32.totalorder %s29, %s32
    %p38 = scmp.eq.s32.totalorder %s19, 0
    %p39 = por %p37, %p38
    %p40 = scmp.ne.s32.totalorder %s29, %s32
    %p41 = scmp.eq.s32.totalorder %s24, 1
    %p42 = por %p40, %p41
    %p43 = scmp.ne.s32.totalorder %s32, %s33
    %p44 = scmp.eq.s32.totalorder %s24, 0
    %p45 = por %p43, %p44
    %p46 = scmp.ne.s32.totalorder %s32, %s33
    %p47 = scmp.eq.s32.totalorder %s25, 1
    %p48 = por %p46, %p47
    %p50 = scmp.ne.s32.totalorder %s33, %s49
    %p51 = scmp.eq.s32.totalorder %s25, 0
    %p52 = por %p50, %p51
    %s54 = sadd.s32 %s53, 1
    %p57 = scmp.eq.s32.totalorder %s19, 1
    %p58 = scmp.ne.s32.totalorder %s53, %s55
    %p59 = scmp.eq.s32.totalorder %s19, 0
    %p60 = por %p58, %p59
    %p61 = scmp.ne.s32.totalorder %s53, %s55
    %p62 = scmp.eq.s32.totalorder %s24, 1
    %p63 = por %p61, %p62
    %p64 = scmp.ne.s32.totalorder %s55, %s56
    %p65 = scmp.eq.s32.totalorder %s24, 0
    %p66 = por %p64, %p65
    %p67 = scmp.ne.s32.totalorder %s55, %s56
    %p68 = scmp.eq.s32.totalorder %s25, 1
    %p69 = por %p67, %p68
    %p71 = scmp.ne.s32.totalorder %s56, %s70
    %p72 = scmp.eq.s32.totalorder %s25, 0
    %p73 = por %p71, %p72
    %s75 = sadd.s32 %s74, 1
    %p78 = scmp.eq.s32.totalorder %s19, 1
    %p79 = scmp.ne.s32.totalorder %s74, %s76
    %p80 = scmp.eq.s32.totalorder %s19, 0
    %p81 = por %p79, %p80
    %p82 = scmp.ne.s32.totalorder %s74, %s76
    %p83 = scmp.eq.s32.totalorder %s24, 1
    %p84 = por %p82, %p83
    %p85 = scmp.ne.s32.totalorder %s76, %s77
    %p86 = scmp.eq.s32.totalorder %s24, 0
    %p87 = por %p85, %p86
    %p88 = scmp.ne.s32.totalorder %s76, %s77
    %p89 = scmp.eq.s32.totalorder %s25, 1
    %p90 = por %p88, %p89
    %p92 = scmp.ne.s32.totalorder %s77, %s91
    %p93 = scmp.eq.s32.totalorder %s25, 0
    %p94 = por %p92, %p93
    %s96 = sadd.s32 %s95, 1
    %p99 = scmp.eq.s32.totalorder %s19, 1
    %p100 = scmp.ne.s32.totalorder %s95, %s97
    %p101 = scmp.eq.s32.totalorder %s19, 0
    %p102 = por %p100, %p101
    %p103 = scmp.ne.s32.totalorder %s95, %s97
    %p104 = scmp.eq.s32.totalorder %s24, 1
    %p105 = por %p103, %p104
    %p106 = scmp.ne.s32.totalorder %s97, %s98
    %p107 = scmp.eq.s32.totalorder %s24, 0
    %p108 = por %p106, %p107
    %p109 = scmp.ne.s32.totalorder %s97, %s98
    %p110 = scmp.eq.s32.totalorder %s25, 1
    %p111 = por %p109, %p110
    %p113 = scmp.ne.s32.totalorder %s98, %s112
    %p114 = scmp.eq.s32.totalorder %s25, 0
    %p115 = por %p113, %p114
    %s117 = sadd.s32 %s116, 1
    %p120 = scmp.eq.s32.totalorder %s19, 1
    %p121 = scmp.ne.s32.totalorder %s116, %s118
    %p122 = scmp.eq.s32.totalorder %s19, 0
    %p123 = por %p121, %p122
    %p124 = scmp.ne.s32.totalorder %s116, %s118
    %p125 = scmp.eq.s32.totalorder %s24, 1
    %p126 = por %p124, %p125
    %p127 = scmp.ne.s32.totalorder %s118, %s119
    %p128 = scmp.eq.s32.totalorder %s24, 0
    %p129 = por %p127, %p128
    %p130 = scmp.ne.s32.totalorder %s118, %s119
    %p131 = scmp.eq.s32.totalorder %s25, 1
    %p132 = por %p130, %p131
    %p134 = scmp.ne.s32.totalorder %s119, %s133
    %p135 = scmp.eq.s32.totalorder %s25, 0
    %p136 = por %p134, %p135
    %s138 = sadd.s32 %s137, 1
    %p141 = scmp.eq.s32.totalorder %s19, 1
    %p142 = scmp.ne.s32.totalorder %s137, %s139
    %p143 = scmp.eq.s32.totalorder %s19, 0
    %p144 = por %p142, %p143
    %p145 = scmp.ne.s32.totalorder %s137, %s139
    %p146 = scmp.eq.s32.totalorder %s24, 1
    %p147 = por %p145, %p146
    %p148 = scmp.ne.s32.totalorder %s139, %s140
    %p149 = scmp.eq.s32.totalorder %s24, 0
    %p150 = por %p148, %p149
    %p151 = scmp.ne.s32.totalorder %s139, %s140
    %p152 = scmp.eq.s32.totalorder %s25, 1
    %p153 = por %p151, %p152
    %p155 = scmp.ne.s32.totalorder %s140, %s154
    %p156 = scmp.eq.s32.totalorder %s25, 0
    %p157 = por %p155, %p156
    %s159 = sadd.s32 %s158, 1
    %p162 = scmp.eq.s32.totalorder %s19, 1
    %p163 = scmp.ne.s32.totalorder %s158, %s160
    %p164 = scmp.eq.s32.totalorder %s19, 0
    %p165 = por %p163, %p164
    %p166 = scmp.ne.s32.totalorder %s158, %s160
    %p167 = scmp.eq.s32.totalorder %s24, 1
    %p168 = por %p166, %p167
    %p169 = scmp.ne.s32.totalorder %s160, %s161
    %p170 = scmp.eq.s32.totalorder %s24, 0
    %p171 = por %p169, %p170
    %p172 = scmp.ne.s32.totalorder %s160, %s161
    %p173 = scmp.eq.s32.totalorder %s25, 1
    %p174 = por %p172, %p173
    %p176 = scmp.ne.s32.totalorder %s161, %s175
    %p177 = scmp.eq.s32.totalorder %s25, 0
    %p178 = por %p176, %p177
    %s180 = sadd.s32 %s179, 1
    %p183 = scmp.eq.s32.totalorder %s19, 1
    %p184 = scmp.ne.s32.totalorder %s179, %s181
    %p185 = scmp.eq.s32.totalorder %s19, 0
    %p186 = por %p184, %p185
    %p187 = scmp.ne.s32.totalorder %s179, %s181
    %p188 = scmp.eq.s32.totalorder %s24, 1
    %p189 = por %p187, %p188
    %p190 = scmp.ne.s32.totalorder %s181, %s182
    %p191 = scmp.eq.s32.totalorder %s24, 0
    %p192 = por %p190, %p191
    %p193 = scmp.ne.s32.totalorder %s181, %s182
    %p194 = scmp.eq.s32.totalorder %s25, 1
    %p195 = por %p193, %p194
    %p197 = scmp.ne.s32.totalorder %s182, %s196
    %p198 = scmp.eq.s32.totalorder %s25, 0
    %p199 = por %p197, %p198
    %s201 = sadd.s32 %s200, 1
    %p204 = scmp.eq.s32.totalorder %s19, 1
    %p205 = scmp.ne.s32.totalorder %s200, %s202
    %p206 = scmp.eq.s32.totalorder %s19, 0
    %p207 = por %p205, %p206
    %p208 = scmp.ne.s32.totalorder %s200, %s202
    %p209 = scmp.eq.s32.totalorder %s24, 1
    %p210 = por %p208, %p209
    %p211 = scmp.ne.s32.totalorder %s202, %s203
    %p212 = scmp.eq.s32.totalorder %s24, 0
    %p213 = por %p211, %p212
    %p214 = scmp.ne.s32.totalorder %s202, %s203
    %p215 = scmp.eq.s32.totalorder %s25, 1
    %p216 = por %p214, %p215
    %p218 = scmp.ne.s32.totalorder %s203, %s217
    %p219 = scmp.eq.s32.totalorder %s25, 0
    %p220 = por %p218, %p219
    %s222 = sadd.s32 %s221, 1
    %p225 = scmp.eq.s32.totalorder %s19, 1
    %p226 = scmp.ne.s32.totalorder %s221, %s223
    %p227 = scmp.eq.s32.totalorder %s19, 0
    %p228 = por %p226, %p227
    %p229 = scmp.ne.s32.totalorder %s221, %s223
    %p230 = scmp.eq.s32.totalorder %s24, 1
    %p231 = por %p229, %p230
    %p232 = scmp.ne.s32.totalorder %s223, %s224
    %p233 = scmp.eq.s32.totalorder %s24, 0
    %p234 = por %p232, %p233
    %p235 = scmp.ne.s32.totalorder %s223, %s224
    %p236 = scmp.eq.s32.totalorder %s25, 1
    %p237 = por %p235, %p236
    %p239 = scmp.ne.s32.totalorder %s224, %s238
    %p240 = scmp.eq.s32.totalorder %s25, 0
    %p241 = por %p239, %p240
    %s243 = sadd.s32 %s242, 1
    %p246 = scmp.eq.s32.totalorder %s19, 1
    %p247 = scmp.ne.s32.totalorder %s242, %s244
    %p248 = scmp.eq.s32.totalorder %s19, 0
    %p249 = por %p247, %p248
    %p250 = scmp.ne.s32.totalorder %s242, %s244
    %p251 = scmp.eq.s32.totalorder %s24, 1
    %p252 = por %p250, %p251
    %p253 = scmp.ne.s32.totalorder %s244, %s245
    %p254 = scmp.eq.s32.totalorder %s24, 0
    %p255 = por %p253, %p254
    %p256 = scmp.ne.s32.totalorder %s244, %s245
    %p257 = scmp.eq.s32.totalorder %s25, 1
    %p258 = por %p256, %p257
    %p260 = scmp.ne.s32.totalorder %s245, %s259
    %p261 = scmp.eq.s32.totalorder %s25, 0
    %p262 = por %p260, %p261
    %s264 = sadd.s32 %s263, 1
    %p267 = scmp.eq.s32.totalorder %s19, 1
    %p268 = scmp.ne.s32.totalorder %s263, %s265
    %p269 = scmp.eq.s32.totalorder %s19, 0
    %p270 = por %p268, %p269
    %p271 = scmp.ne.s32.totalorder %s263, %s265
    %p272 = scmp.eq.s32.totalorder %s24, 1
    %p273 = por %p271, %p272
    %p274 = scmp.ne.s32.totalorder %s265, %s266
    %p275 = scmp.eq.s32.totalorder %s24, 0
    %p276 = por %p274, %p275
    %p277 = scmp.ne.s32.totalorder %s265, %s266
    %p278 = scmp.eq.s32.totalorder %s25, 1
    %p279 = por %p277, %p278
    %p281 = scmp.ne.s32.totalorder %s266, %s280
    %p282 = scmp.eq.s32.totalorder %s25, 0
    %p283 = por %p281, %p282
    %s285 = sadd.s32 %s284, 1
    %p288 = scmp.eq.s32.totalorder %s19, 1
    %p289 = scmp.ne.s32.totalorder %s284, %s286
    %p290 = scmp.eq.s32.totalorder %s19, 0
    %p291 = por %p289, %p290
    %p292 = scmp.ne.s32.totalorder %s284, %s286
    %p293 = scmp.eq.s32.totalorder %s24, 1
    %p294 = por %p292, %p293
    %p295 = scmp.ne.s32.totalorder %s286, %s287
    %p296 = scmp.eq.s32.totalorder %s24, 0
    %p297 = por %p295, %p296
    %p298 = scmp.ne.s32.totalorder %s286, %s287
    %p299 = scmp.eq.s32.totalorder %s25, 1
    %p300 = por %p298, %p299
    %p302 = scmp.ne.s32.totalorder %s287, %s301
    %p303 = scmp.eq.s32.totalorder %s25, 0
    %p304 = por %p302, %p303
    %s305 = ssub.s32 %s19, %s26
    %p306 = scmp.eq.s32.totalorder %s305, 0
    %s308 = sadd.s32 %s307, 1
    %s309 = scalar_select %p306, %s307, %s308
    %p312 = pneg %p306
    %p313 = scmp.eq.s32.totalorder %s19, 1
    %p314 = por %p312, %p313
    %p315 = scmp.ne.s32.totalorder %s307, %s310
    %p316 = scmp.eq.s32.totalorder %s19, 0
    %p317 = por %p315, %p316
    %p318 = scmp.ne.s32.totalorder %s307, %s310
    %p319 = scmp.eq.s32.totalorder %s24, 1
    %p320 = por %p318, %p319
    %p321 = scmp.ne.s32.totalorder %s310, %s311
    %p322 = scmp.eq.s32.totalorder %s24, 0
    %p323 = por %p321, %p322
    %p324 = scmp.ne.s32.totalorder %s310, %s311
    %p325 = scmp.eq.s32.totalorder %s25, 1
    %p326 = por %p324, %p325
    %p328 = scmp.ne.s32.totalorder %s311, %s327
    %p329 = scmp.eq.s32.totalorder %s25, 0
    %p330 = por %p328, %p329
    %p331 = scmp.le.s32.totalorder 1, %s19
    %p332 = scmp.lt.s32.totalorder %s19, 3
    %p333 = pnand %p331, %p332
    %p334 = pneg %p333
    // Predicated region
    $region9: #{network_forward.1} parent=5 // pred_check
      _
    $region10: #{network_forward.1} parent=5 // pred_check_branch
      %336 = sbr.rel (%p333) target = $region12
    $region11: #{network_forward.1} parent=5 // pred_region
      %s337 = ssub.s32 %s19, 1
      // Predicated region
      $region13: #{network_forward.1} parent=11 // pred_check
        %p338 = pneg %p66
      $region14: #{network_forward.1} parent=11 // pred_check_branch
        %340 = sbr.rel (%p338) target = $region16
      $region15: #{network_forward.1} parent=11 // pred_region
        _
      $region16: #{network_forward.1} parent=11 // pred_fallthru
        _
      // Predicated region
      $region17: #{network_forward.1} parent=11 // pred_check
        %p341 = pneg %p87
      $region18: #{network_forward.1} parent=11 // pred_check_branch
        %343 = sbr.rel (%p341) target = $region20
      $region19: #{network_forward.1} parent=11 // pred_region
        _
      $region20: #{network_forward.1} parent=11 // pred_fallthru
        _
      // Predicated region
      $region21: #{network_forward.1} parent=11 // pred_check
        %p344 = pneg %p108
      $region22: #{network_forward.1} parent=11 // pred_check_branch
        %346 = sbr.rel (%p344) target = $region24
      $region23: #{network_forward.1} parent=11 // pred_region
        _
      $region24: #{network_forward.1} parent=11 // pred_fallthru
        _
      // Predicated region
      $region25: #{network_forward.1} parent=11 // pred_check
        %p347 = pneg %p129
      $region26: #{network_forward.1} parent=11 // pred_check_branch
        %349 = sbr.rel (%p347) target = $region28
      $region27: #{network_forward.1} parent=11 // pred_region
        _
      $region28: #{network_forward.1} parent=11 // pred_fallthru
        _
      // Predicated region
      $region29: #{network_forward.1} parent=11 // pred_check
        %p350 = pneg %p150
      $region30: #{network_forward.1} parent=11 // pred_check_branch
        %352 = sbr.rel (%p350) target = $region32
      $region31: #{network_forward.1} parent=11 // pred_region
        _
      $region32: #{network_forward.1} parent=11 // pred_fallthru
        _
      // Predicated region
      $region33: #{network_forward.1} parent=11 // pred_check
        %p353 = pneg %p171
      $region34: #{network_forward.1} parent=11 // pred_check_branch
        %355 = sbr.rel (%p353) target = $region36
      $region35: #{network_forward.1} parent=11 // pred_region
        _
      $region36: #{network_forward.1} parent=11 // pred_fallthru
        _
      // Predicated region
      $region37: #{network_forward.1} parent=11 // pred_check
        %p356 = pneg %p192
      $region38: #{network_forward.1} parent=11 // pred_check_branch
        %358 = sbr.rel (%p356) target = $region40
      $region39: #{network_forward.1} parent=11 // pred_region
        _
      $region40: #{network_forward.1} parent=11 // pred_fallthru
        _
      // Predicated region
      $region41: #{network_forward.1} parent=11 // pred_check
        %p359 = pneg %p213
      $region42: #{network_forward.1} parent=11 // pred_check_branch
        %361 = sbr.rel (%p359) target = $region44
      $region43: #{network_forward.1} parent=11 // pred_region
        _
      $region44: #{network_forward.1} parent=11 // pred_fallthru
        _
      // Predicated region
      $region45: #{network_forward.1} parent=11 // pred_check
        %p362 = pneg %p234
      $region46: #{network_forward.1} parent=11 // pred_check_branch
        %364 = sbr.rel (%p362) target = $region48
      $region47: #{network_forward.1} parent=11 // pred_region
        _
      $region48: #{network_forward.1} parent=11 // pred_fallthru
        _
      // Predicated region
      $region49: #{network_forward.1} parent=11 // pred_check
        %p365 = pneg %p255
      $region50: #{network_forward.1} parent=11 // pred_check_branch
        %367 = sbr.rel (%p365) target = $region52
      $region51: #{network_forward.1} parent=11 // pred_region
        _
      $region52: #{network_forward.1} parent=11 // pred_fallthru
        _
      // Predicated region
      $region53: #{network_forward.1} parent=11 // pred_check
        %p368 = pneg %p276
      $region54: #{network_forward.1} parent=11 // pred_check_branch
        %370 = sbr.rel (%p368) target = $region56
      $region55: #{network_forward.1} parent=11 // pred_region
        _
      $region56: #{network_forward.1} parent=11 // pred_fallthru
        _
      // Predicated region
      $region57: #{network_forward.1} parent=11 // pred_check
        %p371 = pneg %p297
      $region58: #{network_forward.1} parent=11 // pred_check_branch
        %373 = sbr.rel (%p371) target = $region60
      $region59: #{network_forward.1} parent=11 // pred_region
        _
      $region60: #{network_forward.1} parent=11 // pred_fallthru
        _
    $region12: #{network_forward.1} parent=5 // pred_fallthru
      _
    %p374 = scmp.lt.s32.totalorder %s19, 2
    // Predicated region
    $region61: #{network_forward.1} parent=5 // pred_check
      %p375 = pneg %p374
    $region62: #{network_forward.1} parent=5 // pred_check_branch
      %377 = sbr.rel (%p375) target = $region64
    $region63: #{network_forward.1} parent=5 // pred_region
      // Predicated region
      $region65: #{network_forward.1} parent=63 // pred_check
        %p378 = pneg %p39
      $region66: #{network_forward.1} parent=63 // pred_check_branch
        %380 = sbr.rel (%p378) target = $region68
      $region67: #{network_forward.1} parent=63 // pred_region
        %p381 = scmp.lt.s32.totalorder %s19, 1
        %s382 = scalar_select %p381, %s19, 1
        %s383 = smul.addr %s382, 32
        %s384 = smul.addr %s383, 4
        %s385 = scalar_lea.vmem %s0, %s384
      $region68: #{network_forward.1} parent=63 // pred_fallthru
        _
    $region64: #{network_forward.1} parent=5 // pred_fallthru
      _
    %p386 = scmp.le.s32.totalorder 1, %s19
    %p387 = scmp.lt.s32.totalorder %s19, 3
    %p388 = pnand %p386, %p387
    %p389 = pneg %p388
    // Predicated region
    $region69: #{network_forward.1} parent=5 // pred_check
      _
    $region70: #{network_forward.1} parent=5 // pred_check_branch
      %391 = sbr.rel (%p388) target = $region72
    $region71: #{network_forward.1} parent=5 // pred_region
      %s392 = ssub.s32 %s19, 1
      %p393 = scmp.lt.s32.totalorder %s24, 1
      %s394 = scalar_select %p393, %s24, 1
      %s395 = smul.addr %s394, 32
      %s396 = smul.addr %s395, 4
      %s397 = scalar_lea.vmem %s0, %s396
      %p398 = pneg %p45
      %p399 = pneg %p42
      %p400 = pneg %p66
      %p401 = pneg %p63
      %p402 = pneg %p87
      %p403 = pneg %p84
      %p404 = pneg %p108
      %p405 = pneg %p105
      %p406 = pneg %p129
      %p407 = pneg %p126
      %p408 = pneg %p150
      %p409 = pneg %p147
      %p410 = pneg %p171
      %p411 = pneg %p168
      %p412 = pneg %p192
      %p413 = pneg %p189
      %p414 = pneg %p213
      %p415 = pneg %p210
      %p416 = pneg %p234
      %p417 = pneg %p231
      %p418 = pneg %p255
      %p419 = pneg %p252
      %p420 = pneg %p276
      %p421 = pneg %p273
      %p422 = pneg %p297
      %p423 = pneg %p294
      %p424 = pneg %p323
      %p425 = pneg %p320
      %p426 = scmp.lt.s32.totalorder %s24, 1
      %s427 = scalar_select %p426, %s24, 1
      %s428 = smul.addr %s427, 8
      %s429 = scalar_lea.vmem %s13, %s428
      %p430 = scmp.lt.s32.totalorder %s24, 1
      %s431 = scalar_select %p430, %s24, 1
      %s432 = smul.addr %s431, 32
      %s433 = smul.addr %s432, 4
      %s434 = scalar_lea.vmem %s0, %s433
      %p435 = scmp.lt.s32.totalorder %s24, 1
      %s436 = scalar_select %p435, %s24, 1
      %s437 = smul.addr %s436, 8
      %s438 = scalar_lea.vmem %s13, %s437
      %v440 = vld [vmem:[%s434] sm:$0xff]
      %v441 = vld [vmem:[%s434 + $0x8] sm:$0xff]
      %v442 = vld [vmem:[%s434 + $0x10] sm:$0xff]
      %v443 = vld [vmem:[%s434 + $0x18] sm:$0xff]
      %v444 = vld [vmem:[%s434 + $0x20] sm:$0xff]
      %v445 = vld [vmem:[%s434 + $0x28] sm:$0xff]
      %v446 = vld [vmem:[%s434 + $0x30] sm:$0xff]
      %v447 = vld [vmem:[%s434 + $0x40] sm:$0xff]
      %v448 = vld [vmem:[%s434 + $0x48] sm:$0xff]
      %v449 = vld [vmem:[%s434 + $0x50] sm:$0xff]
      %v450 = vld [vmem:[%s434 + $0x58] sm:$0xff]
      %v451 = vld [vmem:[%s434 + $0x60] sm:$0xff]
      %v452 = vld [vmem:[%s434 + $0x68] sm:$0xff]
      %v453 = vld [vmem:[%s434 + $0x70] sm:$0xff]
      %454 = vst [vmem:[#allocation2] sm:$0xff] %v440
      %455 = vst [vmem:[#allocation2 + $0x8] sm:$0xff] %v441
      %456 = vst [vmem:[#allocation2 + $0x10] sm:$0xff] %v442
      %457 = vst [vmem:[#allocation2 + $0x18] sm:$0xff] %v443
      %458 = vst [vmem:[#allocation2 + $0x20] sm:$0xff] %v444
      %459 = vst [vmem:[#allocation2 + $0x28] sm:$0xff] %v445
      %vm460 = vcmask 1043456
      %vm461 = vcmask 785412
      %vm462 = vmor %vm461, %vm460
      %463 = vst.msk [vmem:[#allocation2 + $0x30] sm:$0xff] %vm462, %v446
      %464 = vst [vmem:[#allocation2 + $0x38] sm:$0xff] %v447
      %465 = vst [vmem:[#allocation2 + $0x40] sm:$0xff] %v448
      %466 = vst [vmem:[#allocation2 + $0x48] sm:$0xff] %v449
      %467 = vst [vmem:[#allocation2 + $0x50] sm:$0xff] %v450
      %468 = vst [vmem:[#allocation2 + $0x58] sm:$0xff] %v451
      %469 = vst [vmem:[#allocation2 + $0x60] sm:$0xff] %v452
      %470 = vst.msk [vmem:[#allocation2 + $0x68] sm:$0xff] %vm462, %v453
      %v471 = vld [vmem:[%s434] sm:$0xff]
      %v472 = vld [vmem:[%s434 + $0x8] sm:$0xff]
      %v473 = vld [vmem:[%s434 + $0x10] sm:$0xff]
      %v474 = vld [vmem:[%s434 + $0x18] sm:$0xff]
      %v475 = vld [vmem:[%s434 + $0x20] sm:$0xff]
      %v476 = vld [vmem:[%s434 + $0x28] sm:$0xff]
      %v477 = vld [vmem:[%s434 + $0x30] sm:$0xff]
      %v478 = vld [vmem:[%s434 + $0x40] sm:$0xff]
      %v479 = vld [vmem:[%s434 + $0x48] sm:$0xff]
      %v480 = vld [vmem:[%s434 + $0x50] sm:$0xff]
      %v481 = vld [vmem:[%s434 + $0x58] sm:$0xff]
      %v482 = vld [vmem:[%s434 + $0x60] sm:$0xff]
      %v483 = vld [vmem:[%s434 + $0x68] sm:$0xff]
      %v484 = vld [vmem:[%s434 + $0x70] sm:$0xff]
      %499 = vrot.lane.b32.xlu0 %v471, 96
      %v500 = vpop.permute.xlu0 %499
      %501 = vrot.lane.b32.xlu0 %v472, 96
      %v502 = vpop.permute.xlu0 %501
      %503 = vrot.lane.b32.xlu0 %v473, 96
      %v504 = vpop.permute.xlu0 %503
      %505 = vrot.lane.b32.xlu0 %v474, 96
      %v506 = vpop.permute.xlu0 %505
      %507 = vrot.lane.b32.xlu0 %v475, 96
      %v508 = vpop.permute.xlu0 %507
      %509 = vrot.lane.b32.xlu0 %v476, 96
      %v510 = vpop.permute.xlu0 %509
      %511 = vrot.lane.b32.xlu0 %v477, 96
      %v512 = vpop.permute.xlu0 %511
      %513 = vrot.lane.b32.xlu0 %v478, 96
      %v514 = vpop.permute.xlu0 %513
      %515 = vrot.lane.b32.xlu0 %v479, 96
      %v516 = vpop.permute.xlu0 %515
      %517 = vrot.lane.b32.xlu0 %v480, 96
      %v518 = vpop.permute.xlu0 %517
      %519 = vrot.lane.b32.xlu0 %v481, 96
      %v520 = vpop.permute.xlu0 %519
      %521 = vrot.lane.b32.xlu0 %v482, 96
      %v522 = vpop.permute.xlu0 %521
      %523 = vrot.lane.b32.xlu0 %v483, 96
      %v524 = vpop.permute.xlu0 %523
      %525 = vrot.lane.b32.xlu0 %v484, 96
      %v526 = vpop.permute.xlu0 %525
      %v527 = vrot.slane %v500, 4
      %v528 = vrot.slane %v502, 4
      %v529 = vrot.slane %v504, 4
      %v530 = vrot.slane %v506, 4
      %v531 = vrot.slane %v508, 4
      %v532 = vrot.slane %v510, 4
      %v533 = vrot.slane %v512, 4
      %v534 = vrot.slane %v514, 4
      %v535 = vrot.slane %v516, 4
      %v536 = vrot.slane %v518, 4
      %v537 = vrot.slane %v520, 4
      %v538 = vrot.slane %v522, 4
      %v539 = vrot.slane %v524, 4
      %v540 = vrot.slane %v526, 4
      %vm541 = vcmask 1043456
      %v542 = vsel %vm541, %v527, %v528
      %vm543 = vcmask 785408
      %v544 = vsel %vm543, %v500, %v542
      %v545 = vsel %vm541, %v528, %v529
      %v546 = vsel %vm543, %v502, %v545
      %v547 = vsel %vm541, %v529, %v530
      %v548 = vsel %vm543, %v504, %v547
      %v549 = vsel %vm541, %v530, %v531
      %v550 = vsel %vm543, %v506, %v549
      %v551 = vsel %vm541, %v531, %v532
      %v552 = vsel %vm543, %v508, %v551
      %v553 = vsel %vm541, %v532, %v533
      %v554 = vsel %vm543, %v510, %v553
      %v555 = vsel %vm543, %v512, %v533
      %v556 = vsel %vm541, %v534, %v535
      %v557 = vsel %vm543, %v514, %v556
      %v558 = vsel %vm541, %v535, %v536
      %v559 = vsel %vm543, %v516, %v558
      %v560 = vsel %vm541, %v536, %v537
      %v561 = vsel %vm543, %v518, %v560
      %v562 = vsel %vm541, %v537, %v538
      %v563 = vsel %vm543, %v520, %v562
      %v564 = vsel %vm541, %v538, %v539
      %v565 = vsel %vm543, %v522, %v564
      %v566 = vsel %vm541, %v539, %v540
      %v567 = vsel %vm543, %v524, %v566
      %v568 = vsel %vm543, %v526, %v540
      %583 = vst [vmem:[#allocation2 + $0x70] sm:$0xff] %v544
      %584 = vst [vmem:[#allocation2 + $0x78] sm:$0xff] %v546
      %585 = vst [vmem:[#allocation2 + $0x80] sm:$0xff] %v548
      %586 = vst [vmem:[#allocation2 + $0x88] sm:$0xff] %v550
      %587 = vst [vmem:[#allocation2 + $0x90] sm:$0xff] %v552
      %588 = vst [vmem:[#allocation2 + $0x98] sm:$0xff] %v554
      %589 = vst.msk [vmem:[#allocation2 + $0xa0] sm:$0xff] %vm462, %v555
      %590 = vst [vmem:[#allocation2 + $0xa8] sm:$0xff] %v557
      %591 = vst [vmem:[#allocation2 + $0xb0] sm:$0xff] %v559
      %592 = vst [vmem:[#allocation2 + $0xb8] sm:$0xff] %v561
      %593 = vst [vmem:[#allocation2 + $0xc0] sm:$0xff] %v563
      %594 = vst [vmem:[#allocation2 + $0xc8] sm:$0xff] %v565
      %595 = vst [vmem:[#allocation2 + $0xd0] sm:$0xff] %v567
      %596 = vst.msk [vmem:[#allocation2 + $0xd8] sm:$0xff] %vm462, %v568
      %v597 = vld [vmem:[%s434 + $0x8] sm:$0xff]
      %v598 = vld [vmem:[%s434 + $0x10] sm:$0xff]
      %v599 = vld [vmem:[%s434 + $0x18] sm:$0xff]
      %v600 = vld [vmem:[%s434 + $0x20] sm:$0xff]
      %v601 = vld [vmem:[%s434 + $0x28] sm:$0xff]
      %v602 = vld [vmem:[%s434 + $0x30] sm:$0xff]
      %v603 = vld [vmem:[%s434 + $0x38] sm:$0xff]
      %v604 = vld [vmem:[%s434 + $0x48] sm:$0xff]
      %v605 = vld [vmem:[%s434 + $0x50] sm:$0xff]
      %v606 = vld [vmem:[%s434 + $0x58] sm:$0xff]
      %v607 = vld [vmem:[%s434 + $0x60] sm:$0xff]
      %v608 = vld [vmem:[%s434 + $0x68] sm:$0xff]
      %v609 = vld [vmem:[%s434 + $0x70] sm:$0xff]
      %v610 = vld [vmem:[%s434 + $0x78] sm:$0xff]
      %611 = vst [vmem:[#allocation2 + $0xe0] sm:$0xff] %v597
      %612 = vst [vmem:[#allocation2 + $0xe8] sm:$0xff] %v598
      %613 = vst [vmem:[#allocation2 + $0xf0] sm:$0xff] %v599
      %614 = vst [vmem:[#allocation2 + $0xf8] sm:$0xff] %v600
      %615 = vst [vmem:[#allocation2 + $0x100] sm:$0xff] %v601
      %616 = vst [vmem:[#allocation2 + $0x108] sm:$0xff] %v602
      %617 = vst.msk [vmem:[#allocation2 + $0x110] sm:$0xff] %vm462, %v603
      %618 = vst [vmem:[#allocation2 + $0x118] sm:$0xff] %v604
      %619 = vst [vmem:[#allocation2 + $0x120] sm:$0xff] %v605
      %620 = vst [vmem:[#allocation2 + $0x128] sm:$0xff] %v606
      %621 = vst [vmem:[#allocation2 + $0x130] sm:$0xff] %v607
      %622 = vst [vmem:[#allocation2 + $0x138] sm:$0xff] %v608
      %623 = vst [vmem:[#allocation2 + $0x140] sm:$0xff] %v609
      %624 = vst.msk [vmem:[#allocation2 + $0x148] sm:$0xff] %vm462, %v610
      %v625 = vld [vmem:[%s434 + $0x8] sm:$0xff]
      %v626 = vld [vmem:[%s434 + $0x10] sm:$0xff]
      %v627 = vld [vmem:[%s434 + $0x18] sm:$0xff]
      %v628 = vld [vmem:[%s434 + $0x20] sm:$0xff]
      %v629 = vld [vmem:[%s434 + $0x28] sm:$0xff]
      %v630 = vld [vmem:[%s434 + $0x30] sm:$0xff]
      %v631 = vld [vmem:[%s434 + $0x38] sm:$0xff]
      %v632 = vld [vmem:[%s434 + $0x48] sm:$0xff]
      %v633 = vld [vmem:[%s434 + $0x50] sm:$0xff]
      %v634 = vld [vmem:[%s434 + $0x58] sm:$0xff]
      %v635 = vld [vmem:[%s434 + $0x60] sm:$0xff]
      %v636 = vld [vmem:[%s434 + $0x68] sm:$0xff]
      %v637 = vld [vmem:[%s434 + $0x70] sm:$0xff]
      %v638 = vld [vmem:[%s434 + $0x78] sm:$0xff]
      %653 = vrot.lane.b32.xlu0 %v625, 96
      %v654 = vpop.permute.xlu0 %653
      %655 = vrot.lane.b32.xlu0 %v626, 96
      %v656 = vpop.permute.xlu0 %655
      %657 = vrot.lane.b32.xlu0 %v627, 96
      %v658 = vpop.permute.xlu0 %657
      %659 = vrot.lane.b32.xlu0 %v628, 96
      %v660 = vpop.permute.xlu0 %659
      %661 = vrot.lane.b32.xlu0 %v629, 96
      %v662 = vpop.permute.xlu0 %661
      %663 = vrot.lane.b32.xlu0 %v630, 96
      %v664 = vpop.permute.xlu0 %663
      %665 = vrot.lane.b32.xlu0 %v631, 96
      %v666 = vpop.permute.xlu0 %665
      %667 = vrot.lane.b32.xlu0 %v632, 96
      %v668 = vpop.permute.xlu0 %667
      %669 = vrot.lane.b32.xlu0 %v633, 96
      %v670 = vpop.permute.xlu0 %669
      %671 = vrot.lane.b32.xlu0 %v634, 96
      %v672 = vpop.permute.xlu0 %671
      %673 = vrot.lane.b32.xlu0 %v635, 96
      %v674 = vpop.permute.xlu0 %673
      %675 = vrot.lane.b32.xlu0 %v636, 96
      %v676 = vpop.permute.xlu0 %675
      %677 = vrot.lane.b32.xlu0 %v637, 96
      %v678 = vpop.permute.xlu0 %677
      %679 = vrot.lane.b32.xlu0 %v638, 96
      %v680 = vpop.permute.xlu0 %679
      %v681 = vrot.slane %v654, 4
      %v682 = vrot.slane %v656, 4
      %v683 = vrot.slane %v658, 4
      %v684 = vrot.slane %v660, 4
      %v685 = vrot.slane %v662, 4
      %v686 = vrot.slane %v664, 4
      %v687 = vrot.slane %v666, 4
      %v688 = vrot.slane %v668, 4
      %v689 = vrot.slane %v670, 4
      %v690 = vrot.slane %v672, 4
      %v691 = vrot.slane %v674, 4
      %v692 = vrot.slane %v676, 4
      %v693 = vrot.slane %v678, 4
      %v694 = vrot.slane %v680, 4
      %v695 = vsel %vm541, %v681, %v682
      %v696 = vsel %vm543, %v654, %v695
      %v697 = vsel %vm541, %v682, %v683
      %v698 = vsel %vm543, %v656, %v697
      %v699 = vsel %vm541, %v683, %v684
      %v700 = vsel %vm543, %v658, %v699
      %v701 = vsel %vm541, %v684, %v685
      %v702 = vsel %vm543, %v660, %v701
      %v703 = vsel %vm541, %v685, %v686
      %v704 = vsel %vm543, %v662, %v703
      %v705 = vsel %vm541, %v686, %v687
      %v706 = vsel %vm543, %v664, %v705
      %v707 = vsel %vm543, %v666, %v687
      %v708 = vsel %vm541, %v688, %v689
      %v709 = vsel %vm543, %v668, %v708
      %v710 = vsel %vm541, %v689, %v690
      %v711 = vsel %vm543, %v670, %v710
      %v712 = vsel %vm541, %v690, %v691
      %v713 = vsel %vm543, %v672, %v712
      %v714 = vsel %vm541, %v691, %v692
      %v715 = vsel %vm543, %v674, %v714
      %v716 = vsel %vm541, %v692, %v693
      %v717 = vsel %vm543, %v676, %v716
      %v718 = vsel %vm541, %v693, %v694
      %v719 = vsel %vm543, %v678, %v718
      %v720 = vsel %vm543, %v680, %v694
      %735 = vst [vmem:[#allocation2 + $0x150] sm:$0xff] %v696
      %736 = vst [vmem:[#allocation2 + $0x158] sm:$0xff] %v698
      %737 = vst [vmem:[#allocation2 + $0x160] sm:$0xff] %v700
      %738 = vst [vmem:[#allocation2 + $0x168] sm:$0xff] %v702
      %739 = vst [vmem:[#allocation2 + $0x170] sm:$0xff] %v704
      %740 = vst [vmem:[#allocation2 + $0x178] sm:$0xff] %v706
      %741 = vst.msk [vmem:[#allocation2 + $0x180] sm:$0xff] %vm462, %v707
      %742 = vst [vmem:[#allocation2 + $0x188] sm:$0xff] %v709
      %743 = vst [vmem:[#allocation2 + $0x190] sm:$0xff] %v711
      %744 = vst [vmem:[#allocation2 + $0x198] sm:$0xff] %v713
      %745 = vst [vmem:[#allocation2 + $0x1a0] sm:$0xff] %v715
      %746 = vst [vmem:[#allocation2 + $0x1a8] sm:$0xff] %v717
      %747 = vst [vmem:[#allocation2 + $0x1b0] sm:$0xff] %v719
      %748 = vst.msk [vmem:[#allocation2 + $0x1b8] sm:$0xff] %vm462, %v720
      %v749 = vld [vmem:[%s1] sm:$0xf]
      %v750 = vld [vmem:[%s1 + $0x4] sm:$0xf]
      %v751 = vld [vmem:[%s1 + $0x8] sm:$0xf]
      %v752 = vld [vmem:[%s1 + $0xc] sm:$0xf]
      %v753 = vld [vmem:[%s1 + $0x10] sm:$0xf]
      %v754 = vld [vmem:[%s1 + $0x14] sm:$0xf]
      %v755 = vld [vmem:[%s1 + $0x18] sm:$0xf]
      %v756 = vld [vmem:[%s1 + $0x1c] sm:$0xf]
      %v757 = vld [vmem:[%s1 + $0x20] sm:$0xf]
      %v758 = vld [vmem:[%s1 + $0x24] sm:$0xf]
      %v759 = vld [vmem:[%s1 + $0x28] sm:$0xf]
      %v760 = vld [vmem:[%s1 + $0x2c] sm:$0xf]
      %v761 = vld [vmem:[#allocation2] sm:$0xff]
      %v762 = vld [vmem:[#allocation2 + $0x8] sm:$0xff]
      %v763 = vld [vmem:[#allocation2 + $0x10] sm:$0xff]
      %v764 = vld [vmem:[#allocation2 + $0x18] sm:$0xff]
      %v765 = vld [vmem:[#allocation2 + $0x20] sm:$0xff]
      %v766 = vld [vmem:[#allocation2 + $0x28] sm:$0xff]
      %v767 = vld [vmem:[#allocation2 + $0x30] sm:$0xff]
      %v768 = vld [vmem:[#allocation2 + $0x38] sm:$0xff]
      %v769 = vld [vmem:[#allocation2 + $0x40] sm:$0xff]
      %v770 = vld [vmem:[#allocation2 + $0x48] sm:$0xff]
      %v771 = vld [vmem:[#allocation2 + $0x50] sm:$0xff]
      %v772 = vld [vmem:[#allocation2 + $0x58] sm:$0xff]
      %v773 = vld [vmem:[#allocation2 + $0x60] sm:$0xff]
      %v774 = vld [vmem:[#allocation2 + $0x68] sm:$0xff]
      %v775 = vld [vmem:[#allocation2 + $0x70] sm:$0xff]
      %v776 = vld [vmem:[#allocation2 + $0x78] sm:$0xff]
      %v777 = vld [vmem:[#allocation2 + $0x80] sm:$0xff]
      %v778 = vld [vmem:[#allocation2 + $0x88] sm:$0xff]
      %v779 = vld [vmem:[#allocation2 + $0x90] sm:$0xff]
      %v780 = vld [vmem:[#allocation2 + $0x98] sm:$0xff]
      %v781 = vld [vmem:[#allocation2 + $0xa0] sm:$0xff]
      %v782 = vld [vmem:[#allocation2 + $0xa8] sm:$0xff]
      %v783 = vld [vmem:[#allocation2 + $0xb0] sm:$0xff]
      %v784 = vld [vmem:[#allocation2 + $0xb8] sm:$0xff]
      %v785 = vld [vmem:[#allocation2 + $0xc0] sm:$0xff]
      %v786 = vld [vmem:[#allocation2 + $0xc8] sm:$0xff]
      %v787 = vld [vmem:[#allocation2 + $0xd0] sm:$0xff]
      %v788 = vld [vmem:[#allocation2 + $0xd8] sm:$0xff]
      %v789 = vld [vmem:[#allocation2 + $0xe0] sm:$0xff]
      %v790 = vld [vmem:[#allocation2 + $0xe8] sm:$0xff]
      %v791 = vld [vmem:[#allocation2 + $0xf0] sm:$0xff]
      %v792 = vld [vmem:[#allocation2 + $0xf8] sm:$0xff]
      %v793 = vld [vmem:[#allocation2 + $0x100] sm:$0xff]
      %v794 = vld [vmem:[#allocation2 + $0x108] sm:$0xff]
      %v795 = vld [vmem:[#allocation2 + $0x110] sm:$0xff]
      %v796 = vld [vmem:[#allocation2 + $0x118] sm:$0xff]
      %v797 = vld [vmem:[#allocation2 + $0x120] sm:$0xff]
      %v798 = vld [vmem:[#allocation2 + $0x128] sm:$0xff]
      %v799 = vld [vmem:[#allocation2 + $0x130] sm:$0xff]
      %v800 = vld [vmem:[#allocation2 + $0x138] sm:$0xff]
      %v801 = vld [vmem:[#allocation2 + $0x140] sm:$0xff]
      %v802 = vld [vmem:[#allocation2 + $0x148] sm:$0xff]
      %v803 = vld [vmem:[#allocation2 + $0x150] sm:$0xff]
      %v804 = vld [vmem:[#allocation2 + $0x158] sm:$0xff]
      %v805 = vld [vmem:[#allocation2 + $0x160] sm:$0xff]
      %v806 = vld [vmem:[#allocation2 + $0x168] sm:$0xff]
      %v807 = vld [vmem:[#allocation2 + $0x170] sm:$0xff]
      %v808 = vld [vmem:[#allocation2 + $0x178] sm:$0xff]
      %v809 = vld [vmem:[#allocation2 + $0x180] sm:$0xff]
      %v810 = vld [vmem:[#allocation2 + $0x188] sm:$0xff]
      %v811 = vld [vmem:[#allocation2 + $0x190] sm:$0xff]
      %v812 = vld [vmem:[#allocation2 + $0x198] sm:$0xff]
      %v813 = vld [vmem:[#allocation2 + $0x1a0] sm:$0xff]
      %v814 = vld [vmem:[#allocation2 + $0x1a8] sm:$0xff]
      %v815 = vld [vmem:[#allocation2 + $0x1b0] sm:$0xff]
      %v816 = vld [vmem:[#allocation2 + $0x1b8] sm:$0xff]
      %v829 = vunpack.c.l.b16 %v749
      %v830 = vunpack.c.l.b16 %v750
      %v831 = vunpack.c.l.b16 %v751
      %v832 = vunpack.c.l.b16 %v752
      %v833 = vunpack.c.l.b16 %v753
      %v834 = vunpack.c.l.b16 %v754
      %v835 = vunpack.c.l.b16 %v755
      %v836 = vunpack.c.l.b16 %v756
      %v837 = vunpack.c.l.b16 %v757
      %v838 = vunpack.c.l.b16 %v758
      %v839 = vunpack.c.l.b16 %v759
      %v840 = vunpack.c.l.b16 %v760
      %v841 = vpack.c.b16 %v830, %v829
      %v842 = vpack.c.b16 %v832, %v831
      %v843 = vpack.c.b16 %v834, %v833
      %v844 = vpack.c.b16 %v836, %v835
      %v845 = vpack.c.b16 %v838, %v837
      %v846 = vpack.c.b16 %v840, %v839
      %v903 = vunpack.c.l.b16 %v761
      %v904 = vunpack.c.h.b16 %v761
      %v905 = vunpack.c.l.b16 %v762
      %v906 = vunpack.c.h.b16 %v762
      %v907 = vunpack.c.l.b16 %v763
      %v908 = vunpack.c.h.b16 %v763
      %v909 = vunpack.c.l.b16 %v764
      %v910 = vunpack.c.h.b16 %v764
      %v911 = vunpack.c.l.b16 %v765
      %v912 = vunpack.c.h.b16 %v765
      %v913 = vunpack.c.l.b16 %v766
      %v914 = vunpack.c.h.b16 %v766
      %v915 = vunpack.c.l.b16 %v767
      %v916 = vunpack.c.h.b16 %v767
      %v917 = vunpack.c.l.b16 %v768
      %v918 = vunpack.c.h.b16 %v768
      %v919 = vunpack.c.l.b16 %v769
      %v920 = vunpack.c.h.b16 %v769
      %v921 = vunpack.c.l.b16 %v770
      %v922 = vunpack.c.h.b16 %v770
      %v923 = vunpack.c.l.b16 %v771
      %v924 = vunpack.c.h.b16 %v771
      %v925 = vunpack.c.l.b16 %v772
      %v926 = vunpack.c.h.b16 %v772
      %v927 = vunpack.c.l.b16 %v773
      %v928 = vunpack.c.h.b16 %v773
      %v929 = vunpack.c.l.b16 %v774
      %v930 = vunpack.c.h.b16 %v774
      %v931 = vunpack.c.l.b16 %v775
      %v932 = vunpack.c.h.b16 %v775
      %v933 = vunpack.c.l.b16 %v776
      %v934 = vunpack.c.h.b16 %v776
      %v935 = vunpack.c.l.b16 %v777
      %v936 = vunpack.c.h.b16 %v777
      %v937 = vunpack.c.l.b16 %v778
      %v938 = vunpack.c.h.b16 %v778
      %v939 = vunpack.c.l.b16 %v779
      %v940 = vunpack.c.h.b16 %v779
      %v941 = vunpack.c.l.b16 %v780
      %v942 = vunpack.c.h.b16 %v780
      %v943 = vunpack.c.l.b16 %v781
      %v944 = vunpack.c.h.b16 %v781
      %v945 = vunpack.c.l.b16 %v782
      %v946 = vunpack.c.h.b16 %v782
      %v947 = vunpack.c.l.b16 %v783
      %v948 = vunpack.c.h.b16 %v783
      %v949 = vunpack.c.l.b16 %v784
      %v950 = vunpack.c.h.b16 %v784
      %v951 = vunpack.c.l.b16 %v785
      %v952 = vunpack.c.h.b16 %v785
      %v953 = vunpack.c.l.b16 %v786
      %v954 = vunpack.c.h.b16 %v786
      %v955 = vunpack.c.l.b16 %v787
      %v956 = vunpack.c.h.b16 %v787
      %v957 = vunpack.c.l.b16 %v788
      %v958 = vunpack.c.h.b16 %v788
      %v959 = vunpack.c.l.b16 %v789
      %v960 = vunpack.c.h.b16 %v789
      %v961 = vunpack.c.l.b16 %v790
      %v962 = vunpack.c.h.b16 %v790
      %v963 = vunpack.c.l.b16 %v791
      %v964 = vunpack.c.h.b16 %v791
      %v965 = vunpack.c.l.b16 %v792
      %v966 = vunpack.c.h.b16 %v792
      %v967 = vunpack.c.l.b16 %v793
      %v968 = vunpack.c.h.b16 %v793
      %v969 = vunpack.c.l.b16 %v794
      %v970 = vunpack.c.h.b16 %v794
      %v971 = vunpack.c.l.b16 %v795
      %v972 = vunpack.c.h.b16 %v795
      %v973 = vunpack.c.l.b16 %v796
      %v974 = vunpack.c.h.b16 %v796
      %v975 = vunpack.c.l.b16 %v797
      %v976 = vunpack.c.h.b16 %v797
      %v977 = vunpack.c.l.b16 %v798
      %v978 = vunpack.c.h.b16 %v798
      %v979 = vunpack.c.l.b16 %v799
      %v980 = vunpack.c.h.b16 %v799
      %v981 = vunpack.c.l.b16 %v800
      %v982 = vunpack.c.h.b16 %v800
      %v983 = vunpack.c.l.b16 %v801
      %v984 = vunpack.c.h.b16 %v801
      %v985 = vunpack.c.l.b16 %v802
      %v986 = vunpack.c.h.b16 %v802
      %v987 = vunpack.c.l.b16 %v803
      %v988 = vunpack.c.h.b16 %v803
      %v989 = vunpack.c.l.b16 %v804
      %v990 = vunpack.c.h.b16 %v804
      %v991 = vunpack.c.l.b16 %v805
      %v992 = vunpack.c.h.b16 %v805
      %v993 = vunpack.c.l.b16 %v806
      %v994 = vunpack.c.h.b16 %v806
      %v995 = vunpack.c.l.b16 %v807
      %v996 = vunpack.c.h.b16 %v807
      %v997 = vunpack.c.l.b16 %v808
      %v998 = vunpack.c.h.b16 %v808
      %v999 = vunpack.c.l.b16 %v809
      %v1000 = vunpack.c.h.b16 %v809
      %v1001 = vunpack.c.l.b16 %v810
      %v1002 = vunpack.c.h.b16 %v810
      %v1003 = vunpack.c.l.b16 %v811
      %v1004 = vunpack.c.h.b16 %v811
      %v1005 = vunpack.c.l.b16 %v812
      %v1006 = vunpack.c.h.b16 %v812
      %v1007 = vunpack.c.l.b16 %v813
      %v1008 = vunpack.c.h.b16 %v813
      %v1009 = vunpack.c.l.b16 %v814
      %v1010 = vunpack.c.h.b16 %v814
      %v1011 = vunpack.c.l.b16 %v815
      %v1012 = vunpack.c.h.b16 %v815
      %v1013 = vunpack.c.l.b16 %v816
      %v1014 = vunpack.c.h.b16 %v816
      %v1015 = vpack.c.b16 %v917, %v903
      %v1016 = vpack.c.b16 %v918, %v904
      %v1017 = vpack.c.b16 %v919, %v905
      %v1018 = vpack.c.b16 %v920, %v906
      %v1019 = vpack.c.b16 %v921, %v907
      %v1020 = vpack.c.b16 %v922, %v908
      %v1021 = vpack.c.b16 %v923, %v909
      %v1022 = vpack.c.b16 %v924, %v910
      %v1023 = vpack.c.b16 %v925, %v911
      %v1024 = vpack.c.b16 %v926, %v912
      %v1025 = vpack.c.b16 %v927, %v913
      %v1026 = vpack.c.b16 %v928, %v914
      %v1027 = vpack.c.b16 %v929, %v915
      %v1028 = vpack.c.b16 %v930, %v916
      %v1029 = vpack.c.b16 %v945, %v931
      %v1030 = vpack.c.b16 %v946, %v932
      %v1031 = vpack.c.b16 %v947, %v933
      %v1032 = vpack.c.b16 %v948, %v934
      %v1033 = vpack.c.b16 %v949, %v935
      %v1034 = vpack.c.b16 %v950, %v936
      %v1035 = vpack.c.b16 %v951, %v937
      %v1036 = vpack.c.b16 %v952, %v938
      %v1037 = vpack.c.b16 %v953, %v939
      %v1038 = vpack.c.b16 %v954, %v940
      %v1039 = vpack.c.b16 %v955, %v941
      %v1040 = vpack.c.b16 %v956, %v942
      %v1041 = vpack.c.b16 %v957, %v943
      %v1042 = vpack.c.b16 %v958, %v944
      %v1043 = vpack.c.b16 %v973, %v959
      %v1044 = vpack.c.b16 %v974, %v960
      %v1045 = vpack.c.b16 %v975, %v961
      %v1046 = vpack.c.b16 %v976, %v962
      %v1047 = vpack.c.b16 %v977, %v963
      %v1048 = vpack.c.b16 %v978, %v964
      %v1049 = vpack.c.b16 %v979, %v965
      %v1050 = vpack.c.b16 %v980, %v966
      %v1051 = vpack.c.b16 %v981, %v967
      %v1052 = vpack.c.b16 %v982, %v968
      %v1053 = vpack.c.b16 %v983, %v969
      %v1054 = vpack.c.b16 %v984, %v970
      %v1055 = vpack.c.b16 %v985, %v971
      %v1056 = vpack.c.b16 %v986, %v972
      %v1057 = vpack.c.b16 %v1001, %v987
      %v1058 = vpack.c.b16 %v1002, %v988
      %v1059 = vpack.c.b16 %v1003, %v989
      %v1060 = vpack.c.b16 %v1004, %v990
      %v1061 = vpack.c.b16 %v1005, %v991
      %v1062 = vpack.c.b16 %v1006, %v992
      %v1063 = vpack.c.b16 %v1007, %v993
      %v1064 = vpack.c.b16 %v1008, %v994
      %v1065 = vpack.c.b16 %v1009, %v995
      %v1066 = vpack.c.b16 %v1010, %v996
      %v1067 = vpack.c.b16 %v1011, %v997
      %v1068 = vpack.c.b16 %v1012, %v998
      %v1069 = vpack.c.b16 %v1013, %v999
      %v1070 = vpack.c.b16 %v1014, %v1000
      %vm1127 = vcmask 523264
      %v1129 = vsel %vm1127, %v841, 0
      %v1132 = vsel %vm1127, %v842, 0
      %v1135 = vsel %vm1127, %v843, 0
      %v1138 = vsel %vm1127, %v844, 0
      %v1141 = vsel %vm1127, %v845, 0
      %v1144 = vsel %vm1127, %v846, 0
      %1146 = vmatpush.bf16.msra.mxu0 0
      %1147 = vmatpush.bf16.msra.mxu0 0
      %1148 = vmatpush.bf16.msra.mxu0 0
      %1149 = vmatpush.bf16.msra.mxu0 0
      %1150 = vmatpush.bf16.msra.mxu0 %v1057
      %1151 = vmatpush.bf16.msra.mxu0 %v1043
      %1152 = vmatpush.bf16.msra.mxu0 %v1029
      %1153 = vmatpush.bf16.msra.mxu0 %v1015
      %1154 = vmatmul.bf16.gmra.mxu0 %v1129
      %v1155 = vpop.f32.mrf.mxu0
      %v1156 = vadd.f32 0.0, %v1155
      %v1157 = vpop.f32.mrf.mxu0
      %v1158 = vadd.f32 0.0, %v1157
      %1159 = vmatmul.bf16.gmra.mxu0 %v1132
      %v1160 = vpop.f32.mrf.mxu0
      %v1161 = vadd.f32 0.0, %v1160
      %v1162 = vpop.f32.mrf.mxu0
      %v1163 = vadd.f32 0.0, %v1162
      %1164 = vmatmul.bf16.gmra.mxu0 %v1135
      %v1165 = vpop.f32.mrf.mxu0
      %v1166 = vadd.f32 0.0, %v1165
      %v1167 = vpop.f32.mrf.mxu0
      %v1168 = vadd.f32 0.0, %v1167
      %1169 = vmatmul.bf16.gmra.mxu0 %v1138
      %v1170 = vpop.f32.mrf.mxu0
      %v1171 = vadd.f32 0.0, %v1170
      %v1172 = vpop.f32.mrf.mxu0
      %v1173 = vadd.f32 0.0, %v1172
      %1174 = vmatmul.bf16.gmra.mxu0 %v1141
      %v1175 = vpop.f32.mrf.mxu0
      %v1176 = vadd.f32 0.0, %v1175
      %v1177 = vpop.f32.mrf.mxu0
      %v1178 = vadd.f32 0.0, %v1177
      %1179 = vmatmul.bf16.gmra.mxu0 %v1144
      %v1180 = vpop.f32.mrf.mxu0
      %v1181 = vadd.f32 0.0, %v1180
      %v1182 = vpop.f32.mrf.mxu0
      %v1183 = vadd.f32 0.0, %v1182
      %1184 = vdwg.mxu0
      %1185 = vmatpush.bf16.msra.mxu0 0
      %1186 = vmatpush.bf16.msra.mxu0 0
      %1187 = vmatpush.bf16.msra.mxu0 0
      %1188 = vmatpush.bf16.msra.mxu0 0
      %1189 = vmatpush.bf16.msra.mxu0 %v1058
      %1190 = vmatpush.bf16.msra.mxu0 %v1044
      %1191 = vmatpush.bf16.msra.mxu0 %v1030
      %1192 = vmatpush.bf16.msra.mxu0 %v1016
      %1193 = vmatmul.bf16.gmra.mxu0 %v1129
      %v1194 = vpop.f32.mrf.mxu0
      %v1195 = vadd.f32 0.0, %v1194
      %v1196 = vpop.f32.mrf.mxu0
      %v1197 = vadd.f32 0.0, %v1196
      %1198 = vmatmul.bf16.gmra.mxu0 %v1132
      %v1199 = vpop.f32.mrf.mxu0
      %v1200 = vadd.f32 0.0, %v1199
      %v1201 = vpop.f32.mrf.mxu0
      %v1202 = vadd.f32 0.0, %v1201
      %1203 = vmatmul.bf16.gmra.mxu0 %v1135
      %v1204 = vpop.f32.mrf.mxu0
      %v1205 = vadd.f32 0.0, %v1204
      %v1206 = vpop.f32.mrf.mxu0
      %v1207 = vadd.f32 0.0, %v1206
      %1208 = vmatmul.bf16.gmra.mxu0 %v1138
      %v1209 = vpop.f32.mrf.mxu0
      %v1210 = vadd.f32 0.0, %v1209
      %v1211 = vpop.f32.mrf.mxu0
      %v1212 = vadd.f32 0.0, %v1211
      %1213 = vmatmul.bf16.gmra.mxu0 %v1141
      %v1214 = vpop.f32.mrf.mxu0
      %v1215 = vadd.f32 0.0, %v1214
      %v1216 = vpop.f32.mrf.mxu0
      %v1217 = vadd.f32 0.0, %v1216
      %1218 = vmatmul.bf16.gmra.mxu0 %v1144
      %v1219 = vpop.f32.mrf.mxu0
      %v1220 = vadd.f32 0.0, %v1219
      %v1221 = vpop.f32.mrf.mxu0
      %v1222 = vadd.f32 0.0, %v1221
      %1223 = vdwg.mxu0
      %1224 = vmatpush.bf16.msra.mxu0 0
      %1225 = vmatpush.bf16.msra.mxu0 0
      %1226 = vmatpush.bf16.msra.mxu0 0
      %1227 = vmatpush.bf16.msra.mxu0 0
      %1228 = vmatpush.bf16.msra.mxu0 %v1059
      %1229 = vmatpush.bf16.msra.mxu0 %v1045
      %1230 = vmatpush.bf16.msra.mxu0 %v1031
      %1231 = vmatpush.bf16.msra.mxu0 %v1017
      %1232 = vmatmul.bf16.gmra.mxu0 %v1129
      %v1233 = vpop.f32.mrf.mxu0
      %v1234 = vadd.f32 0.0, %v1233
      %v1235 = vpop.f32.mrf.mxu0
      %v1236 = vadd.f32 0.0, %v1235
      %1237 = vmatmul.bf16.gmra.mxu0 %v1132
      %v1238 = vpop.f32.mrf.mxu0
      %v1239 = vadd.f32 0.0, %v1238
      %v1240 = vpop.f32.mrf.mxu0
      %v1241 = vadd.f32 0.0, %v1240
      %1242 = vmatmul.bf16.gmra.mxu0 %v1135
      %v1243 = vpop.f32.mrf.mxu0
      %v1244 = vadd.f32 0.0, %v1243
      %v1245 = vpop.f32.mrf.mxu0
      %v1246 = vadd.f32 0.0, %v1245
      %1247 = vmatmul.bf16.gmra.mxu0 %v1138
      %v1248 = vpop.f32.mrf.mxu0
      %v1249 = vadd.f32 0.0, %v1248
      %v1250 = vpop.f32.mrf.mxu0
      %v1251 = vadd.f32 0.0, %v1250
      %1252 = vmatmul.bf16.gmra.mxu0 %v1141
      %v1253 = vpop.f32.mrf.mxu0
      %v1254 = vadd.f32 0.0, %v1253
      %v1255 = vpop.f32.mrf.mxu0
      %v1256 = vadd.f32 0.0, %v1255
      %1257 = vmatmul.bf16.gmra.mxu0 %v1144
      %v1258 = vpop.f32.mrf.mxu0
      %v1259 = vadd.f32 0.0, %v1258
      %v1260 = vpop.f32.mrf.mxu0
      %v1261 = vadd.f32 0.0, %v1260
      %1262 = vdwg.mxu0
      %1263 = vmatpush.bf16.msra.mxu0 0
      %1264 = vmatpush.bf16.msra.mxu0 0
      %1265 = vmatpush.bf16.msra.mxu0 0
      %1266 = vmatpush.bf16.msra.mxu0 0
      %1267 = vmatpush.bf16.msra.mxu0 %v1060
      %1268 = vmatpush.bf16.msra.mxu0 %v1046
      %1269 = vmatpush.bf16.msra.mxu0 %v1032
      %1270 = vmatpush.bf16.msra.mxu0 %v1018
      %1271 = vmatmul.bf16.gmra.mxu0 %v1129
      %v1272 = vpop.f32.mrf.mxu0
      %v1273 = vadd.f32 0.0, %v1272
      %v1274 = vpop.f32.mrf.mxu0
      %v1275 = vadd.f32 0.0, %v1274
      %1276 = vmatmul.bf16.gmra.mxu0 %v1132
      %v1277 = vpop.f32.mrf.mxu0
      %v1278 = vadd.f32 0.0, %v1277
      %v1279 = vpop.f32.mrf.mxu0
      %v1280 = vadd.f32 0.0, %v1279
      %1281 = vmatmul.bf16.gmra.mxu0 %v1135
      %v1282 = vpop.f32.mrf.mxu0
      %v1283 = vadd.f32 0.0, %v1282
      %v1284 = vpop.f32.mrf.mxu0
      %v1285 = vadd.f32 0.0, %v1284
      %1286 = vmatmul.bf16.gmra.mxu0 %v1138
      %v1287 = vpop.f32.mrf.mxu0
      %v1288 = vadd.f32 0.0, %v1287
      %v1289 = vpop.f32.mrf.mxu0
      %v1290 = vadd.f32 0.0, %v1289
      %1291 = vmatmul.bf16.gmra.mxu0 %v1141
      %v1292 = vpop.f32.mrf.mxu0
      %v1293 = vadd.f32 0.0, %v1292
      %v1294 = vpop.f32.mrf.mxu0
      %v1295 = vadd.f32 0.0, %v1294
      %1296 = vmatmul.bf16.gmra.mxu0 %v1144
      %v1297 = vpop.f32.mrf.mxu0
      %v1298 = vadd.f32 0.0, %v1297
      %v1299 = vpop.f32.mrf.mxu0
      %v1300 = vadd.f32 0.0, %v1299
      %1301 = vdwg.mxu0
      %1302 = vmatpush.bf16.msra.mxu0 0
      %1303 = vmatpush.bf16.msra.mxu0 0
      %1304 = vmatpush.bf16.msra.mxu0 0
      %1305 = vmatpush.bf16.msra.mxu0 0
      %1306 = vmatpush.bf16.msra.mxu0 %v1061
      %1307 = vmatpush.bf16.msra.mxu0 %v1047
      %1308 = vmatpush.bf16.msra.mxu0 %v1033
      %1309 = vmatpush.bf16.msra.mxu0 %v1019
      %1310 = vmatmul.bf16.gmra.mxu0 %v1129
      %v1311 = vpop.f32.mrf.mxu0
      %v1312 = vadd.f32 0.0, %v1311
      %v1313 = vpop.f32.mrf.mxu0
      %v1314 = vadd.f32 0.0, %v1313
      %1315 = vmatmul.bf16.gmra.mxu0 %v1132
      %v1316 = vpop.f32.mrf.mxu0
      %v1317 = vadd.f32 0.0, %v1316
      %v1318 = vpop.f32.mrf.mxu0
      %v1319 = vadd.f32 0.0, %v1318
      %1320 = vmatmul.bf16.gmra.mxu0 %v1135
      %v1321 = vpop.f32.mrf.mxu0
      %v1322 = vadd.f32 0.0, %v1321
      %v1323 = vpop.f32.mrf.mxu0
      %v1324 = vadd.f32 0.0, %v1323
      %1325 = vmatmul.bf16.gmra.mxu0 %v1138
      %v1326 = vpop.f32.mrf.mxu0
      %v1327 = vadd.f32 0.0, %v1326
      %v1328 = vpop.f32.mrf.mxu0
      %v1329 = vadd.f32 0.0, %v1328
      %1330 = vmatmul.bf16.gmra.mxu0 %v1141
      %v1331 = vpop.f32.mrf.mxu0
      %v1332 = vadd.f32 0.0, %v1331
      %v1333 = vpop.f32.mrf.mxu0
      %v1334 = vadd.f32 0.0, %v1333
      %1335 = vmatmul.bf16.gmra.mxu0 %v1144
      %v1336 = vpop.f32.mrf.mxu0
      %v1337 = vadd.f32 0.0, %v1336
      %v1338 = vpop.f32.mrf.mxu0
      %v1339 = vadd.f32 0.0, %v1338
      %1340 = vdwg.mxu0
      %1341 = vmatpush.bf16.msra.mxu0 0
      %1342 = vmatpush.bf16.msra.mxu0 0
      %1343 = vmatpush.bf16.msra.mxu0 0
      %1344 = vmatpush.bf16.msra.mxu0 0
      %1345 = vmatpush.bf16.msra.mxu0 %v1062
      %1346 = vmatpush.bf16.msra.mxu0 %v1048
      %1347 = vmatpush.bf16.msra.mxu0 %v1034
      %1348 = vmatpush.bf16.msra.mxu0 %v1020
      %1349 = vmatmul.bf16.gmra.mxu0 %v1129
      %v1350 = vpop.f32.mrf.mxu0
      %v1351 = vadd.f32 0.0, %v1350
      %v1352 = vpop.f32.mrf.mxu0
      %v1353 = vadd.f32 0.0, %v1352
      %1354 = vmatmul.bf16.gmra.mxu0 %v1132
      %v1355 = vpop.f32.mrf.mxu0
      %v1356 = vadd.f32 0.0, %v1355
      %v1357 = vpop.f32.mrf.mxu0
      %v1358 = vadd.f32 0.0, %v1357
      %1359 = vmatmul.bf16.gmra.mxu0 %v1135
      %v1360 = vpop.f32.mrf.mxu0
      %v1361 = vadd.f32 0.0, %v1360
      %v1362 = vpop.f32.mrf.mxu0
      %v1363 = vadd.f32 0.0, %v1362
      %1364 = vmatmul.bf16.gmra.mxu0 %v1138
      %v1365 = vpop.f32.mrf.mxu0
      %v1366 = vadd.f32 0.0, %v1365
      %v1367 = vpop.f32.mrf.mxu0
      %v1368 = vadd.f32 0.0, %v1367
      %1369 = vmatmul.bf16.gmra.mxu0 %v1141
      %v1370 = vpop.f32.mrf.mxu0
      %v1371 = vadd.f32 0.0, %v1370
      %v1372 = vpop.f32.mrf.mxu0
      %v1373 = vadd.f32 0.0, %v1372
      %1374 = vmatmul.bf16.gmra.mxu0 %v1144
      %v1375 = vpop.f32.mrf.mxu0
      %v1376 = vadd.f32 0.0, %v1375
      %v1377 = vpop.f32.mrf.mxu0
      %v1378 = vadd.f32 0.0, %v1377
      %1379 = vdwg.mxu0
      %1380 = vmatpush.bf16.msra.mxu0 0
      %1381 = vmatpush.bf16.msra.mxu0 0
      %1382 = vmatpush.bf16.msra.mxu0 0
      %1383 = vmatpush.bf16.msra.mxu0 0
      %1384 = vmatpush.bf16.msra.mxu0 %v1063
      %1385 = vmatpush.bf16.msra.mxu0 %v1049
      %1386 = vmatpush.bf16.msra.mxu0 %v1035
      %1387 = vmatpush.bf16.msra.mxu0 %v1021
      %1388 = vmatmul.bf16.gmra.mxu0 %v1129
      %v1389 = vpop.f32.mrf.mxu0
      %v1390 = vadd.f32 0.0, %v1389
      %v1391 = vpop.f32.mrf.mxu0
      %v1392 = vadd.f32 0.0, %v1391
      %1393 = vmatmul.bf16.gmra.mxu0 %v1132
      %v1394 = vpop.f32.mrf.mxu0
      %v1395 = vadd.f32 0.0, %v1394
      %v1396 = vpop.f32.mrf.mxu0
      %v1397 = vadd.f32 0.0, %v1396
      %1398 = vmatmul.bf16.gmra.mxu0 %v1135
      %v1399 = vpop.f32.mrf.mxu0
      %v1400 = vadd.f32 0.0, %v1399
      %v1401 = vpop.f32.mrf.mxu0
      %v1402 = vadd.f32 0.0, %v1401
      %1403 = vmatmul.bf16.gmra.mxu0 %v1138
      %v1404 = vpop.f32.mrf.mxu0
      %v1405 = vadd.f32 0.0, %v1404
      %v1406 = vpop.f32.mrf.mxu0
      %v1407 = vadd.f32 0.0, %v1406
      %1408 = vmatmul.bf16.gmra.mxu0 %v1141
      %v1409 = vpop.f32.mrf.mxu0
      %v1410 = vadd.f32 0.0, %v1409
      %v1411 = vpop.f32.mrf.mxu0
      %v1412 = vadd.f32 0.0, %v1411
      %1413 = vmatmul.bf16.gmra.mxu0 %v1144
      %v1414 = vpop.f32.mrf.mxu0
      %v1415 = vadd.f32 0.0, %v1414
      %v1416 = vpop.f32.mrf.mxu0
      %v1417 = vadd.f32 0.0, %v1416
      %1418 = vdwg.mxu0
      %1419 = vmatpush.bf16.msra.mxu0 0
      %1420 = vmatpush.bf16.msra.mxu0 0
      %1421 = vmatpush.bf16.msra.mxu0 0
      %1422 = vmatpush.bf16.msra.mxu0 0
      %1423 = vmatpush.bf16.msra.mxu0 %v1064
      %1424 = vmatpush.bf16.msra.mxu0 %v1050
      %1425 = vmatpush.bf16.msra.mxu0 %v1036
      %1426 = vmatpush.bf16.msra.mxu0 %v1022
      %1427 = vmatmul.bf16.gmra.mxu0 %v1129
      %v1428 = vpop.f32.mrf.mxu0
      %v1429 = vadd.f32 0.0, %v1428
      %v1430 = vpop.f32.mrf.mxu0
      %v1431 = vadd.f32 0.0, %v1430
      %1432 = vmatmul.bf16.gmra.mxu0 %v1132
      %v1433 = vpop.f32.mrf.mxu0
      %v1434 = vadd.f32 0.0, %v1433
      %v1435 = vpop.f32.mrf.mxu0
      %v1436 = vadd.f32 0.0, %v1435
      %1437 = vmatmul.bf16.gmra.mxu0 %v1135
      %v1438 = vpop.f32.mrf.mxu0
      %v1439 = vadd.f32 0.0, %v1438
      %v1440 = vpop.f32.mrf.mxu0
      %v1441 = vadd.f32 0.0, %v1440
      %1442 = vmatmul.bf16.gmra.mxu0 %v1138
      %v1443 = vpop.f32.mrf.mxu0
      %v1444 = vadd.f32 0.0, %v1443
      %v1445 = vpop.f32.mrf.mxu0
      %v1446 = vadd.f32 0.0, %v1445
      %1447 = vmatmul.bf16.gmra.mxu0 %v1141
      %v1448 = vpop.f32.mrf.mxu0
      %v1449 = vadd.f32 0.0, %v1448
      %v1450 = vpop.f32.mrf.mxu0
      %v1451 = vadd.f32 0.0, %v1450
      %1452 = vmatmul.bf16.gmra.mxu0 %v1144
      %v1453 = vpop.f32.mrf.mxu0
      %v1454 = vadd.f32 0.0, %v1453
      %v1455 = vpop.f32.mrf.mxu0
      %v1456 = vadd.f32 0.0, %v1455
      %1457 = vdwg.mxu0
      %1458 = vmatpush.bf16.msra.mxu0 0
      %1459 = vmatpush.bf16.msra.mxu0 0
      %1460 = vmatpush.bf16.msra.mxu0 0
      %1461 = vmatpush.bf16.msra.mxu0 0
      %1462 = vmatpush.bf16.msra.mxu0 %v1065
      %1463 = vmatpush.bf16.msra.mxu0 %v1051
      %1464 = vmatpush.bf16.msra.mxu0 %v1037
      %1465 = vmatpush.bf16.msra.mxu0 %v1023
      %1466 = vmatmul.bf16.gmra.mxu0 %v1129
      %v1467 = vpop.f32.mrf.mxu0
      %v1468 = vadd.f32 0.0, %v1467
      %v1469 = vpop.f32.mrf.mxu0
      %v1470 = vadd.f32 0.0, %v1469
      %1471 = vmatmul.bf16.gmra.mxu0 %v1132
      %v1472 = vpop.f32.mrf.mxu0
      %v1473 = vadd.f32 0.0, %v1472
      %v1474 = vpop.f32.mrf.mxu0
      %v1475 = vadd.f32 0.0, %v1474
      %1476 = vmatmul.bf16.gmra.mxu0 %v1135
      %v1477 = vpop.f32.mrf.mxu0
      %v1478 = vadd.f32 0.0, %v1477
      %v1479 = vpop.f32.mrf.mxu0
      %v1480 = vadd.f32 0.0, %v1479
      %1481 = vmatmul.bf16.gmra.mxu0 %v1138
      %v1482 = vpop.f32.mrf.mxu0
      %v1483 = vadd.f32 0.0, %v1482
      %v1484 = vpop.f32.mrf.mxu0
      %v1485 = vadd.f32 0.0, %v1484
      %1486 = vmatmul.bf16.gmra.mxu0 %v1141
      %v1487 = vpop.f32.mrf.mxu0
      %v1488 = vadd.f32 0.0, %v1487
      %v1489 = vpop.f32.mrf.mxu0
      %v1490 = vadd.f32 0.0, %v1489
      %1491 = vmatmul.bf16.gmra.mxu0 %v1144
      %v1492 = vpop.f32.mrf.mxu0
      %v1493 = vadd.f32 0.0, %v1492
      %v1494 = vpop.f32.mrf.mxu0
      %v1495 = vadd.f32 0.0, %v1494
      %1496 = vdwg.mxu0
      %1497 = vmatpush.bf16.msra.mxu0 0
      %1498 = vmatpush.bf16.msra.mxu0 0
      %1499 = vmatpush.bf16.msra.mxu0 0
      %1500 = vmatpush.bf16.msra.mxu0 0
      %1501 = vmatpush.bf16.msra.mxu0 %v1066
      %1502 = vmatpush.bf16.msra.mxu0 %v1052
      %1503 = vmatpush.bf16.msra.mxu0 %v1038
      %1504 = vmatpush.bf16.msra.mxu0 %v1024
      %1505 = vmatmul.bf16.gmra.mxu0 %v1129
      %v1506 = vpop.f32.mrf.mxu0
      %v1507 = vadd.f32 0.0, %v1506
      %v1508 = vpop.f32.mrf.mxu0
      %v1509 = vadd.f32 0.0, %v1508
      %1510 = vmatmul.bf16.gmra.mxu0 %v1132
      %v1511 = vpop.f32.mrf.mxu0
      %v1512 = vadd.f32 0.0, %v1511
      %v1513 = vpop.f32.mrf.mxu0
      %v1514 = vadd.f32 0.0, %v1513
      %1515 = vmatmul.bf16.gmra.mxu0 %v1135
      %v1516 = vpop.f32.mrf.mxu0
      %v1517 = vadd.f32 0.0, %v1516
      %v1518 = vpop.f32.mrf.mxu0
      %v1519 = vadd.f32 0.0, %v1518
      %1520 = vmatmul.bf16.gmra.mxu0 %v1138
      %v1521 = vpop.f32.mrf.mxu0
      %v1522 = vadd.f32 0.0, %v1521
      %v1523 = vpop.f32.mrf.mxu0
      %v1524 = vadd.f32 0.0, %v1523
      %1525 = vmatmul.bf16.gmra.mxu0 %v1141
      %v1526 = vpop.f32.mrf.mxu0
      %v1527 = vadd.f32 0.0, %v1526
      %v1528 = vpop.f32.mrf.mxu0
      %v1529 = vadd.f32 0.0, %v1528
      %1530 = vmatmul.bf16.gmra.mxu0 %v1144
      %v1531 = vpop.f32.mrf.mxu0
      %v1532 = vadd.f32 0.0, %v1531
      %v1533 = vpop.f32.mrf.mxu0
      %v1534 = vadd.f32 0.0, %v1533
      %1535 = vdwg.mxu0
      %1536 = vmatpush.bf16.msra.mxu0 0
      %1537 = vmatpush.bf16.msra.mxu0 0
      %1538 = vmatpush.bf16.msra.mxu0 0
      %1539 = vmatpush.bf16.msra.mxu0 0
      %1540 = vmatpush.bf16.msra.mxu0 %v1067
      %1541 = vmatpush.bf16.msra.mxu0 %v1053
      %1542 = vmatpush.bf16.msra.mxu0 %v1039
      %1543 = vmatpush.bf16.msra.mxu0 %v1025
      %1544 = vmatmul.bf16.gmra.mxu0 %v1129
      %v1545 = vpop.f32.mrf.mxu0
      %v1546 = vadd.f32 0.0, %v1545
      %v1547 = vpop.f32.mrf.mxu0
      %v1548 = vadd.f32 0.0, %v1547
      %1549 = vmatmul.bf16.gmra.mxu0 %v1132
      %v1550 = vpop.f32.mrf.mxu0
      %v1551 = vadd.f32 0.0, %v1550
      %v1552 = vpop.f32.mrf.mxu0
      %v1553 = vadd.f32 0.0, %v1552
      %1554 = vmatmul.bf16.gmra.mxu0 %v1135
      %v1555 = vpop.f32.mrf.mxu0
      %v1556 = vadd.f32 0.0, %v1555
      %v1557 = vpop.f32.mrf.mxu0
      %v1558 = vadd.f32 0.0, %v1557
      %1559 = vmatmul.bf16.gmra.mxu0 %v1138
      %v1560 = vpop.f32.mrf.mxu0
      %v1561 = vadd.f32 0.0, %v1560
      %v1562 = vpop.f32.mrf.mxu0
      %v1563 = vadd.f32 0.0, %v1562
      %1564 = vmatmul.bf16.gmra.mxu0 %v1141
      %v1565 = vpop.f32.mrf.mxu0
      %v1566 = vadd.f32 0.0, %v1565
      %v1567 = vpop.f32.mrf.mxu0
      %v1568 = vadd.f32 0.0, %v1567
      %1569 = vmatmul.bf16.gmra.mxu0 %v1144
      %v1570 = vpop.f32.mrf.mxu0
      %v1571 = vadd.f32 0.0, %v1570
      %v1572 = vpop.f32.mrf.mxu0
      %v1573 = vadd.f32 0.0, %v1572
      %1574 = vdwg.mxu0
      %1575 = vmatpush.bf16.msra.mxu0 0
      %1576 = vmatpush.bf16.msra.mxu0 0
      %1577 = vmatpush.bf16.msra.mxu0 0
      %1578 = vmatpush.bf16.msra.mxu0 0
      %1579 = vmatpush.bf16.msra.mxu0 %v1068
      %1580 = vmatpush.bf16.msra.mxu0 %v1054
      %1581 = vmatpush.bf16.msra.mxu0 %v1040
      %1582 = vmatpush.bf16.msra.mxu0 %v1026
      %1583 = vmatmul.bf16.gmra.mxu0 %v1129
      %v1584 = vpop.f32.mrf.mxu0
      %v1585 = vadd.f32 0.0, %v1584
      %v1586 = vpop.f32.mrf.mxu0
      %v1587 = vadd.f32 0.0, %v1586
      %1588 = vmatmul.bf16.gmra.mxu0 %v1132
      %v1589 = vpop.f32.mrf.mxu0
      %v1590 = vadd.f32 0.0, %v1589
      %v1591 = vpop.f32.mrf.mxu0
      %v1592 = vadd.f32 0.0, %v1591
      %1593 = vmatmul.bf16.gmra.mxu0 %v1135
      %v1594 = vpop.f32.mrf.mxu0
      %v1595 = vadd.f32 0.0, %v1594
      %v1596 = vpop.f32.mrf.mxu0
      %v1597 = vadd.f32 0.0, %v1596
      %1598 = vmatmul.bf16.gmra.mxu0 %v1138
      %v1599 = vpop.f32.mrf.mxu0
      %v1600 = vadd.f32 0.0, %v1599
      %v1601 = vpop.f32.mrf.mxu0
      %v1602 = vadd.f32 0.0, %v1601
      %1603 = vmatmul.bf16.gmra.mxu0 %v1141
      %v1604 = vpop.f32.mrf.mxu0
      %v1605 = vadd.f32 0.0, %v1604
      %v1606 = vpop.f32.mrf.mxu0
      %v1607 = vadd.f32 0.0, %v1606
      %1608 = vmatmul.bf16.gmra.mxu0 %v1144
      %v1609 = vpop.f32.mrf.mxu0
      %v1610 = vadd.f32 0.0, %v1609
      %v1611 = vpop.f32.mrf.mxu0
      %v1612 = vadd.f32 0.0, %v1611
      %1613 = vdwg.mxu0
      %1614 = vmatpush.bf16.msra.mxu0 0
      %1615 = vmatpush.bf16.msra.mxu0 0
      %1616 = vmatpush.bf16.msra.mxu0 0
      %1617 = vmatpush.bf16.msra.mxu0 0
      %1618 = vmatpush.bf16.msra.mxu0 %v1069
      %1619 = vmatpush.bf16.msra.mxu0 %v1055
      %1620 = vmatpush.bf16.msra.mxu0 %v1041
      %1621 = vmatpush.bf16.msra.mxu0 %v1027
      %1622 = vmatmul.bf16.gmra.mxu0 %v1129
      %v1623 = vpop.f32.mrf.mxu0
      %v1624 = vadd.f32 0.0, %v1623
      %v1625 = vpop.f32.mrf.mxu0
      %v1626 = vadd.f32 0.0, %v1625
      %1627 = vmatmul.bf16.gmra.mxu0 %v1132
      %v1628 = vpop.f32.mrf.mxu0
      %v1629 = vadd.f32 0.0, %v1628
      %v1630 = vpop.f32.mrf.mxu0
      %v1631 = vadd.f32 0.0, %v1630
      %1632 = vmatmul.bf16.gmra.mxu0 %v1135
      %v1633 = vpop.f32.mrf.mxu0
      %v1634 = vadd.f32 0.0, %v1633
      %v1635 = vpop.f32.mrf.mxu0
      %v1636 = vadd.f32 0.0, %v1635
      %1637 = vmatmul.bf16.gmra.mxu0 %v1138
      %v1638 = vpop.f32.mrf.mxu0
      %v1639 = vadd.f32 0.0, %v1638
      %v1640 = vpop.f32.mrf.mxu0
      %v1641 = vadd.f32 0.0, %v1640
      %1642 = vmatmul.bf16.gmra.mxu0 %v1141
      %v1643 = vpop.f32.mrf.mxu0
      %v1644 = vadd.f32 0.0, %v1643
      %v1645 = vpop.f32.mrf.mxu0
      %v1646 = vadd.f32 0.0, %v1645
      %1647 = vmatmul.bf16.gmra.mxu0 %v1144
      %v1648 = vpop.f32.mrf.mxu0
      %v1649 = vadd.f32 0.0, %v1648
      %v1650 = vpop.f32.mrf.mxu0
      %v1651 = vadd.f32 0.0, %v1650
      %1652 = vdwg.mxu0
      %1653 = vmatpush.bf16.msra.mxu0 0
      %1654 = vmatpush.bf16.msra.mxu0 0
      %1655 = vmatpush.bf16.msra.mxu0 0
      %1656 = vmatpush.bf16.msra.mxu0 0
      %1657 = vmatpush.bf16.msra.mxu0 %v1070
      %1658 = vmatpush.bf16.msra.mxu0 %v1056
      %1659 = vmatpush.bf16.msra.mxu0 %v1042
      %1660 = vmatpush.bf16.msra.mxu0 %v1028
      %1661 = vmatmul.bf16.gmra.mxu0 %v1129
      %v1662 = vpop.f32.mrf.mxu0
      %v1663 = vadd.f32 0.0, %v1662
      %v1664 = vpop.f32.mrf.mxu0
      %v1665 = vadd.f32 0.0, %v1664
      %1666 = vmatmul.bf16.gmra.mxu0 %v1132
      %v1667 = vpop.f32.mrf.mxu0
      %v1668 = vadd.f32 0.0, %v1667
      %v1669 = vpop.f32.mrf.mxu0
      %v1670 = vadd.f32 0.0, %v1669
      %1671 = vmatmul.bf16.gmra.mxu0 %v1135
      %v1672 = vpop.f32.mrf.mxu0
      %v1673 = vadd.f32 0.0, %v1672
      %v1674 = vpop.f32.mrf.mxu0
      %v1675 = vadd.f32 0.0, %v1674
      %1676 = vmatmul.bf16.gmra.mxu0 %v1138
      %v1677 = vpop.f32.mrf.mxu0
      %v1678 = vadd.f32 0.0, %v1677
      %v1679 = vpop.f32.mrf.mxu0
      %v1680 = vadd.f32 0.0, %v1679
      %1681 = vmatmul.bf16.gmra.mxu0 %v1141
      %v1682 = vpop.f32.mrf.mxu0
      %v1683 = vadd.f32 0.0, %v1682
      %v1684 = vpop.f32.mrf.mxu0
      %v1685 = vadd.f32 0.0, %v1684
      %1686 = vmatmul.bf16.gmra.mxu0 %v1144
      %v1687 = vpop.f32.mrf.mxu0
      %v1688 = vadd.f32 0.0, %v1687
      %v1689 = vpop.f32.mrf.mxu0
      %v1690 = vadd.f32 0.0, %v1689
      %1691 = vdwg.mxu0
      %v1692 = vmax.f32 %v1156, %v1163
      %v1693 = vmax.f32 %v1195, %v1202
      %v1694 = vmax.f32 %v1234, %v1241
      %v1695 = vmax.f32 %v1273, %v1280
      %v1696 = vmax.f32 %v1312, %v1319
      %v1697 = vmax.f32 %v1351, %v1358
      %v1698 = vmax.f32 %v1390, %v1397
      %v1699 = vmax.f32 %v1429, %v1436
      %v1700 = vmax.f32 %v1468, %v1475
      %v1701 = vmax.f32 %v1507, %v1514
      %v1702 = vmax.f32 %v1546, %v1553
      %v1703 = vmax.f32 %v1585, %v1592
      %v1704 = vmax.f32 %v1624, %v1631
      %v1705 = vmax.f32 %v1663, %v1670
      %v1706 = vmax.f32 %v1158, %v1166
      %v1707 = vmax.f32 %v1197, %v1205
      %v1708 = vmax.f32 %v1236, %v1244
      %v1709 = vmax.f32 %v1275, %v1283
      %v1710 = vmax.f32 %v1314, %v1322
      %v1711 = vmax.f32 %v1353, %v1361
      %v1712 = vmax.f32 %v1392, %v1400
      %v1713 = vmax.f32 %v1431, %v1439
      %v1714 = vmax.f32 %v1470, %v1478
      %v1715 = vmax.f32 %v1509, %v1517
      %v1716 = vmax.f32 %v1548, %v1556
      %v1717 = vmax.f32 %v1587, %v1595
      %v1718 = vmax.f32 %v1626, %v1634
      %v1719 = vmax.f32 %v1665, %v1673
      %v1720 = vmax.f32 %v1161, %v1168
      %v1721 = vmax.f32 %v1200, %v1207
      %v1722 = vmax.f32 %v1239, %v1246
      %v1723 = vmax.f32 %v1278, %v1285
      %v1724 = vmax.f32 %v1317, %v1324
      %v1725 = vmax.f32 %v1356, %v1363
      %v1726 = vmax.f32 %v1395, %v1402
      %v1727 = vmax.f32 %v1434, %v1441
      %v1728 = vmax.f32 %v1473, %v1480
      %v1729 = vmax.f32 %v1512, %v1519
      %v1730 = vmax.f32 %v1551, %v1558
      %v1731 = vmax.f32 %v1590, %v1597
      %v1732 = vmax.f32 %v1629, %v1636
      %v1733 = vmax.f32 %v1668, %v1675
      %v1734 = vmax.f32 %v1171, %v1178
      %v1735 = vmax.f32 %v1210, %v1217
      %v1736 = vmax.f32 %v1249, %v1256
      %v1737 = vmax.f32 %v1288, %v1295
      %v1738 = vmax.f32 %v1327, %v1334
      %v1739 = vmax.f32 %v1366, %v1373
      %v1740 = vmax.f32 %v1405, %v1412
      %v1741 = vmax.f32 %v1444, %v1451
      %v1742 = vmax.f32 %v1483, %v1490
      %v1743 = vmax.f32 %v1522, %v1529
      %v1744 = vmax.f32 %v1561, %v1568
      %v1745 = vmax.f32 %v1600, %v1607
      %v1746 = vmax.f32 %v1639, %v1646
      %v1747 = vmax.f32 %v1678, %v1685
      %v1748 = vmax.f32 %v1173, %v1181
      %v1749 = vmax.f32 %v1212, %v1220
      %v1750 = vmax.f32 %v1251, %v1259
      %v1751 = vmax.f32 %v1290, %v1298
      %v1752 = vmax.f32 %v1329, %v1337
      %v1753 = vmax.f32 %v1368, %v1376
      %v1754 = vmax.f32 %v1407, %v1415
      %v1755 = vmax.f32 %v1446, %v1454
      %v1756 = vmax.f32 %v1485, %v1493
      %v1757 = vmax.f32 %v1524, %v1532
      %v1758 = vmax.f32 %v1563, %v1571
      %v1759 = vmax.f32 %v1602, %v1610
      %v1760 = vmax.f32 %v1641, %v1649
      %v1761 = vmax.f32 %v1680, %v1688
      %v1762 = vmax.f32 %v1176, %v1183
      %v1763 = vmax.f32 %v1215, %v1222
      %v1764 = vmax.f32 %v1254, %v1261
      %v1765 = vmax.f32 %v1293, %v1300
      %v1766 = vmax.f32 %v1332, %v1339
      %v1767 = vmax.f32 %v1371, %v1378
      %v1768 = vmax.f32 %v1410, %v1417
      %v1769 = vmax.f32 %v1449, %v1456
      %v1770 = vmax.f32 %v1488, %v1495
      %v1771 = vmax.f32 %v1527, %v1534
      %v1772 = vmax.f32 %v1566, %v1573
      %v1773 = vmax.f32 %v1605, %v1612
      %v1774 = vmax.f32 %v1644, %v1651
      %v1775 = vmax.f32 %v1683, %v1690
      %v1776 = vmax.f32 %v1692, %v1734
      %v1777 = vmax.f32 %v1693, %v1735
      %v1778 = vmax.f32 %v1694, %v1736
      %v1779 = vmax.f32 %v1695, %v1737
      %v1780 = vmax.f32 %v1696, %v1738
      %v1781 = vmax.f32 %v1697, %v1739
      %v1782 = vmax.f32 %v1698, %v1740
      %v1783 = vmax.f32 %v1699, %v1741
      %v1784 = vmax.f32 %v1700, %v1742
      %v1785 = vmax.f32 %v1701, %v1743
      %v1786 = vmax.f32 %v1702, %v1744
      %v1787 = vmax.f32 %v1703, %v1745
      %v1788 = vmax.f32 %v1704, %v1746
      %v1789 = vmax.f32 %v1705, %v1747
      %v1790 = vmax.f32 %v1706, %v1748
      %v1791 = vmax.f32 %v1707, %v1749
      %v1792 = vmax.f32 %v1708, %v1750
      %v1793 = vmax.f32 %v1709, %v1751
      %v1794 = vmax.f32 %v1710, %v1752
      %v1795 = vmax.f32 %v1711, %v1753
      %v1796 = vmax.f32 %v1712, %v1754
      %v1797 = vmax.f32 %v1713, %v1755
      %v1798 = vmax.f32 %v1714, %v1756
      %v1799 = vmax.f32 %v1715, %v1757
      %v1800 = vmax.f32 %v1716, %v1758
      %v1801 = vmax.f32 %v1717, %v1759
      %v1802 = vmax.f32 %v1718, %v1760
      %v1803 = vmax.f32 %v1719, %v1761
      %v1804 = vmax.f32 %v1720, %v1762
      %v1805 = vmax.f32 %v1721, %v1763
      %v1806 = vmax.f32 %v1722, %v1764
      %v1807 = vmax.f32 %v1723, %v1765
      %v1808 = vmax.f32 %v1724, %v1766
      %v1809 = vmax.f32 %v1725, %v1767
      %v1810 = vmax.f32 %v1726, %v1768
      %v1811 = vmax.f32 %v1727, %v1769
      %v1812 = vmax.f32 %v1728, %v1770
      %v1813 = vmax.f32 %v1729, %v1771
      %v1814 = vmax.f32 %v1730, %v1772
      %v1815 = vmax.f32 %v1731, %v1773
      %v1816 = vmax.f32 %v1732, %v1774
      %v1817 = vmax.f32 %v1733, %v1775
      %v1818 = vld [vmem:[%s2] sm:$0xff]
      %v1819 = vld [vmem:[%s2 + $0x8] sm:$0xff]
      %v1820 = vld [vmem:[%s2 + $0x10] sm:$0xff]
      %1822 = vset.pattern.permute.xlu0 0
      %1823 = vperm.xlu0 %1822, %v1818
      %v1824 = vpop.permute.xlu0 %1823
      %1827 = vset.pattern.permute.xlu0 0
      %1828 = vperm.xlu0 %1827, %v1819
      %v1829 = vpop.permute.xlu0 %1828
      %1832 = vset.pattern.permute.xlu0 0
      %1833 = vperm.xlu0 %1832, %v1820
      %v1834 = vpop.permute.xlu0 %1833
      %v1836 = vadd.f32 %v1776, %v1824
      %v1837 = vadd.f32 %v1777, %v1824
      %v1838 = vadd.f32 %v1778, %v1824
      %v1839 = vadd.f32 %v1779, %v1824
      %v1840 = vadd.f32 %v1780, %v1824
      %v1841 = vadd.f32 %v1781, %v1824
      %v1842 = vadd.f32 %v1782, %v1824
      %v1843 = vadd.f32 %v1783, %v1824
      %v1844 = vadd.f32 %v1784, %v1824
      %v1845 = vadd.f32 %v1785, %v1824
      %v1846 = vadd.f32 %v1786, %v1824
      %v1847 = vadd.f32 %v1787, %v1824
      %v1848 = vadd.f32 %v1788, %v1824
      %v1849 = vadd.f32 %v1789, %v1824
      %v1850 = vadd.f32 %v1790, %v1829
      %v1851 = vadd.f32 %v1791, %v1829
      %v1852 = vadd.f32 %v1792, %v1829
      %v1853 = vadd.f32 %v1793, %v1829
      %v1854 = vadd.f32 %v1794, %v1829
      %v1855 = vadd.f32 %v1795, %v1829
      %v1856 = vadd.f32 %v1796, %v1829
      %v1857 = vadd.f32 %v1797, %v1829
      %v1858 = vadd.f32 %v1798, %v1829
      %v1859 = vadd.f32 %v1799, %v1829
      %v1860 = vadd.f32 %v1800, %v1829
      %v1861 = vadd.f32 %v1801, %v1829
      %v1862 = vadd.f32 %v1802, %v1829
      %v1863 = vadd.f32 %v1803, %v1829
      %v1864 = vadd.f32 %v1804, %v1834
      %v1865 = vadd.f32 %v1805, %v1834
      %v1866 = vadd.f32 %v1806, %v1834
      %v1867 = vadd.f32 %v1807, %v1834
      %v1868 = vadd.f32 %v1808, %v1834
      %v1869 = vadd.f32 %v1809, %v1834
      %v1870 = vadd.f32 %v1810, %v1834
      %v1871 = vadd.f32 %v1811, %v1834
      %v1872 = vadd.f32 %v1812, %v1834
      %v1873 = vadd.f32 %v1813, %v1834
      %v1874 = vadd.f32 %v1814, %v1834
      %v1875 = vadd.f32 %v1815, %v1834
      %v1876 = vadd.f32 %v1816, %v1834
      %v1877 = vadd.f32 %v1817, %v1834
      %v1878 = vmax.f32 %v1836, 0.0
      %v1879 = vmax.f32 %v1837, 0.0
      %v1880 = vmax.f32 %v1838, 0.0
      %v1881 = vmax.f32 %v1839, 0.0
      %v1882 = vmax.f32 %v1840, 0.0
      %v1883 = vmax.f32 %v1841, 0.0
      %v1884 = vmax.f32 %v1842, 0.0
      %v1885 = vmax.f32 %v1843, 0.0
      %v1886 = vmax.f32 %v1844, 0.0
      %v1887 = vmax.f32 %v1845, 0.0
      %v1888 = vmax.f32 %v1846, 0.0
      %v1889 = vmax.f32 %v1847, 0.0
      %v1890 = vmax.f32 %v1848, 0.0
      %v1891 = vmax.f32 %v1849, 0.0
      %v1892 = vmax.f32 %v1850, 0.0
      %v1893 = vmax.f32 %v1851, 0.0
      %v1894 = vmax.f32 %v1852, 0.0
      %v1895 = vmax.f32 %v1853, 0.0
      %v1896 = vmax.f32 %v1854, 0.0
      %v1897 = vmax.f32 %v1855, 0.0
      %v1898 = vmax.f32 %v1856, 0.0
      %v1899 = vmax.f32 %v1857, 0.0
      %v1900 = vmax.f32 %v1858, 0.0
      %v1901 = vmax.f32 %v1859, 0.0
      %v1902 = vmax.f32 %v1860, 0.0
      %v1903 = vmax.f32 %v1861, 0.0
      %v1904 = vmax.f32 %v1862, 0.0
      %v1905 = vmax.f32 %v1863, 0.0
      %v1906 = vmax.f32 %v1864, 0.0
      %v1907 = vmax.f32 %v1865, 0.0
      %v1908 = vmax.f32 %v1866, 0.0
      %v1909 = vmax.f32 %v1867, 0.0
      %v1910 = vmax.f32 %v1868, 0.0
      %v1911 = vmax.f32 %v1869, 0.0
      %v1912 = vmax.f32 %v1870, 0.0
      %v1913 = vmax.f32 %v1871, 0.0
      %v1914 = vmax.f32 %v1872, 0.0
      %v1915 = vmax.f32 %v1873, 0.0
      %v1916 = vmax.f32 %v1874, 0.0
      %v1917 = vmax.f32 %v1875, 0.0
      %v1918 = vmax.f32 %v1876, 0.0
      %v1919 = vmax.f32 %v1877, 0.0
      %1920 = vst [vmem:[#allocation3] sm:$0xff] %v1878
      %1921 = vst [vmem:[#allocation3 + $0x8] sm:$0xff] %v1879
      %1922 = vst [vmem:[#allocation3 + $0x10] sm:$0xff] %v1880
      %1923 = vst [vmem:[#allocation3 + $0x18] sm:$0xff] %v1881
      %1924 = vst [vmem:[#allocation3 + $0x20] sm:$0xff] %v1882
      %1925 = vst [vmem:[#allocation3 + $0x28] sm:$0xff] %v1883
      %1926 = vst [vmem:[#allocation3 + $0x30] sm:$0xff] %v1884
      %1927 = vst [vmem:[#allocation3 + $0x38] sm:$0xff] %v1885
      %1928 = vst [vmem:[#allocation3 + $0x40] sm:$0xff] %v1886
      %1929 = vst [vmem:[#allocation3 + $0x48] sm:$0xff] %v1887
      %1930 = vst [vmem:[#allocation3 + $0x50] sm:$0xff] %v1888
      %1931 = vst [vmem:[#allocation3 + $0x58] sm:$0xff] %v1889
      %1932 = vst [vmem:[#allocation3 + $0x60] sm:$0xff] %v1890
      %vm1933 = vcmask 785408
      %1934 = vst.msk [vmem:[#allocation3 + $0x68] sm:$0xff] %vm1933, %v1891
      %1935 = vst [vmem:[#allocation3 + $0x70] sm:$0xff] %v1892
      %1936 = vst [vmem:[#allocation3 + $0x78] sm:$0xff] %v1893
      %1937 = vst [vmem:[#allocation3 + $0x80] sm:$0xff] %v1894
      %1938 = vst [vmem:[#allocation3 + $0x88] sm:$0xff] %v1895
      %1939 = vst [vmem:[#allocation3 + $0x90] sm:$0xff] %v1896
      %1940 = vst [vmem:[#allocation3 + $0x98] sm:$0xff] %v1897
      %1941 = vst [vmem:[#allocation3 + $0xa0] sm:$0xff] %v1898
      %1942 = vst [vmem:[#allocation3 + $0xa8] sm:$0xff] %v1899
      %1943 = vst [vmem:[#allocation3 + $0xb0] sm:$0xff] %v1900
      %1944 = vst [vmem:[#allocation3 + $0xb8] sm:$0xff] %v1901
      %1945 = vst [vmem:[#allocation3 + $0xc0] sm:$0xff] %v1902
      %1946 = vst [vmem:[#allocation3 + $0xc8] sm:$0xff] %v1903
      %1947 = vst [vmem:[#allocation3 + $0xd0] sm:$0xff] %v1904
      %1948 = vst.msk [vmem:[#allocation3 + $0xd8] sm:$0xff] %vm1933, %v1905
      %1949 = vst [vmem:[#allocation3 + $0xe0] sm:$0xff] %v1906
      %1950 = vst [vmem:[#allocation3 + $0xe8] sm:$0xff] %v1907
      %1951 = vst [vmem:[#allocation3 + $0xf0] sm:$0xff] %v1908
      %1952 = vst [vmem:[#allocation3 + $0xf8] sm:$0xff] %v1909
      %1953 = vst [vmem:[#allocation3 + $0x100] sm:$0xff] %v1910
      %1954 = vst [vmem:[#allocation3 + $0x108] sm:$0xff] %v1911
      %1955 = vst [vmem:[#allocation3 + $0x110] sm:$0xff] %v1912
      %1956 = vst [vmem:[#allocation3 + $0x118] sm:$0xff] %v1913
      %1957 = vst [vmem:[#allocation3 + $0x120] sm:$0xff] %v1914
      %1958 = vst [vmem:[#allocation3 + $0x128] sm:$0xff] %v1915
      %1959 = vst [vmem:[#allocation3 + $0x130] sm:$0xff] %v1916
      %1960 = vst [vmem:[#allocation3 + $0x138] sm:$0xff] %v1917
      %1961 = vst [vmem:[#allocation3 + $0x140] sm:$0xff] %v1918
      %1962 = vst.msk [vmem:[#allocation3 + $0x148] sm:$0xff] %vm1933, %v1919
      %v1963 = vld [vmem:[#allocation3] sm:$0xff]
      %v1964 = vld [vmem:[#allocation3 + $0x8] sm:$0xff]
      %v1965 = vld [vmem:[#allocation3 + $0x10] sm:$0xff]
      %v1966 = vld [vmem:[#allocation3 + $0x18] sm:$0xff]
      %v1967 = vld [vmem:[#allocation3 + $0x20] sm:$0xff]
      %v1968 = vld [vmem:[#allocation3 + $0x28] sm:$0xff]
      %v1969 = vld [vmem:[#allocation3 + $0x30] sm:$0xff]
      %v1970 = vld [vmem:[#allocation3 + $0x38] sm:$0xff]
      %v1971 = vld [vmem:[#allocation3 + $0x40] sm:$0xff]
      %v1972 = vld [vmem:[#allocation3 + $0x48] sm:$0xff]
      %v1973 = vld [vmem:[#allocation3 + $0x70] sm:$0xff]
      %v1974 = vld [vmem:[#allocation3 + $0x78] sm:$0xff]
      %v1975 = vld [vmem:[#allocation3 + $0x80] sm:$0xff]
      %v1976 = vld [vmem:[#allocation3 + $0x88] sm:$0xff]
      %v1977 = vld [vmem:[#allocation3 + $0x90] sm:$0xff]
      %v1978 = vld [vmem:[#allocation3 + $0x98] sm:$0xff]
      %v1979 = vld [vmem:[#allocation3 + $0xa0] sm:$0xff]
      %v1980 = vld [vmem:[#allocation3 + $0xa8] sm:$0xff]
      %v1981 = vld [vmem:[#allocation3 + $0xb0] sm:$0xff]
      %v1982 = vld [vmem:[#allocation3 + $0xb8] sm:$0xff]
      %v1983 = vld [vmem:[#allocation3 + $0xe0] sm:$0xff]
      %v1984 = vld [vmem:[#allocation3 + $0xe8] sm:$0xff]
      %v1985 = vld [vmem:[#allocation3 + $0xf0] sm:$0xff]
      %v1986 = vld [vmem:[#allocation3 + $0xf8] sm:$0xff]
      %v1987 = vld [vmem:[#allocation3 + $0x100] sm:$0xff]
      %v1988 = vld [vmem:[#allocation3 + $0x108] sm:$0xff]
      %v1989 = vld [vmem:[#allocation3 + $0x110] sm:$0xff]
      %v1990 = vld [vmem:[#allocation3 + $0x118] sm:$0xff]
      %v1991 = vld [vmem:[#allocation3 + $0x120] sm:$0xff]
      %v1992 = vld [vmem:[#allocation3 + $0x128] sm:$0xff]
      %1993 = vst [vmem:[#allocation4] sm:$0xff] %v1963
      %1994 = vst [vmem:[#allocation4 + $0x8] sm:$0xff] %v1964
      %1995 = vst [vmem:[#allocation4 + $0x10] sm:$0xff] %v1965
      %1996 = vst [vmem:[#allocation4 + $0x18] sm:$0xff] %v1966
      %1997 = vst [vmem:[#allocation4 + $0x20] sm:$0xff] %v1967
      %1998 = vst [vmem:[#allocation4 + $0x28] sm:$0xff] %v1968
      %1999 = vst [vmem:[#allocation4 + $0x30] sm:$0xff] %v1969
      %2000 = vst [vmem:[#allocation4 + $0x38] sm:$0xff] %v1970
      %2001 = vst [vmem:[#allocation4 + $0x40] sm:$0xff] %v1971
      %vm2002 = vcmask 261120
      %2003 = vst.msk [vmem:[#allocation4 + $0x48] sm:$0xff] %vm2002, %v1972
      %2004 = vst [vmem:[#allocation4 + $0x50] sm:$0xff] %v1973
      %2005 = vst [vmem:[#allocation4 + $0x58] sm:$0xff] %v1974
      %2006 = vst [vmem:[#allocation4 + $0x60] sm:$0xff] %v1975
      %2007 = vst [vmem:[#allocation4 + $0x68] sm:$0xff] %v1976
      %2008 = vst [vmem:[#allocation4 + $0x70] sm:$0xff] %v1977
      %2009 = vst [vmem:[#allocation4 + $0x78] sm:$0xff] %v1978
      %2010 = vst [vmem:[#allocation4 + $0x80] sm:$0xff] %v1979
      %2011 = vst [vmem:[#allocation4 + $0x88] sm:$0xff] %v1980
      %2012 = vst [vmem:[#allocation4 + $0x90] sm:$0xff] %v1981
      %2013 = vst.msk [vmem:[#allocation4 + $0x98] sm:$0xff] %vm2002, %v1982
      %2014 = vst [vmem:[#allocation4 + $0xa0] sm:$0xff] %v1983
      %2015 = vst [vmem:[#allocation4 + $0xa8] sm:$0xff] %v1984
      %2016 = vst [vmem:[#allocation4 + $0xb0] sm:$0xff] %v1985
      %2017 = vst [vmem:[#allocation4 + $0xb8] sm:$0xff] %v1986
      %2018 = vst [vmem:[#allocation4 + $0xc0] sm:$0xff] %v1987
      %2019 = vst [vmem:[#allocation4 + $0xc8] sm:$0xff] %v1988
      %2020 = vst [vmem:[#allocation4 + $0xd0] sm:$0xff] %v1989
      %2021 = vst [vmem:[#allocation4 + $0xd8] sm:$0xff] %v1990
      %2022 = vst [vmem:[#allocation4 + $0xe0] sm:$0xff] %v1991
      %2023 = vst.msk [vmem:[#allocation4 + $0xe8] sm:$0xff] %vm2002, %v1992
      %v2024 = vld [vmem:[#allocation3] sm:$0xff]
      %v2025 = vld [vmem:[#allocation3 + $0x8] sm:$0xff]
      %v2026 = vld [vmem:[#allocation3 + $0x10] sm:$0xff]
      %v2027 = vld [vmem:[#allocation3 + $0x18] sm:$0xff]
      %v2028 = vld [vmem:[#allocation3 + $0x20] sm:$0xff]
      %v2029 = vld [vmem:[#allocation3 + $0x28] sm:$0xff]
      %v2030 = vld [vmem:[#allocation3 + $0x30] sm:$0xff]
      %v2031 = vld [vmem:[#allocation3 + $0x38] sm:$0xff]
      %v2032 = vld [vmem:[#allocation3 + $0x40] sm:$0xff]
      %v2033 = vld [vmem:[#allocation3 + $0x48] sm:$0xff]
      %v2034 = vld [vmem:[#allocation3 + $0x70] sm:$0xff]
      %v2035 = vld [vmem:[#allocation3 + $0x78] sm:$0xff]
      %v2036 = vld [vmem:[#allocation3 + $0x80] sm:$0xff]
      %v2037 = vld [vmem:[#allocation3 + $0x88] sm:$0xff]
      %v2038 = vld [vmem:[#allocation3 + $0x90] sm:$0xff]
      %v2039 = vld [vmem:[#allocation3 + $0x98] sm:$0xff]
      %v2040 = vld [vmem:[#allocation3 + $0xa0] sm:$0xff]
      %v2041 = vld [vmem:[#allocation3 + $0xa8] sm:$0xff]
      %v2042 = vld [vmem:[#allocation3 + $0xb0] sm:$0xff]
      %v2043 = vld [vmem:[#allocation3 + $0xb8] sm:$0xff]
      %v2044 = vld [vmem:[#allocation3 + $0xe0] sm:$0xff]
      %v2045 = vld [vmem:[#allocation3 + $0xe8] sm:$0xff]
      %v2046 = vld [vmem:[#allocation3 + $0xf0] sm:$0xff]
      %v2047 = vld [vmem:[#allocation3 + $0xf8] sm:$0xff]
      %v2048 = vld [vmem:[#allocation3 + $0x100] sm:$0xff]
      %v2049 = vld [vmem:[#allocation3 + $0x108] sm:$0xff]
      %v2050 = vld [vmem:[#allocation3 + $0x110] sm:$0xff]
      %v2051 = vld [vmem:[#allocation3 + $0x118] sm:$0xff]
      %v2052 = vld [vmem:[#allocation3 + $0x120] sm:$0xff]
      %v2053 = vld [vmem:[#allocation3 + $0x128] sm:$0xff]
      %2084 = vrot.lane.b32.xlu0 %v2024, 96
      %v2085 = vpop.permute.xlu0 %2084
      %2086 = vrot.lane.b32.xlu0 %v2025, 96
      %v2087 = vpop.permute.xlu0 %2086
      %2088 = vrot.lane.b32.xlu0 %v2026, 96
      %v2089 = vpop.permute.xlu0 %2088
      %2090 = vrot.lane.b32.xlu0 %v2027, 96
      %v2091 = vpop.permute.xlu0 %2090
      %2092 = vrot.lane.b32.xlu0 %v2028, 96
      %v2093 = vpop.permute.xlu0 %2092
      %2094 = vrot.lane.b32.xlu0 %v2029, 96
      %v2095 = vpop.permute.xlu0 %2094
      %2096 = vrot.lane.b32.xlu0 %v2030, 96
      %v2097 = vpop.permute.xlu0 %2096
      %2098 = vrot.lane.b32.xlu0 %v2031, 96
      %v2099 = vpop.permute.xlu0 %2098
      %2100 = vrot.lane.b32.xlu0 %v2032, 96
      %v2101 = vpop.permute.xlu0 %2100
      %2102 = vrot.lane.b32.xlu0 %v2033, 96
      %v2103 = vpop.permute.xlu0 %2102
      %2104 = vrot.lane.b32.xlu0 %v2034, 96
      %v2105 = vpop.permute.xlu0 %2104
      %2106 = vrot.lane.b32.xlu0 %v2035, 96
      %v2107 = vpop.permute.xlu0 %2106
      %2108 = vrot.lane.b32.xlu0 %v2036, 96
      %v2109 = vpop.permute.xlu0 %2108
      %2110 = vrot.lane.b32.xlu0 %v2037, 96
      %v2111 = vpop.permute.xlu0 %2110
      %2112 = vrot.lane.b32.xlu0 %v2038, 96
      %v2113 = vpop.permute.xlu0 %2112
      %2114 = vrot.lane.b32.xlu0 %v2039, 96
      %v2115 = vpop.permute.xlu0 %2114
      %2116 = vrot.lane.b32.xlu0 %v2040, 96
      %v2117 = vpop.permute.xlu0 %2116
      %2118 = vrot.lane.b32.xlu0 %v2041, 96
      %v2119 = vpop.permute.xlu0 %2118
      %2120 = vrot.lane.b32.xlu0 %v2042, 96
      %v2121 = vpop.permute.xlu0 %2120
      %2122 = vrot.lane.b32.xlu0 %v2043, 96
      %v2123 = vpop.permute.xlu0 %2122
      %2124 = vrot.lane.b32.xlu0 %v2044, 96
      %v2125 = vpop.permute.xlu0 %2124
      %2126 = vrot.lane.b32.xlu0 %v2045, 96
      %v2127 = vpop.permute.xlu0 %2126
      %2128 = vrot.lane.b32.xlu0 %v2046, 96
      %v2129 = vpop.permute.xlu0 %2128
      %2130 = vrot.lane.b32.xlu0 %v2047, 96
      %v2131 = vpop.permute.xlu0 %2130
      %2132 = vrot.lane.b32.xlu0 %v2048, 96
      %v2133 = vpop.permute.xlu0 %2132
      %2134 = vrot.lane.b32.xlu0 %v2049, 96
      %v2135 = vpop.permute.xlu0 %2134
      %2136 = vrot.lane.b32.xlu0 %v2050, 96
      %v2137 = vpop.permute.xlu0 %2136
      %2138 = vrot.lane.b32.xlu0 %v2051, 96
      %v2139 = vpop.permute.xlu0 %2138
      %2140 = vrot.lane.b32.xlu0 %v2052, 96
      %v2141 = vpop.permute.xlu0 %2140
      %2142 = vrot.lane.b32.xlu0 %v2053, 96
      %v2143 = vpop.permute.xlu0 %2142
      %v2144 = vsel %vm1933, %v2085, %v2087
      %v2145 = vsel %vm1933, %v2087, %v2089
      %v2146 = vsel %vm1933, %v2089, %v2091
      %v2147 = vsel %vm1933, %v2091, %v2093
      %v2148 = vsel %vm1933, %v2093, %v2095
      %v2149 = vsel %vm1933, %v2095, %v2097
      %v2150 = vsel %vm1933, %v2097, %v2099
      %v2151 = vsel %vm1933, %v2099, %v2101
      %v2152 = vsel %vm1933, %v2101, %v2103
      %v2153 = vsel %vm1933, %v2105, %v2107
      %v2154 = vsel %vm1933, %v2107, %v2109
      %v2155 = vsel %vm1933, %v2109, %v2111
      %v2156 = vsel %vm1933, %v2111, %v2113
      %v2157 = vsel %vm1933, %v2113, %v2115
      %v2158 = vsel %vm1933, %v2115, %v2117
      %v2159 = vsel %vm1933, %v2117, %v2119
      %v2160 = vsel %vm1933, %v2119, %v2121
      %v2161 = vsel %vm1933, %v2121, %v2123
      %v2162 = vsel %vm1933, %v2125, %v2127
      %v2163 = vsel %vm1933, %v2127, %v2129
      %v2164 = vsel %vm1933, %v2129, %v2131
      %v2165 = vsel %vm1933, %v2131, %v2133
      %v2166 = vsel %vm1933, %v2133, %v2135
      %v2167 = vsel %vm1933, %v2135, %v2137
      %v2168 = vsel %vm1933, %v2137, %v2139
      %v2169 = vsel %vm1933, %v2139, %v2141
      %v2170 = vsel %vm1933, %v2141, %v2143
      %2201 = vst [vmem:[#allocation4 + $0xf0] sm:$0xff] %v2144
      %2202 = vst [vmem:[#allocation4 + $0xf8] sm:$0xff] %v2145
      %2203 = vst [vmem:[#allocation4 + $0x100] sm:$0xff] %v2146
      %2204 = vst [vmem:[#allocation4 + $0x108] sm:$0xff] %v2147
      %2205 = vst [vmem:[#allocation4 + $0x110] sm:$0xff] %v2148
      %2206 = vst [vmem:[#allocation4 + $0x118] sm:$0xff] %v2149
      %2207 = vst [vmem:[#allocation4 + $0x120] sm:$0xff] %v2150
      %2208 = vst [vmem:[#allocation4 + $0x128] sm:$0xff] %v2151
      %2209 = vst [vmem:[#allocation4 + $0x130] sm:$0xff] %v2152
      %2210 = vst.msk [vmem:[#allocation4 + $0x138] sm:$0xff] %vm2002, %v2103
      %2211 = vst [vmem:[#allocation4 + $0x140] sm:$0xff] %v2153
      %2212 = vst [vmem:[#allocation4 + $0x148] sm:$0xff] %v2154
      %2213 = vst [vmem:[#allocation4 + $0x150] sm:$0xff] %v2155
      %2214 = vst [vmem:[#allocation4 + $0x158] sm:$0xff] %v2156
      %2215 = vst [vmem:[#allocation4 + $0x160] sm:$0xff] %v2157
      %2216 = vst [vmem:[#allocation4 + $0x168] sm:$0xff] %v2158
      %2217 = vst [vmem:[#allocation4 + $0x170] sm:$0xff] %v2159
      %2218 = vst [vmem:[#allocation4 + $0x178] sm:$0xff] %v2160
      %2219 = vst [vmem:[#allocation4 + $0x180] sm:$0xff] %v2161
      %2220 = vst.msk [vmem:[#allocation4 + $0x188] sm:$0xff] %vm2002, %v2123
      %2221 = vst [vmem:[#allocation4 + $0x190] sm:$0xff] %v2162
      %2222 = vst [vmem:[#allocation4 + $0x198] sm:$0xff] %v2163
      %2223 = vst [vmem:[#allocation4 + $0x1a0] sm:$0xff] %v2164
      %2224 = vst [vmem:[#allocation4 + $0x1a8] sm:$0xff] %v2165
      %2225 = vst [vmem:[#allocation4 + $0x1b0] sm:$0xff] %v2166
      %2226 = vst [vmem:[#allocation4 + $0x1b8] sm:$0xff] %v2167
      %2227 = vst [vmem:[#allocation4 + $0x1c0] sm:$0xff] %v2168
      %2228 = vst [vmem:[#allocation4 + $0x1c8] sm:$0xff] %v2169
      %2229 = vst [vmem:[#allocation4 + $0x1d0] sm:$0xff] %v2170
      %2230 = vst.msk [vmem:[#allocation4 + $0x1d8] sm:$0xff] %vm2002, %v2143
      %v2231 = vld [vmem:[#allocation3] sm:$0xff]
      %v2232 = vld [vmem:[#allocation3 + $0x8] sm:$0xff]
      %v2233 = vld [vmem:[#allocation3 + $0x10] sm:$0xff]
      %v2234 = vld [vmem:[#allocation3 + $0x18] sm:$0xff]
      %v2235 = vld [vmem:[#allocation3 + $0x20] sm:$0xff]
      %v2236 = vld [vmem:[#allocation3 + $0x28] sm:$0xff]
      %v2237 = vld [vmem:[#allocation3 + $0x30] sm:$0xff]
      %v2238 = vld [vmem:[#allocation3 + $0x38] sm:$0xff]
      %v2239 = vld [vmem:[#allocation3 + $0x40] sm:$0xff]
      %v2240 = vld [vmem:[#allocation3 + $0x48] sm:$0xff]
      %v2241 = vld [vmem:[#allocation3 + $0x70] sm:$0xff]
      %v2242 = vld [vmem:[#allocation3 + $0x78] sm:$0xff]
      %v2243 = vld [vmem:[#allocation3 + $0x80] sm:$0xff]
      %v2244 = vld [vmem:[#allocation3 + $0x88] sm:$0xff]
      %v2245 = vld [vmem:[#allocation3 + $0x90] sm:$0xff]
      %v2246 = vld [vmem:[#allocation3 + $0x98] sm:$0xff]
      %v2247 = vld [vmem:[#allocation3 + $0xa0] sm:$0xff]
      %v2248 = vld [vmem:[#allocation3 + $0xa8] sm:$0xff]
      %v2249 = vld [vmem:[#allocation3 + $0xb0] sm:$0xff]
      %v2250 = vld [vmem:[#allocation3 + $0xb8] sm:$0xff]
      %v2251 = vld [vmem:[#allocation3 + $0xe0] sm:$0xff]
      %v2252 = vld [vmem:[#allocation3 + $0xe8] sm:$0xff]
      %v2253 = vld [vmem:[#allocation3 + $0xf0] sm:$0xff]
      %v2254 = vld [vmem:[#allocation3 + $0xf8] sm:$0xff]
      %v2255 = vld [vmem:[#allocation3 + $0x100] sm:$0xff]
      %v2256 = vld [vmem:[#allocation3 + $0x108] sm:$0xff]
      %v2257 = vld [vmem:[#allocation3 + $0x110] sm:$0xff]
      %v2258 = vld [vmem:[#allocation3 + $0x118] sm:$0xff]
      %v2259 = vld [vmem:[#allocation3 + $0x120] sm:$0xff]
      %v2260 = vld [vmem:[#allocation3 + $0x128] sm:$0xff]
      %2291 = vrot.lane.b32.xlu0 %v2231, 64
      %v2292 = vpop.permute.xlu0 %2291
      %2293 = vrot.lane.b32.xlu0 %v2232, 64
      %v2294 = vpop.permute.xlu0 %2293
      %2295 = vrot.lane.b32.xlu0 %v2233, 64
      %v2296 = vpop.permute.xlu0 %2295
      %2297 = vrot.lane.b32.xlu0 %v2234, 64
      %v2298 = vpop.permute.xlu0 %2297
      %2299 = vrot.lane.b32.xlu0 %v2235, 64
      %v2300 = vpop.permute.xlu0 %2299
      %2301 = vrot.lane.b32.xlu0 %v2236, 64
      %v2302 = vpop.permute.xlu0 %2301
      %2303 = vrot.lane.b32.xlu0 %v2237, 64
      %v2304 = vpop.permute.xlu0 %2303
      %2305 = vrot.lane.b32.xlu0 %v2238, 64
      %v2306 = vpop.permute.xlu0 %2305
      %2307 = vrot.lane.b32.xlu0 %v2239, 64
      %v2308 = vpop.permute.xlu0 %2307
      %2309 = vrot.lane.b32.xlu0 %v2240, 64
      %v2310 = vpop.permute.xlu0 %2309
      %2311 = vrot.lane.b32.xlu0 %v2241, 64
      %v2312 = vpop.permute.xlu0 %2311
      %2313 = vrot.lane.b32.xlu0 %v2242, 64
      %v2314 = vpop.permute.xlu0 %2313
      %2315 = vrot.lane.b32.xlu0 %v2243, 64
      %v2316 = vpop.permute.xlu0 %2315
      %2317 = vrot.lane.b32.xlu0 %v2244, 64
      %v2318 = vpop.permute.xlu0 %2317
      %2319 = vrot.lane.b32.xlu0 %v2245, 64
      %v2320 = vpop.permute.xlu0 %2319
      %2321 = vrot.lane.b32.xlu0 %v2246, 64
      %v2322 = vpop.permute.xlu0 %2321
      %2323 = vrot.lane.b32.xlu0 %v2247, 64
      %v2324 = vpop.permute.xlu0 %2323
      %2325 = vrot.lane.b32.xlu0 %v2248, 64
      %v2326 = vpop.permute.xlu0 %2325
      %2327 = vrot.lane.b32.xlu0 %v2249, 64
      %v2328 = vpop.permute.xlu0 %2327
      %2329 = vrot.lane.b32.xlu0 %v2250, 64
      %v2330 = vpop.permute.xlu0 %2329
      %2331 = vrot.lane.b32.xlu0 %v2251, 64
      %v2332 = vpop.permute.xlu0 %2331
      %2333 = vrot.lane.b32.xlu0 %v2252, 64
      %v2334 = vpop.permute.xlu0 %2333
      %2335 = vrot.lane.b32.xlu0 %v2253, 64
      %v2336 = vpop.permute.xlu0 %2335
      %2337 = vrot.lane.b32.xlu0 %v2254, 64
      %v2338 = vpop.permute.xlu0 %2337
      %2339 = vrot.lane.b32.xlu0 %v2255, 64
      %v2340 = vpop.permute.xlu0 %2339
      %2341 = vrot.lane.b32.xlu0 %v2256, 64
      %v2342 = vpop.permute.xlu0 %2341
      %2343 = vrot.lane.b32.xlu0 %v2257, 64
      %v2344 = vpop.permute.xlu0 %2343
      %2345 = vrot.lane.b32.xlu0 %v2258, 64
      %v2346 = vpop.permute.xlu0 %2345
      %2347 = vrot.lane.b32.xlu0 %v2259, 64
      %v2348 = vpop.permute.xlu0 %2347
      %2349 = vrot.lane.b32.xlu0 %v2260, 64
      %v2350 = vpop.permute.xlu0 %2349
      %v2351 = vsel %vm1127, %v2292, %v2294
      %v2352 = vsel %vm1127, %v2294, %v2296
      %v2353 = vsel %vm1127, %v2296, %v2298
      %v2354 = vsel %vm1127, %v2298, %v2300
      %v2355 = vsel %vm1127, %v2300, %v2302
      %v2356 = vsel %vm1127, %v2302, %v2304
      %v2357 = vsel %vm1127, %v2304, %v2306
      %v2358 = vsel %vm1127, %v2306, %v2308
      %v2359 = vsel %vm1127, %v2308, %v2310
      %v2360 = vsel %vm1127, %v2312, %v2314
      %v2361 = vsel %vm1127, %v2314, %v2316
      %v2362 = vsel %vm1127, %v2316, %v2318
      %v2363 = vsel %vm1127, %v2318, %v2320
      %v2364 = vsel %vm1127, %v2320, %v2322
      %v2365 = vsel %vm1127, %v2322, %v2324
      %v2366 = vsel %vm1127, %v2324, %v2326
      %v2367 = vsel %vm1127, %v2326, %v2328
      %v2368 = vsel %vm1127, %v2328, %v2330
      %v2369 = vsel %vm1127, %v2332, %v2334
      %v2370 = vsel %vm1127, %v2334, %v2336
      %v2371 = vsel %vm1127, %v2336, %v2338
      %v2372 = vsel %vm1127, %v2338, %v2340
      %v2373 = vsel %vm1127, %v2340, %v2342
      %v2374 = vsel %vm1127, %v2342, %v2344
      %v2375 = vsel %vm1127, %v2344, %v2346
      %v2376 = vsel %vm1127, %v2346, %v2348
      %v2377 = vsel %vm1127, %v2348, %v2350
      %2408 = vst [vmem:[#allocation4 + $0x1e0] sm:$0xff] %v2351
      %2409 = vst [vmem:[#allocation4 + $0x1e8] sm:$0xff] %v2352
      %2410 = vst [vmem:[#allocation4 + $0x1f0] sm:$0xff] %v2353
      %2411 = vst [vmem:[#allocation4 + $0x1f8] sm:$0xff] %v2354
      %2412 = vst [vmem:[#allocation4 + $0x200] sm:$0xff] %v2355
      %2413 = vst [vmem:[#allocation4 + $0x208] sm:$0xff] %v2356
      %2414 = vst [vmem:[#allocation4 + $0x210] sm:$0xff] %v2357
      %2415 = vst [vmem:[#allocation4 + $0x218] sm:$0xff] %v2358
      %2416 = vst [vmem:[#allocation4 + $0x220] sm:$0xff] %v2359
      %2417 = vst.msk [vmem:[#allocation4 + $0x228] sm:$0xff] %vm2002, %v2310
      %2418 = vst [vmem:[#allocation4 + $0x230] sm:$0xff] %v2360
      %2419 = vst [vmem:[#allocation4 + $0x238] sm:$0xff] %v2361
      %2420 = vst [vmem:[#allocation4 + $0x240] sm:$0xff] %v2362
      %2421 = vst [vmem:[#allocation4 + $0x248] sm:$0xff] %v2363
      %2422 = vst [vmem:[#allocation4 + $0x250] sm:$0xff] %v2364
      %2423 = vst [vmem:[#allocation4 + $0x258] sm:$0xff] %v2365
      %2424 = vst [vmem:[#allocation4 + $0x260] sm:$0xff] %v2366
      %2425 = vst [vmem:[#allocation4 + $0x268] sm:$0xff] %v2367
      %2426 = vst [vmem:[#allocation4 + $0x270] sm:$0xff] %v2368
      %2427 = vst.msk [vmem:[#allocation4 + $0x278] sm:$0xff] %vm2002, %v2330
      %2428 = vst [vmem:[#allocation4 + $0x280] sm:$0xff] %v2369
      %2429 = vst [vmem:[#allocation4 + $0x288] sm:$0xff] %v2370
      %2430 = vst [vmem:[#allocation4 + $0x290] sm:$0xff] %v2371
      %2431 = vst [vmem:[#allocation4 + $0x298] sm:$0xff] %v2372
      %2432 = vst [vmem:[#allocation4 + $0x2a0] sm:$0xff] %v2373
      %2433 = vst [vmem:[#allocation4 + $0x2a8] sm:$0xff] %v2374
      %2434 = vst [vmem:[#allocation4 + $0x2b0] sm:$0xff] %v2375
      %2435 = vst [vmem:[#allocation4 + $0x2b8] sm:$0xff] %v2376
      %2436 = vst [vmem:[#allocation4 + $0x2c0] sm:$0xff] %v2377
      %2437 = vst.msk [vmem:[#allocation4 + $0x2c8] sm:$0xff] %vm2002, %v2350
      %v2438 = vld [vmem:[#allocation3 + $0x10] sm:$0xff]
      %v2439 = vld [vmem:[#allocation3 + $0x18] sm:$0xff]
      %v2440 = vld [vmem:[#allocation3 + $0x20] sm:$0xff]
      %v2441 = vld [vmem:[#allocation3 + $0x28] sm:$0xff]
      %v2442 = vld [vmem:[#allocation3 + $0x30] sm:$0xff]
      %v2443 = vld [vmem:[#allocation3 + $0x38] sm:$0xff]
      %v2444 = vld [vmem:[#allocation3 + $0x40] sm:$0xff]
      %v2445 = vld [vmem:[#allocation3 + $0x48] sm:$0xff]
      %v2446 = vld [vmem:[#allocation3 + $0x50] sm:$0xff]
      %v2447 = vld [vmem:[#allocation3 + $0x58] sm:$0xff]
      %v2448 = vld [vmem:[#allocation3 + $0x80] sm:$0xff]
      %v2449 = vld [vmem:[#allocation3 + $0x88] sm:$0xff]
      %v2450 = vld [vmem:[#allocation3 + $0x90] sm:$0xff]
      %v2451 = vld [vmem:[#allocation3 + $0x98] sm:$0xff]
      %v2452 = vld [vmem:[#allocation3 + $0xa0] sm:$0xff]
      %v2453 = vld [vmem:[#allocation3 + $0xa8] sm:$0xff]
      %v2454 = vld [vmem:[#allocation3 + $0xb0] sm:$0xff]
      %v2455 = vld [vmem:[#allocation3 + $0xb8] sm:$0xff]
      %v2456 = vld [vmem:[#allocation3 + $0xc0] sm:$0xff]
      %v2457 = vld [vmem:[#allocation3 + $0xc8] sm:$0xff]
      %v2458 = vld [vmem:[#allocation3 + $0xf0] sm:$0xff]
      %v2459 = vld [vmem:[#allocation3 + $0xf8] sm:$0xff]
      %v2460 = vld [vmem:[#allocation3 + $0x100] sm:$0xff]
      %v2461 = vld [vmem:[#allocation3 + $0x108] sm:$0xff]
      %v2462 = vld [vmem:[#allocation3 + $0x110] sm:$0xff]
      %v2463 = vld [vmem:[#allocation3 + $0x118] sm:$0xff]
      %v2464 = vld [vmem:[#allocation3 + $0x120] sm:$0xff]
      %v2465 = vld [vmem:[#allocation3 + $0x128] sm:$0xff]
      %v2466 = vld [vmem:[#allocation3 + $0x130] sm:$0xff]
      %v2467 = vld [vmem:[#allocation3 + $0x138] sm:$0xff]
      %2468 = vst [vmem:[#allocation4 + $0x2d0] sm:$0xff] %v2438
      %2469 = vst [vmem:[#allocation4 + $0x2d8] sm:$0xff] %v2439
      %2470 = vst [vmem:[#allocation4 + $0x2e0] sm:$0xff] %v2440
      %2471 = vst [vmem:[#allocation4 + $0x2e8] sm:$0xff] %v2441
      %2472 = vst [vmem:[#allocation4 + $0x2f0] sm:$0xff] %v2442
      %2473 = vst [vmem:[#allocation4 + $0x2f8] sm:$0xff] %v2443
      %2474 = vst [vmem:[#allocation4 + $0x300] sm:$0xff] %v2444
      %2475 = vst [vmem:[#allocation4 + $0x308] sm:$0xff] %v2445
      %2476 = vst [vmem:[#allocation4 + $0x310] sm:$0xff] %v2446
      %2477 = vst.msk [vmem:[#allocation4 + $0x318] sm:$0xff] %vm2002, %v2447
      %2478 = vst [vmem:[#allocation4 + $0x320] sm:$0xff] %v2448
      %2479 = vst [vmem:[#allocation4 + $0x328] sm:$0xff] %v2449
      %2480 = vst [vmem:[#allocation4 + $0x330] sm:$0xff] %v2450
      %2481 = vst [vmem:[#allocation4 + $0x338] sm:$0xff] %v2451
      %2482 = vst [vmem:[#allocation4 + $0x340] sm:$0xff] %v2452
      %2483 = vst [vmem:[#allocation4 + $0x348] sm:$0xff] %v2453
      %2484 = vst [vmem:[#allocation4 + $0x350] sm:$0xff] %v2454
      %2485 = vst [vmem:[#allocation4 + $0x358] sm:$0xff] %v2455
      %2486 = vst [vmem:[#allocation4 + $0x360] sm:$0xff] %v2456
      %2487 = vst.msk [vmem:[#allocation4 + $0x368] sm:$0xff] %vm2002, %v2457
      %2488 = vst [vmem:[#allocation4 + $0x370] sm:$0xff] %v2458
      %2489 = vst [vmem:[#allocation4 + $0x378] sm:$0xff] %v2459
      %2490 = vst [vmem:[#allocation4 + $0x380] sm:$0xff] %v2460
      %2491 = vst [vmem:[#allocation4 + $0x388] sm:$0xff] %v2461
      %2492 = vst [vmem:[#allocation4 + $0x390] sm:$0xff] %v2462
      %2493 = vst [vmem:[#allocation4 + $0x398] sm:$0xff] %v2463
      %2494 = vst [vmem:[#allocation4 + $0x3a0] sm:$0xff] %v2464
      %2495 = vst [vmem:[#allocation4 + $0x3a8] sm:$0xff] %v2465
      %2496 = vst [vmem:[#allocation4 + $0x3b0] sm:$0xff] %v2466
      %2497 = vst.msk [vmem:[#allocation4 + $0x3b8] sm:$0xff] %vm2002, %v2467
      %v2498 = vld [vmem:[#allocation3 + $0x10] sm:$0xff]
      %v2499 = vld [vmem:[#allocation3 + $0x18] sm:$0xff]
      %v2500 = vld [vmem:[#allocation3 + $0x20] sm:$0xff]
      %v2501 = vld [vmem:[#allocation3 + $0x28] sm:$0xff]
      %v2502 = vld [vmem:[#allocation3 + $0x30] sm:$0xff]
      %v2503 = vld [vmem:[#allocation3 + $0x38] sm:$0xff]
      %v2504 = vld [vmem:[#allocation3 + $0x40] sm:$0xff]
      %v2505 = vld [vmem:[#allocation3 + $0x48] sm:$0xff]
      %v2506 = vld [vmem:[#allocation3 + $0x50] sm:$0xff]
      %v2507 = vld [vmem:[#allocation3 + $0x58] sm:$0xff]
      %v2508 = vld [vmem:[#allocation3 + $0x80] sm:$0xff]
      %v2509 = vld [vmem:[#allocation3 + $0x88] sm:$0xff]
      %v2510 = vld [vmem:[#allocation3 + $0x90] sm:$0xff]
      %v2511 = vld [vmem:[#allocation3 + $0x98] sm:$0xff]
      %v2512 = vld [vmem:[#allocation3 + $0xa0] sm:$0xff]
      %v2513 = vld [vmem:[#allocation3 + $0xa8] sm:$0xff]
      %v2514 = vld [vmem:[#allocation3 + $0xb0] sm:$0xff]
      %v2515 = vld [vmem:[#allocation3 + $0xb8] sm:$0xff]
      %v2516 = vld [vmem:[#allocation3 + $0xc0] sm:$0xff]
      %v2517 = vld [vmem:[#allocation3 + $0xc8] sm:$0xff]
      %v2518 = vld [vmem:[#allocation3 + $0xf0] sm:$0xff]
      %v2519 = vld [vmem:[#allocation3 + $0xf8] sm:$0xff]
      %v2520 = vld [vmem:[#allocation3 + $0x100] sm:$0xff]
      %v2521 = vld [vmem:[#allocation3 + $0x108] sm:$0xff]
      %v2522 = vld [vmem:[#allocation3 + $0x110] sm:$0xff]
      %v2523 = vld [vmem:[#allocation3 + $0x118] sm:$0xff]
      %v2524 = vld [vmem:[#allocation3 + $0x120] sm:$0xff]
      %v2525 = vld [vmem:[#allocation3 + $0x128] sm:$0xff]
      %v2526 = vld [vmem:[#allocation3 + $0x130] sm:$0xff]
      %v2527 = vld [vmem:[#allocation3 + $0x138] sm:$0xff]
      %2558 = vrot.lane.b32.xlu0 %v2498, 96
      %v2559 = vpop.permute.xlu0 %2558
      %2560 = vrot.lane.b32.xlu0 %v2499, 96
      %v2561 = vpop.permute.xlu0 %2560
      %2562 = vrot.lane.b32.xlu0 %v2500, 96
      %v2563 = vpop.permute.xlu0 %2562
      %2564 = vrot.lane.b32.xlu0 %v2501, 96
      %v2565 = vpop.permute.xlu0 %2564
      %2566 = vrot.lane.b32.xlu0 %v2502, 96
      %v2567 = vpop.permute.xlu0 %2566
      %2568 = vrot.lane.b32.xlu0 %v2503, 96
      %v2569 = vpop.permute.xlu0 %2568
      %2570 = vrot.lane.b32.xlu0 %v2504, 96
      %v2571 = vpop.permute.xlu0 %2570
      %2572 = vrot.lane.b32.xlu0 %v2505, 96
      %v2573 = vpop.permute.xlu0 %2572
      %2574 = vrot.lane.b32.xlu0 %v2506, 96
      %v2575 = vpop.permute.xlu0 %2574
      %2576 = vrot.lane.b32.xlu0 %v2507, 96
      %v2577 = vpop.permute.xlu0 %2576
      %2578 = vrot.lane.b32.xlu0 %v2508, 96
      %v2579 = vpop.permute.xlu0 %2578
      %2580 = vrot.lane.b32.xlu0 %v2509, 96
      %v2581 = vpop.permute.xlu0 %2580
      %2582 = vrot.lane.b32.xlu0 %v2510, 96
      %v2583 = vpop.permute.xlu0 %2582
      %2584 = vrot.lane.b32.xlu0 %v2511, 96
      %v2585 = vpop.permute.xlu0 %2584
      %2586 = vrot.lane.b32.xlu0 %v2512, 96
      %v2587 = vpop.permute.xlu0 %2586
      %2588 = vrot.lane.b32.xlu0 %v2513, 96
      %v2589 = vpop.permute.xlu0 %2588
      %2590 = vrot.lane.b32.xlu0 %v2514, 96
      %v2591 = vpop.permute.xlu0 %2590
      %2592 = vrot.lane.b32.xlu0 %v2515, 96
      %v2593 = vpop.permute.xlu0 %2592
      %2594 = vrot.lane.b32.xlu0 %v2516, 96
      %v2595 = vpop.permute.xlu0 %2594
      %2596 = vrot.lane.b32.xlu0 %v2517, 96
      %v2597 = vpop.permute.xlu0 %2596
      %2598 = vrot.lane.b32.xlu0 %v2518, 96
      %v2599 = vpop.permute.xlu0 %2598
      %2600 = vrot.lane.b32.xlu0 %v2519, 96
      %v2601 = vpop.permute.xlu0 %2600
      %2602 = vrot.lane.b32.xlu0 %v2520, 96
      %v2603 = vpop.permute.xlu0 %2602
      %2604 = vrot.lane.b32.xlu0 %v2521, 96
      %v2605 = vpop.permute.xlu0 %2604
      %2606 = vrot.lane.b32.xlu0 %v2522, 96
      %v2607 = vpop.permute.xlu0 %2606
      %2608 = vrot.lane.b32.xlu0 %v2523, 96
      %v2609 = vpop.permute.xlu0 %2608
      %2610 = vrot.lane.b32.xlu0 %v2524, 96
      %v2611 = vpop.permute.xlu0 %2610
      %2612 = vrot.lane.b32.xlu0 %v2525, 96
      %v2613 = vpop.permute.xlu0 %2612
      %2614 = vrot.lane.b32.xlu0 %v2526, 96
      %v2615 = vpop.permute.xlu0 %2614
      %2616 = vrot.lane.b32.xlu0 %v2527, 96
      %v2617 = vpop.permute.xlu0 %2616
      %v2618 = vsel %vm1933, %v2559, %v2561
      %v2619 = vsel %vm1933, %v2561, %v2563
      %v2620 = vsel %vm1933, %v2563, %v2565
      %v2621 = vsel %vm1933, %v2565, %v2567
      %v2622 = vsel %vm1933, %v2567, %v2569
      %v2623 = vsel %vm1933, %v2569, %v2571
      %v2624 = vsel %vm1933, %v2571, %v2573
      %v2625 = vsel %vm1933, %v2573, %v2575
      %v2626 = vsel %vm1933, %v2575, %v2577
      %v2627 = vsel %vm1933, %v2579, %v2581
      %v2628 = vsel %vm1933, %v2581, %v2583
      %v2629 = vsel %vm1933, %v2583, %v2585
      %v2630 = vsel %vm1933, %v2585, %v2587
      %v2631 = vsel %vm1933, %v2587, %v2589
      %v2632 = vsel %vm1933, %v2589, %v2591
      %v2633 = vsel %vm1933, %v2591, %v2593
      %v2634 = vsel %vm1933, %v2593, %v2595
      %v2635 = vsel %vm1933, %v2595, %v2597
      %v2636 = vsel %vm1933, %v2599, %v2601
      %v2637 = vsel %vm1933, %v2601, %v2603
      %v2638 = vsel %vm1933, %v2603, %v2605
      %v2639 = vsel %vm1933, %v2605, %v2607
      %v2640 = vsel %vm1933, %v2607, %v2609
      %v2641 = vsel %vm1933, %v2609, %v2611
      %v2642 = vsel %vm1933, %v2611, %v2613
      %v2643 = vsel %vm1933, %v2613, %v2615
      %v2644 = vsel %vm1933, %v2615, %v2617
      %2675 = vst [vmem:[#allocation4 + $0x3c0] sm:$0xff] %v2618
      %2676 = vst [vmem:[#allocation4 + $0x3c8] sm:$0xff] %v2619
      %2677 = vst [vmem:[#allocation4 + $0x3d0] sm:$0xff] %v2620
      %2678 = vst [vmem:[#allocation4 + $0x3d8] sm:$0xff] %v2621
      %2679 = vst [vmem:[#allocation4 + $0x3e0] sm:$0xff] %v2622
      %2680 = vst [vmem:[#allocation4 + $0x3e8] sm:$0xff] %v2623
      %2681 = vst [vmem:[#allocation4 + $0x3f0] sm:$0xff] %v2624
      %2682 = vst [vmem:[#allocation4 + $0x3f8] sm:$0xff] %v2625
      %2683 = vst [vmem:[#allocation4 + $0x400] sm:$0xff] %v2626
      %2684 = vst.msk [vmem:[#allocation4 + $0x408] sm:$0xff] %vm2002, %v2577
      %2685 = vst [vmem:[#allocation4 + $0x410] sm:$0xff] %v2627
      %2686 = vst [vmem:[#allocation4 + $0x418] sm:$0xff] %v2628
      %2687 = vst [vmem:[#allocation4 + $0x420] sm:$0xff] %v2629
      %2688 = vst [vmem:[#allocation4 + $0x428] sm:$0xff] %v2630
      %2689 = vst [vmem:[#allocation4 + $0x430] sm:$0xff] %v2631
      %2690 = vst [vmem:[#allocation4 + $0x438] sm:$0xff] %v2632
      %2691 = vst [vmem:[#allocation4 + $0x440] sm:$0xff] %v2633
      %2692 = vst [vmem:[#allocation4 + $0x448] sm:$0xff] %v2634
      %2693 = vst [vmem:[#allocation4 + $0x450] sm:$0xff] %v2635
      %2694 = vst.msk [vmem:[#allocation4 + $0x458] sm:$0xff] %vm2002, %v2597
      %2695 = vst [vmem:[#allocation4 + $0x460] sm:$0xff] %v2636
      %2696 = vst [vmem:[#allocation4 + $0x468] sm:$0xff] %v2637
      %2697 = vst [vmem:[#allocation4 + $0x470] sm:$0xff] %v2638
      %2698 = vst [vmem:[#allocation4 + $0x478] sm:$0xff] %v2639
      %2699 = vst [vmem:[#allocation4 + $0x480] sm:$0xff] %v2640
      %2700 = vst [vmem:[#allocation4 + $0x488] sm:$0xff] %v2641
      %2701 = vst [vmem:[#allocation4 + $0x490] sm:$0xff] %v2642
      %2702 = vst [vmem:[#allocation4 + $0x498] sm:$0xff] %v2643
      %2703 = vst [vmem:[#allocation4 + $0x4a0] sm:$0xff] %v2644
      %2704 = vst.msk [vmem:[#allocation4 + $0x4a8] sm:$0xff] %vm2002, %v2617
      %v2705 = vld [vmem:[#allocation3 + $0x10] sm:$0xff]
      %v2706 = vld [vmem:[#allocation3 + $0x18] sm:$0xff]
      %v2707 = vld [vmem:[#allocation3 + $0x20] sm:$0xff]
      %v2708 = vld [vmem:[#allocation3 + $0x28] sm:$0xff]
      %v2709 = vld [vmem:[#allocation3 + $0x30] sm:$0xff]
      %v2710 = vld [vmem:[#allocation3 + $0x38] sm:$0xff]
      %v2711 = vld [vmem:[#allocation3 + $0x40] sm:$0xff]
      %v2712 = vld [vmem:[#allocation3 + $0x48] sm:$0xff]
      %v2713 = vld [vmem:[#allocation3 + $0x50] sm:$0xff]
      %v2714 = vld [vmem:[#allocation3 + $0x58] sm:$0xff]
      %v2715 = vld [vmem:[#allocation3 + $0x80] sm:$0xff]
      %v2716 = vld [vmem:[#allocation3 + $0x88] sm:$0xff]
      %v2717 = vld [vmem:[#allocation3 + $0x90] sm:$0xff]
      %v2718 = vld [vmem:[#allocation3 + $0x98] sm:$0xff]
      %v2719 = vld [vmem:[#allocation3 + $0xa0] sm:$0xff]
      %v2720 = vld [vmem:[#allocation3 + $0xa8] sm:$0xff]
      %v2721 = vld [vmem:[#allocation3 + $0xb0] sm:$0xff]
      %v2722 = vld [vmem:[#allocation3 + $0xb8] sm:$0xff]
      %v2723 = vld [vmem:[#allocation3 + $0xc0] sm:$0xff]
      %v2724 = vld [vmem:[#allocation3 + $0xc8] sm:$0xff]
      %v2725 = vld [vmem:[#allocation3 + $0xf0] sm:$0xff]
      %v2726 = vld [vmem:[#allocation3 + $0xf8] sm:$0xff]
      %v2727 = vld [vmem:[#allocation3 + $0x100] sm:$0xff]
      %v2728 = vld [vmem:[#allocation3 + $0x108] sm:$0xff]
      %v2729 = vld [vmem:[#allocation3 + $0x110] sm:$0xff]
      %v2730 = vld [vmem:[#allocation3 + $0x118] sm:$0xff]
      %v2731 = vld [vmem:[#allocation3 + $0x120] sm:$0xff]
      %v2732 = vld [vmem:[#allocation3 + $0x128] sm:$0xff]
      %v2733 = vld [vmem:[#allocation3 + $0x130] sm:$0xff]
      %v2734 = vld [vmem:[#allocation3 + $0x138] sm:$0xff]
      %2765 = vrot.lane.b32.xlu0 %v2705, 64
      %v2766 = vpop.permute.xlu0 %2765
      %2767 = vrot.lane.b32.xlu0 %v2706, 64
      %v2768 = vpop.permute.xlu0 %2767
      %2769 = vrot.lane.b32.xlu0 %v2707, 64
      %v2770 = vpop.permute.xlu0 %2769
      %2771 = vrot.lane.b32.xlu0 %v2708, 64
      %v2772 = vpop.permute.xlu0 %2771
      %2773 = vrot.lane.b32.xlu0 %v2709, 64
      %v2774 = vpop.permute.xlu0 %2773
      %2775 = vrot.lane.b32.xlu0 %v2710, 64
      %v2776 = vpop.permute.xlu0 %2775
      %2777 = vrot.lane.b32.xlu0 %v2711, 64
      %v2778 = vpop.permute.xlu0 %2777
      %2779 = vrot.lane.b32.xlu0 %v2712, 64
      %v2780 = vpop.permute.xlu0 %2779
      %2781 = vrot.lane.b32.xlu0 %v2713, 64
      %v2782 = vpop.permute.xlu0 %2781
      %2783 = vrot.lane.b32.xlu0 %v2714, 64
      %v2784 = vpop.permute.xlu0 %2783
      %2785 = vrot.lane.b32.xlu0 %v2715, 64
      %v2786 = vpop.permute.xlu0 %2785
      %2787 = vrot.lane.b32.xlu0 %v2716, 64
      %v2788 = vpop.permute.xlu0 %2787
      %2789 = vrot.lane.b32.xlu0 %v2717, 64
      %v2790 = vpop.permute.xlu0 %2789
      %2791 = vrot.lane.b32.xlu0 %v2718, 64
      %v2792 = vpop.permute.xlu0 %2791
      %2793 = vrot.lane.b32.xlu0 %v2719, 64
      %v2794 = vpop.permute.xlu0 %2793
      %2795 = vrot.lane.b32.xlu0 %v2720, 64
      %v2796 = vpop.permute.xlu0 %2795
      %2797 = vrot.lane.b32.xlu0 %v2721, 64
      %v2798 = vpop.permute.xlu0 %2797
      %2799 = vrot.lane.b32.xlu0 %v2722, 64
      %v2800 = vpop.permute.xlu0 %2799
      %2801 = vrot.lane.b32.xlu0 %v2723, 64
      %v2802 = vpop.permute.xlu0 %2801
      %2803 = vrot.lane.b32.xlu0 %v2724, 64
      %v2804 = vpop.permute.xlu0 %2803
      %2805 = vrot.lane.b32.xlu0 %v2725, 64
      %v2806 = vpop.permute.xlu0 %2805
      %2807 = vrot.lane.b32.xlu0 %v2726, 64
      %v2808 = vpop.permute.xlu0 %2807
      %2809 = vrot.lane.b32.xlu0 %v2727, 64
      %v2810 = vpop.permute.xlu0 %2809
      %2811 = vrot.lane.b32.xlu0 %v2728, 64
      %v2812 = vpop.permute.xlu0 %2811
      %2813 = vrot.lane.b32.xlu0 %v2729, 64
      %v2814 = vpop.permute.xlu0 %2813
      %2815 = vrot.lane.b32.xlu0 %v2730, 64
      %v2816 = vpop.permute.xlu0 %2815
      %2817 = vrot.lane.b32.xlu0 %v2731, 64
      %v2818 = vpop.permute.xlu0 %2817
      %2819 = vrot.lane.b32.xlu0 %v2732, 64
      %v2820 = vpop.permute.xlu0 %2819
      %2821 = vrot.lane.b32.xlu0 %v2733, 64
      %v2822 = vpop.permute.xlu0 %2821
      %2823 = vrot.lane.b32.xlu0 %v2734, 64
      %v2824 = vpop.permute.xlu0 %2823
      %v2825 = vsel %vm1127, %v2766, %v2768
      %v2826 = vsel %vm1127, %v2768, %v2770
      %v2827 = vsel %vm1127, %v2770, %v2772
      %v2828 = vsel %vm1127, %v2772, %v2774
      %v2829 = vsel %vm1127, %v2774, %v2776
      %v2830 = vsel %vm1127, %v2776, %v2778
      %v2831 = vsel %vm1127, %v2778, %v2780
      %v2832 = vsel %vm1127, %v2780, %v2782
      %v2833 = vsel %vm1127, %v2782, %v2784
      %v2834 = vsel %vm1127, %v2786, %v2788
      %v2835 = vsel %vm1127, %v2788, %v2790
      %v2836 = vsel %vm1127, %v2790, %v2792
      %v2837 = vsel %vm1127, %v2792, %v2794
      %v2838 = vsel %vm1127, %v2794, %v2796
      %v2839 = vsel %vm1127, %v2796, %v2798
      %v2840 = vsel %vm1127, %v2798, %v2800
      %v2841 = vsel %vm1127, %v2800, %v2802
      %v2842 = vsel %vm1127, %v2802, %v2804
      %v2843 = vsel %vm1127, %v2806, %v2808
      %v2844 = vsel %vm1127, %v2808, %v2810
      %v2845 = vsel %vm1127, %v2810, %v2812
      %v2846 = vsel %vm1127, %v2812, %v2814
      %v2847 = vsel %vm1127, %v2814, %v2816
      %v2848 = vsel %vm1127, %v2816, %v2818
      %v2849 = vsel %vm1127, %v2818, %v2820
      %v2850 = vsel %vm1127, %v2820, %v2822
      %v2851 = vsel %vm1127, %v2822, %v2824
      %2882 = vst [vmem:[#allocation4 + $0x4b0] sm:$0xff] %v2825
      %2883 = vst [vmem:[#allocation4 + $0x4b8] sm:$0xff] %v2826
      %2884 = vst [vmem:[#allocation4 + $0x4c0] sm:$0xff] %v2827
      %2885 = vst [vmem:[#allocation4 + $0x4c8] sm:$0xff] %v2828
      %2886 = vst [vmem:[#allocation4 + $0x4d0] sm:$0xff] %v2829
      %2887 = vst [vmem:[#allocation4 + $0x4d8] sm:$0xff] %v2830
      %2888 = vst [vmem:[#allocation4 + $0x4e0] sm:$0xff] %v2831
      %2889 = vst [vmem:[#allocation4 + $0x4e8] sm:$0xff] %v2832
      %2890 = vst [vmem:[#allocation4 + $0x4f0] sm:$0xff] %v2833
      %2891 = vst.msk [vmem:[#allocation4 + $0x4f8] sm:$0xff] %vm2002, %v2784
      %2892 = vst [vmem:[#allocation4 + $0x500] sm:$0xff] %v2834
      %2893 = vst [vmem:[#allocation4 + $0x508] sm:$0xff] %v2835
      %2894 = vst [vmem:[#allocation4 + $0x510] sm:$0xff] %v2836
      %2895 = vst [vmem:[#allocation4 + $0x518] sm:$0xff] %v2837
      %2896 = vst [vmem:[#allocation4 + $0x520] sm:$0xff] %v2838
      %2897 = vst [vmem:[#allocation4 + $0x528] sm:$0xff] %v2839
      %2898 = vst [vmem:[#allocation4 + $0x530] sm:$0xff] %v2840
      %2899 = vst [vmem:[#allocation4 + $0x538] sm:$0xff] %v2841
      %2900 = vst [vmem:[#allocation4 + $0x540] sm:$0xff] %v2842
      %2901 = vst.msk [vmem:[#allocation4 + $0x548] sm:$0xff] %vm2002, %v2804
      %2902 = vst [vmem:[#allocation4 + $0x550] sm:$0xff] %v2843
      %2903 = vst [vmem:[#allocation4 + $0x558] sm:$0xff] %v2844
      %2904 = vst [vmem:[#allocation4 + $0x560] sm:$0xff] %v2845
      %2905 = vst [vmem:[#allocation4 + $0x568] sm:$0xff] %v2846
      %2906 = vst [vmem:[#allocation4 + $0x570] sm:$0xff] %v2847
      %2907 = vst [vmem:[#allocation4 + $0x578] sm:$0xff] %v2848
      %2908 = vst [vmem:[#allocation4 + $0x580] sm:$0xff] %v2849
      %2909 = vst [vmem:[#allocation4 + $0x588] sm:$0xff] %v2850
      %2910 = vst [vmem:[#allocation4 + $0x590] sm:$0xff] %v2851
      %2911 = vst.msk [vmem:[#allocation4 + $0x598] sm:$0xff] %vm2002, %v2824
      %v2912 = vld [vmem:[#allocation3 + $0x20] sm:$0xff]
      %v2913 = vld [vmem:[#allocation3 + $0x28] sm:$0xff]
      %v2914 = vld [vmem:[#allocation3 + $0x30] sm:$0xff]
      %v2915 = vld [vmem:[#allocation3 + $0x38] sm:$0xff]
      %v2916 = vld [vmem:[#allocation3 + $0x40] sm:$0xff]
      %v2917 = vld [vmem:[#allocation3 + $0x48] sm:$0xff]
      %v2918 = vld [vmem:[#allocation3 + $0x50] sm:$0xff]
      %v2919 = vld [vmem:[#allocation3 + $0x58] sm:$0xff]
      %v2920 = vld [vmem:[#allocation3 + $0x60] sm:$0xff]
      %v2921 = vld [vmem:[#allocation3 + $0x68] sm:$0xff]
      %v2922 = vld [vmem:[#allocation3 + $0x90] sm:$0xff]
      %v2923 = vld [vmem:[#allocation3 + $0x98] sm:$0xff]
      %v2924 = vld [vmem:[#allocation3 + $0xa0] sm:$0xff]
      %v2925 = vld [vmem:[#allocation3 + $0xa8] sm:$0xff]
      %v2926 = vld [vmem:[#allocation3 + $0xb0] sm:$0xff]
      %v2927 = vld [vmem:[#allocation3 + $0xb8] sm:$0xff]
      %v2928 = vld [vmem:[#allocation3 + $0xc0] sm:$0xff]
      %v2929 = vld [vmem:[#allocation3 + $0xc8] sm:$0xff]
      %v2930 = vld [vmem:[#allocation3 + $0xd0] sm:$0xff]
      %v2931 = vld [vmem:[#allocation3 + $0xd8] sm:$0xff]
      %v2932 = vld [vmem:[#allocation3 + $0x100] sm:$0xff]
      %v2933 = vld [vmem:[#allocation3 + $0x108] sm:$0xff]
      %v2934 = vld [vmem:[#allocation3 + $0x110] sm:$0xff]
      %v2935 = vld [vmem:[#allocation3 + $0x118] sm:$0xff]
      %v2936 = vld [vmem:[#allocation3 + $0x120] sm:$0xff]
      %v2937 = vld [vmem:[#allocation3 + $0x128] sm:$0xff]
      %v2938 = vld [vmem:[#allocation3 + $0x130] sm:$0xff]
      %v2939 = vld [vmem:[#allocation3 + $0x138] sm:$0xff]
      %v2940 = vld [vmem:[#allocation3 + $0x140] sm:$0xff]
      %v2941 = vld [vmem:[#allocation3 + $0x148] sm:$0xff]
      %2942 = vst [vmem:[#allocation4 + $0x5a0] sm:$0xff] %v2912
      %2943 = vst [vmem:[#allocation4 + $0x5a8] sm:$0xff] %v2913
      %2944 = vst [vmem:[#allocation4 + $0x5b0] sm:$0xff] %v2914
      %2945 = vst [vmem:[#allocation4 + $0x5b8] sm:$0xff] %v2915
      %2946 = vst [vmem:[#allocation4 + $0x5c0] sm:$0xff] %v2916
      %2947 = vst [vmem:[#allocation4 + $0x5c8] sm:$0xff] %v2917
      %2948 = vst [vmem:[#allocation4 + $0x5d0] sm:$0xff] %v2918
      %2949 = vst [vmem:[#allocation4 + $0x5d8] sm:$0xff] %v2919
      %2950 = vst [vmem:[#allocation4 + $0x5e0] sm:$0xff] %v2920
      %2951 = vst.msk [vmem:[#allocation4 + $0x5e8] sm:$0xff] %vm2002, %v2921
      %2952 = vst [vmem:[#allocation4 + $0x5f0] sm:$0xff] %v2922
      %2953 = vst [vmem:[#allocation4 + $0x5f8] sm:$0xff] %v2923
      %2954 = vst [vmem:[#allocation4 + $0x600] sm:$0xff] %v2924
      %2955 = vst [vmem:[#allocation4 + $0x608] sm:$0xff] %v2925
      %2956 = vst [vmem:[#allocation4 + $0x610] sm:$0xff] %v2926
      %2957 = vst [vmem:[#allocation4 + $0x618] sm:$0xff] %v2927
      %2958 = vst [vmem:[#allocation4 + $0x620] sm:$0xff] %v2928
      %2959 = vst [vmem:[#allocation4 + $0x628] sm:$0xff] %v2929
      %2960 = vst [vmem:[#allocation4 + $0x630] sm:$0xff] %v2930
      %2961 = vst.msk [vmem:[#allocation4 + $0x638] sm:$0xff] %vm2002, %v2931
      %2962 = vst [vmem:[#allocation4 + $0x640] sm:$0xff] %v2932
      %2963 = vst [vmem:[#allocation4 + $0x648] sm:$0xff] %v2933
      %2964 = vst [vmem:[#allocation4 + $0x650] sm:$0xff] %v2934
      %2965 = vst [vmem:[#allocation4 + $0x658] sm:$0xff] %v2935
      %2966 = vst [vmem:[#allocation4 + $0x660] sm:$0xff] %v2936
      %2967 = vst [vmem:[#allocation4 + $0x668] sm:$0xff] %v2937
      %2968 = vst [vmem:[#allocation4 + $0x670] sm:$0xff] %v2938
      %2969 = vst [vmem:[#allocation4 + $0x678] sm:$0xff] %v2939
      %2970 = vst [vmem:[#allocation4 + $0x680] sm:$0xff] %v2940
      %2971 = vst.msk [vmem:[#allocation4 + $0x688] sm:$0xff] %vm2002, %v2941
      %v2972 = vld [vmem:[#allocation3 + $0x20] sm:$0xff]
      %v2973 = vld [vmem:[#allocation3 + $0x28] sm:$0xff]
      %v2974 = vld [vmem:[#allocation3 + $0x30] sm:$0xff]
      %v2975 = vld [vmem:[#allocation3 + $0x38] sm:$0xff]
      %v2976 = vld [vmem:[#allocation3 + $0x40] sm:$0xff]
      %v2977 = vld [vmem:[#allocation3 + $0x48] sm:$0xff]
      %v2978 = vld [vmem:[#allocation3 + $0x50] sm:$0xff]
      %v2979 = vld [vmem:[#allocation3 + $0x58] sm:$0xff]
      %v2980 = vld [vmem:[#allocation3 + $0x60] sm:$0xff]
      %v2981 = vld [vmem:[#allocation3 + $0x68] sm:$0xff]
      %v2982 = vld [vmem:[#allocation3 + $0x90] sm:$0xff]
      %v2983 = vld [vmem:[#allocation3 + $0x98] sm:$0xff]
      %v2984 = vld [vmem:[#allocation3 + $0xa0] sm:$0xff]
      %v2985 = vld [vmem:[#allocation3 + $0xa8] sm:$0xff]
      %v2986 = vld [vmem:[#allocation3 + $0xb0] sm:$0xff]
      %v2987 = vld [vmem:[#allocation3 + $0xb8] sm:$0xff]
      %v2988 = vld [vmem:[#allocation3 + $0xc0] sm:$0xff]
      %v2989 = vld [vmem:[#allocation3 + $0xc8] sm:$0xff]
      %v2990 = vld [vmem:[#allocation3 + $0xd0] sm:$0xff]
      %v2991 = vld [vmem:[#allocation3 + $0xd8] sm:$0xff]
      %v2992 = vld [vmem:[#allocation3 + $0x100] sm:$0xff]
      %v2993 = vld [vmem:[#allocation3 + $0x108] sm:$0xff]
      %v2994 = vld [vmem:[#allocation3 + $0x110] sm:$0xff]
      %v2995 = vld [vmem:[#allocation3 + $0x118] sm:$0xff]
      %v2996 = vld [vmem:[#allocation3 + $0x120] sm:$0xff]
      %v2997 = vld [vmem:[#allocation3 + $0x128] sm:$0xff]
      %v2998 = vld [vmem:[#allocation3 + $0x130] sm:$0xff]
      %v2999 = vld [vmem:[#allocation3 + $0x138] sm:$0xff]
      %v3000 = vld [vmem:[#allocation3 + $0x140] sm:$0xff]
      %v3001 = vld [vmem:[#allocation3 + $0x148] sm:$0xff]
      %3032 = vrot.lane.b32.xlu0 %v2972, 96
      %v3033 = vpop.permute.xlu0 %3032
      %3034 = vrot.lane.b32.xlu0 %v2973, 96
      %v3035 = vpop.permute.xlu0 %3034
      %3036 = vrot.lane.b32.xlu0 %v2974, 96
      %v3037 = vpop.permute.xlu0 %3036
      %3038 = vrot.lane.b32.xlu0 %v2975, 96
      %v3039 = vpop.permute.xlu0 %3038
      %3040 = vrot.lane.b32.xlu0 %v2976, 96
      %v3041 = vpop.permute.xlu0 %3040
      %3042 = vrot.lane.b32.xlu0 %v2977, 96
      %v3043 = vpop.permute.xlu0 %3042
      %3044 = vrot.lane.b32.xlu0 %v2978, 96
      %v3045 = vpop.permute.xlu0 %3044
      %3046 = vrot.lane.b32.xlu0 %v2979, 96
      %v3047 = vpop.permute.xlu0 %3046
      %3048 = vrot.lane.b32.xlu0 %v2980, 96
      %v3049 = vpop.permute.xlu0 %3048
      %3050 = vrot.lane.b32.xlu0 %v2981, 96
      %v3051 = vpop.permute.xlu0 %3050
      %3052 = vrot.lane.b32.xlu0 %v2982, 96
      %v3053 = vpop.permute.xlu0 %3052
      %3054 = vrot.lane.b32.xlu0 %v2983, 96
      %v3055 = vpop.permute.xlu0 %3054
      %3056 = vrot.lane.b32.xlu0 %v2984, 96
      %v3057 = vpop.permute.xlu0 %3056
      %3058 = vrot.lane.b32.xlu0 %v2985, 96
      %v3059 = vpop.permute.xlu0 %3058
      %3060 = vrot.lane.b32.xlu0 %v2986, 96
      %v3061 = vpop.permute.xlu0 %3060
      %3062 = vrot.lane.b32.xlu0 %v2987, 96
      %v3063 = vpop.permute.xlu0 %3062
      %3064 = vrot.lane.b32.xlu0 %v2988, 96
      %v3065 = vpop.permute.xlu0 %3064
      %3066 = vrot.lane.b32.xlu0 %v2989, 96
      %v3067 = vpop.permute.xlu0 %3066
      %3068 = vrot.lane.b32.xlu0 %v2990, 96
      %v3069 = vpop.permute.xlu0 %3068
      %3070 = vrot.lane.b32.xlu0 %v2991, 96
      %v3071 = vpop.permute.xlu0 %3070
      %3072 = vrot.lane.b32.xlu0 %v2992, 96
      %v3073 = vpop.permute.xlu0 %3072
      %3074 = vrot.lane.b32.xlu0 %v2993, 96
      %v3075 = vpop.permute.xlu0 %3074
      %3076 = vrot.lane.b32.xlu0 %v2994, 96
      %v3077 = vpop.permute.xlu0 %3076
      %3078 = vrot.lane.b32.xlu0 %v2995, 96
      %v3079 = vpop.permute.xlu0 %3078
      %3080 = vrot.lane.b32.xlu0 %v2996, 96
      %v3081 = vpop.permute.xlu0 %3080
      %3082 = vrot.lane.b32.xlu0 %v2997, 96
      %v3083 = vpop.permute.xlu0 %3082
      %3084 = vrot.lane.b32.xlu0 %v2998, 96
      %v3085 = vpop.permute.xlu0 %3084
      %3086 = vrot.lane.b32.xlu0 %v2999, 96
      %v3087 = vpop.permute.xlu0 %3086
      %3088 = vrot.lane.b32.xlu0 %v3000, 96
      %v3089 = vpop.permute.xlu0 %3088
      %3090 = vrot.lane.b32.xlu0 %v3001, 96
      %v3091 = vpop.permute.xlu0 %3090
      %v3092 = vsel %vm1933, %v3033, %v3035
      %v3093 = vsel %vm1933, %v3035, %v3037
      %v3094 = vsel %vm1933, %v3037, %v3039
      %v3095 = vsel %vm1933, %v3039, %v3041
      %v3096 = vsel %vm1933, %v3041, %v3043
      %v3097 = vsel %vm1933, %v3043, %v3045
      %v3098 = vsel %vm1933, %v3045, %v3047
      %v3099 = vsel %vm1933, %v3047, %v3049
      %v3100 = vsel %vm1933, %v3049, %v3051
      %v3101 = vsel %vm1933, %v3053, %v3055
      %v3102 = vsel %vm1933, %v3055, %v3057
      %v3103 = vsel %vm1933, %v3057, %v3059
      %v3104 = vsel %vm1933, %v3059, %v3061
      %v3105 = vsel %vm1933, %v3061, %v3063
      %v3106 = vsel %vm1933, %v3063, %v3065
      %v3107 = vsel %vm1933, %v3065, %v3067
      %v3108 = vsel %vm1933, %v3067, %v3069
      %v3109 = vsel %vm1933, %v3069, %v3071
      %v3110 = vsel %vm1933, %v3073, %v3075
      %v3111 = vsel %vm1933, %v3075, %v3077
      %v3112 = vsel %vm1933, %v3077, %v3079
      %v3113 = vsel %vm1933, %v3079, %v3081
      %v3114 = vsel %vm1933, %v3081, %v3083
      %v3115 = vsel %vm1933, %v3083, %v3085
      %v3116 = vsel %vm1933, %v3085, %v3087
      %v3117 = vsel %vm1933, %v3087, %v3089
      %v3118 = vsel %vm1933, %v3089, %v3091
      %3149 = vst [vmem:[#allocation4 + $0x690] sm:$0xff] %v3092
      %3150 = vst [vmem:[#allocation4 + $0x698] sm:$0xff] %v3093
      %3151 = vst [vmem:[#allocation4 + $0x6a0] sm:$0xff] %v3094
      %3152 = vst [vmem:[#allocation4 + $0x6a8] sm:$0xff] %v3095
      %3153 = vst [vmem:[#allocation4 + $0x6b0] sm:$0xff] %v3096
      %3154 = vst [vmem:[#allocation4 + $0x6b8] sm:$0xff] %v3097
      %3155 = vst [vmem:[#allocation4 + $0x6c0] sm:$0xff] %v3098
      %3156 = vst [vmem:[#allocation4 + $0x6c8] sm:$0xff] %v3099
      %3157 = vst [vmem:[#allocation4 + $0x6d0] sm:$0xff] %v3100
      %3158 = vst.msk [vmem:[#allocation4 + $0x6d8] sm:$0xff] %vm2002, %v3051
      %3159 = vst [vmem:[#allocation4 + $0x6e0] sm:$0xff] %v3101
      %3160 = vst [vmem:[#allocation4 + $0x6e8] sm:$0xff] %v3102
      %3161 = vst [vmem:[#allocation4 + $0x6f0] sm:$0xff] %v3103
      %3162 = vst [vmem:[#allocation4 + $0x6f8] sm:$0xff] %v3104
      %3163 = vst [vmem:[#allocation4 + $0x700] sm:$0xff] %v3105
      %3164 = vst [vmem:[#allocation4 + $0x708] sm:$0xff] %v3106
      %3165 = vst [vmem:[#allocation4 + $0x710] sm:$0xff] %v3107
      %3166 = vst [vmem:[#allocation4 + $0x718] sm:$0xff] %v3108
      %3167 = vst [vmem:[#allocation4 + $0x720] sm:$0xff] %v3109
      %3168 = vst.msk [vmem:[#allocation4 + $0x728] sm:$0xff] %vm2002, %v3071
      %3169 = vst [vmem:[#allocation4 + $0x730] sm:$0xff] %v3110
      %3170 = vst [vmem:[#allocation4 + $0x738] sm:$0xff] %v3111
      %3171 = vst [vmem:[#allocation4 + $0x740] sm:$0xff] %v3112
      %3172 = vst [vmem:[#allocation4 + $0x748] sm:$0xff] %v3113
      %3173 = vst [vmem:[#allocation4 + $0x750] sm:$0xff] %v3114
      %3174 = vst [vmem:[#allocation4 + $0x758] sm:$0xff] %v3115
      %3175 = vst [vmem:[#allocation4 + $0x760] sm:$0xff] %v3116
      %3176 = vst [vmem:[#allocation4 + $0x768] sm:$0xff] %v3117
      %3177 = vst [vmem:[#allocation4 + $0x770] sm:$0xff] %v3118
      %3178 = vst.msk [vmem:[#allocation4 + $0x778] sm:$0xff] %vm2002, %v3091
      %v3179 = vld [vmem:[#allocation3 + $0x20] sm:$0xff]
      %v3180 = vld [vmem:[#allocation3 + $0x28] sm:$0xff]
      %v3181 = vld [vmem:[#allocation3 + $0x30] sm:$0xff]
      %v3182 = vld [vmem:[#allocation3 + $0x38] sm:$0xff]
      %v3183 = vld [vmem:[#allocation3 + $0x40] sm:$0xff]
      %v3184 = vld [vmem:[#allocation3 + $0x48] sm:$0xff]
      %v3185 = vld [vmem:[#allocation3 + $0x50] sm:$0xff]
      %v3186 = vld [vmem:[#allocation3 + $0x58] sm:$0xff]
      %v3187 = vld [vmem:[#allocation3 + $0x60] sm:$0xff]
      %v3188 = vld [vmem:[#allocation3 + $0x68] sm:$0xff]
      %v3189 = vld [vmem:[#allocation3 + $0x90] sm:$0xff]
      %v3190 = vld [vmem:[#allocation3 + $0x98] sm:$0xff]
      %v3191 = vld [vmem:[#allocation3 + $0xa0] sm:$0xff]
      %v3192 = vld [vmem:[#allocation3 + $0xa8] sm:$0xff]
      %v3193 = vld [vmem:[#allocation3 + $0xb0] sm:$0xff]
      %v3194 = vld [vmem:[#allocation3 + $0xb8] sm:$0xff]
      %v3195 = vld [vmem:[#allocation3 + $0xc0] sm:$0xff]
      %v3196 = vld [vmem:[#allocation3 + $0xc8] sm:$0xff]
      %v3197 = vld [vmem:[#allocation3 + $0xd0] sm:$0xff]
      %v3198 = vld [vmem:[#allocation3 + $0xd8] sm:$0xff]
      %v3199 = vld [vmem:[#allocation3 + $0x100] sm:$0xff]
      %v3200 = vld [vmem:[#allocation3 + $0x108] sm:$0xff]
      %v3201 = vld [vmem:[#allocation3 + $0x110] sm:$0xff]
      %v3202 = vld [vmem:[#allocation3 + $0x118] sm:$0xff]
      %v3203 = vld [vmem:[#allocation3 + $0x120] sm:$0xff]
      %v3204 = vld [vmem:[#allocation3 + $0x128] sm:$0xff]
      %v3205 = vld [vmem:[#allocation3 + $0x130] sm:$0xff]
      %v3206 = vld [vmem:[#allocation3 + $0x138] sm:$0xff]
      %v3207 = vld [vmem:[#allocation3 + $0x140] sm:$0xff]
      %v3208 = vld [vmem:[#allocation3 + $0x148] sm:$0xff]
      %3239 = vrot.lane.b32.xlu0 %v3179, 64
      %v3240 = vpop.permute.xlu0 %3239
      %3241 = vrot.lane.b32.xlu0 %v3180, 64
      %v3242 = vpop.permute.xlu0 %3241
      %3243 = vrot.lane.b32.xlu0 %v3181, 64
      %v3244 = vpop.permute.xlu0 %3243
      %3245 = vrot.lane.b32.xlu0 %v3182, 64
      %v3246 = vpop.permute.xlu0 %3245
      %3247 = vrot.lane.b32.xlu0 %v3183, 64
      %v3248 = vpop.permute.xlu0 %3247
      %3249 = vrot.lane.b32.xlu0 %v3184, 64
      %v3250 = vpop.permute.xlu0 %3249
      %3251 = vrot.lane.b32.xlu0 %v3185, 64
      %v3252 = vpop.permute.xlu0 %3251
      %3253 = vrot.lane.b32.xlu0 %v3186, 64
      %v3254 = vpop.permute.xlu0 %3253
      %3255 = vrot.lane.b32.xlu0 %v3187, 64
      %v3256 = vpop.permute.xlu0 %3255
      %3257 = vrot.lane.b32.xlu0 %v3188, 64
      %v3258 = vpop.permute.xlu0 %3257
      %3259 = vrot.lane.b32.xlu0 %v3189, 64
      %v3260 = vpop.permute.xlu0 %3259
      %3261 = vrot.lane.b32.xlu0 %v3190, 64
      %v3262 = vpop.permute.xlu0 %3261
      %3263 = vrot.lane.b32.xlu0 %v3191, 64
      %v3264 = vpop.permute.xlu0 %3263
      %3265 = vrot.lane.b32.xlu0 %v3192, 64
      %v3266 = vpop.permute.xlu0 %3265
      %3267 = vrot.lane.b32.xlu0 %v3193, 64
      %v3268 = vpop.permute.xlu0 %3267
      %3269 = vrot.lane.b32.xlu0 %v3194, 64
      %v3270 = vpop.permute.xlu0 %3269
      %3271 = vrot.lane.b32.xlu0 %v3195, 64
      %v3272 = vpop.permute.xlu0 %3271
      %3273 = vrot.lane.b32.xlu0 %v3196, 64
      %v3274 = vpop.permute.xlu0 %3273
      %3275 = vrot.lane.b32.xlu0 %v3197, 64
      %v3276 = vpop.permute.xlu0 %3275
      %3277 = vrot.lane.b32.xlu0 %v3198, 64
      %v3278 = vpop.permute.xlu0 %3277
      %3279 = vrot.lane.b32.xlu0 %v3199, 64
      %v3280 = vpop.permute.xlu0 %3279
      %3281 = vrot.lane.b32.xlu0 %v3200, 64
      %v3282 = vpop.permute.xlu0 %3281
      %3283 = vrot.lane.b32.xlu0 %v3201, 64
      %v3284 = vpop.permute.xlu0 %3283
      %3285 = vrot.lane.b32.xlu0 %v3202, 64
      %v3286 = vpop.permute.xlu0 %3285
      %3287 = vrot.lane.b32.xlu0 %v3203, 64
      %v3288 = vpop.permute.xlu0 %3287
      %3289 = vrot.lane.b32.xlu0 %v3204, 64
      %v3290 = vpop.permute.xlu0 %3289
      %3291 = vrot.lane.b32.xlu0 %v3205, 64
      %v3292 = vpop.permute.xlu0 %3291
      %3293 = vrot.lane.b32.xlu0 %v3206, 64
      %v3294 = vpop.permute.xlu0 %3293
      %3295 = vrot.lane.b32.xlu0 %v3207, 64
      %v3296 = vpop.permute.xlu0 %3295
      %3297 = vrot.lane.b32.xlu0 %v3208, 64
      %v3298 = vpop.permute.xlu0 %3297
      %v3299 = vsel %vm1127, %v3240, %v3242
      %v3300 = vsel %vm1127, %v3242, %v3244
      %v3301 = vsel %vm1127, %v3244, %v3246
      %v3302 = vsel %vm1127, %v3246, %v3248
      %v3303 = vsel %vm1127, %v3248, %v3250
      %v3304 = vsel %vm1127, %v3250, %v3252
      %v3305 = vsel %vm1127, %v3252, %v3254
      %v3306 = vsel %vm1127, %v3254, %v3256
      %v3307 = vsel %vm1127, %v3256, %v3258
      %v3308 = vsel %vm1127, %v3260, %v3262
      %v3309 = vsel %vm1127, %v3262, %v3264
      %v3310 = vsel %vm1127, %v3264, %v3266
      %v3311 = vsel %vm1127, %v3266, %v3268
      %v3312 = vsel %vm1127, %v3268, %v3270
      %v3313 = vsel %vm1127, %v3270, %v3272
      %v3314 = vsel %vm1127, %v3272, %v3274
      %v3315 = vsel %vm1127, %v3274, %v3276
      %v3316 = vsel %vm1127, %v3276, %v3278
      %v3317 = vsel %vm1127, %v3280, %v3282
      %v3318 = vsel %vm1127, %v3282, %v3284
      %v3319 = vsel %vm1127, %v3284, %v3286
      %v3320 = vsel %vm1127, %v3286, %v3288
      %v3321 = vsel %vm1127, %v3288, %v3290
      %v3322 = vsel %vm1127, %v3290, %v3292
      %v3323 = vsel %vm1127, %v3292, %v3294
      %v3324 = vsel %vm1127, %v3294, %v3296
      %v3325 = vsel %vm1127, %v3296, %v3298
      %3356 = vst [vmem:[#allocation4 + $0x780] sm:$0xff] %v3299
      %3357 = vst [vmem:[#allocation4 + $0x788] sm:$0xff] %v3300
      %3358 = vst [vmem:[#allocation4 + $0x790] sm:$0xff] %v3301
      %3359 = vst [vmem:[#allocation4 + $0x798] sm:$0xff] %v3302
      %3360 = vst [vmem:[#allocation4 + $0x7a0] sm:$0xff] %v3303
      %3361 = vst [vmem:[#allocation4 + $0x7a8] sm:$0xff] %v3304
      %3362 = vst [vmem:[#allocation4 + $0x7b0] sm:$0xff] %v3305
      %3363 = vst [vmem:[#allocation4 + $0x7b8] sm:$0xff] %v3306
      %3364 = vst [vmem:[#allocation4 + $0x7c0] sm:$0xff] %v3307
      %3365 = vst.msk [vmem:[#allocation4 + $0x7c8] sm:$0xff] %vm2002, %v3258
      %3366 = vst [vmem:[#allocation4 + $0x7d0] sm:$0xff] %v3308
      %3367 = vst [vmem:[#allocation4 + $0x7d8] sm:$0xff] %v3309
      %3368 = vst [vmem:[#allocation4 + $0x7e0] sm:$0xff] %v3310
      %3369 = vst [vmem:[#allocation4 + $0x7e8] sm:$0xff] %v3311
      %3370 = vst [vmem:[#allocation4 + $0x7f0] sm:$0xff] %v3312
      %3371 = vst [vmem:[#allocation4 + $0x7f8] sm:$0xff] %v3313
      %3372 = vst [vmem:[#allocation4 + $0x800] sm:$0xff] %v3314
      %3373 = vst [vmem:[#allocation4 + $0x808] sm:$0xff] %v3315
      %3374 = vst [vmem:[#allocation4 + $0x810] sm:$0xff] %v3316
      %3375 = vst.msk [vmem:[#allocation4 + $0x818] sm:$0xff] %vm2002, %v3278
      %3376 = vst [vmem:[#allocation4 + $0x820] sm:$0xff] %v3317
      %3377 = vst [vmem:[#allocation4 + $0x828] sm:$0xff] %v3318
      %3378 = vst [vmem:[#allocation4 + $0x830] sm:$0xff] %v3319
      %3379 = vst [vmem:[#allocation4 + $0x838] sm:$0xff] %v3320
      %3380 = vst [vmem:[#allocation4 + $0x840] sm:$0xff] %v3321
      %3381 = vst [vmem:[#allocation4 + $0x848] sm:$0xff] %v3322
      %3382 = vst [vmem:[#allocation4 + $0x850] sm:$0xff] %v3323
      %3383 = vst [vmem:[#allocation4 + $0x858] sm:$0xff] %v3324
      %3384 = vst [vmem:[#allocation4 + $0x860] sm:$0xff] %v3325
      %3385 = vst.msk [vmem:[#allocation4 + $0x868] sm:$0xff] %vm2002, %v3298
      %v3386 = vld [vmem:[%s3] sm:$0xff]
      %v3387 = vld [vmem:[%s3 + $0x8] sm:$0xff]
      %v3388 = vld [vmem:[%s3 + $0x10] sm:$0xff]
      %v3389 = vld [vmem:[%s3 + $0x18] sm:$0xff]
      %v3390 = vld [vmem:[%s3 + $0x20] sm:$0xff]
      %v3391 = vld [vmem:[%s3 + $0x28] sm:$0xff]
      %v3392 = vld [vmem:[%s3 + $0x30] sm:$0xff]
      %v3393 = vld [vmem:[%s3 + $0x38] sm:$0xff]
      %v3394 = vld [vmem:[#allocation4] sm:$0xff]
      %v3395 = vld [vmem:[#allocation4 + $0x8] sm:$0xff]
      %v3396 = vld [vmem:[#allocation4 + $0x10] sm:$0xff]
      %v3397 = vld [vmem:[#allocation4 + $0x18] sm:$0xff]
      %v3398 = vld [vmem:[#allocation4 + $0x20] sm:$0xff]
      %v3399 = vld [vmem:[#allocation4 + $0x28] sm:$0xff]
      %v3400 = vld [vmem:[#allocation4 + $0x30] sm:$0xff]
      %v3401 = vld [vmem:[#allocation4 + $0x38] sm:$0xff]
      %v3402 = vld [vmem:[#allocation4 + $0x40] sm:$0xff]
      %v3403 = vld [vmem:[#allocation4 + $0x48] sm:$0xff]
      %v3404 = vld [vmem:[#allocation4 + $0x50] sm:$0xff]
      %v3405 = vld [vmem:[#allocation4 + $0x58] sm:$0xff]
      %v3406 = vld [vmem:[#allocation4 + $0x60] sm:$0xff]
      %v3407 = vld [vmem:[#allocation4 + $0x68] sm:$0xff]
      %v3408 = vld [vmem:[#allocation4 + $0x70] sm:$0xff]
      %v3409 = vld [vmem:[#allocation4 + $0x78] sm:$0xff]
      %v3410 = vld [vmem:[#allocation4 + $0x80] sm:$0xff]
      %v3411 = vld [vmem:[#allocation4 + $0x88] sm:$0xff]
      %v3412 = vld [vmem:[#allocation4 + $0x90] sm:$0xff]
      %v3413 = vld [vmem:[#allocation4 + $0x98] sm:$0xff]
      %v3414 = vld [vmem:[#allocation4 + $0xa0] sm:$0xff]
      %v3415 = vld [vmem:[#allocation4 + $0xa8] sm:$0xff]
      %v3416 = vld [vmem:[#allocation4 + $0xb0] sm:$0xff]
      %v3417 = vld [vmem:[#allocation4 + $0xb8] sm:$0xff]
      %v3418 = vld [vmem:[#allocation4 + $0xc0] sm:$0xff]
      %v3419 = vld [vmem:[#allocation4 + $0xc8] sm:$0xff]
      %v3420 = vld [vmem:[#allocation4 + $0xd0] sm:$0xff]
      %v3421 = vld [vmem:[#allocation4 + $0xd8] sm:$0xff]
      %v3422 = vld [vmem:[#allocation4 + $0xe0] sm:$0xff]
      %v3423 = vld [vmem:[#allocation4 + $0xe8] sm:$0xff]
      %v3424 = vld [vmem:[#allocation4 + $0xf0] sm:$0xff]
      %v3425 = vld [vmem:[#allocation4 + $0xf8] sm:$0xff]
      %v3426 = vld [vmem:[#allocation4 + $0x100] sm:$0xff]
      %v3427 = vld [vmem:[#allocation4 + $0x108] sm:$0xff]
      %v3428 = vld [vmem:[#allocation4 + $0x110] sm:$0xff]
      %v3429 = vld [vmem:[#allocation4 + $0x118] sm:$0xff]
      %v3430 = vld [vmem:[#allocation4 + $0x120] sm:$0xff]
      %v3431 = vld [vmem:[#allocation4 + $0x128] sm:$0xff]
      %v3432 = vld [vmem:[#allocation4 + $0x130] sm:$0xff]
      %v3433 = vld [vmem:[#allocation4 + $0x138] sm:$0xff]
      %v3434 = vld [vmem:[#allocation4 + $0x140] sm:$0xff]
      %v3435 = vld [vmem:[#allocation4 + $0x148] sm:$0xff]
      %v3436 = vld [vmem:[#allocation4 + $0x150] sm:$0xff]
      %v3437 = vld [vmem:[#allocation4 + $0x158] sm:$0xff]
      %v3438 = vld [vmem:[#allocation4 + $0x160] sm:$0xff]
      %v3439 = vld [vmem:[#allocation4 + $0x168] sm:$0xff]
      %v3440 = vld [vmem:[#allocation4 + $0x170] sm:$0xff]
      %v3441 = vld [vmem:[#allocation4 + $0x178] sm:$0xff]
      %v3442 = vld [vmem:[#allocation4 + $0x180] sm:$0xff]
      %v3443 = vld [vmem:[#allocation4 + $0x188] sm:$0xff]
      %v3444 = vld [vmem:[#allocation4 + $0x190] sm:$0xff]
      %v3445 = vld [vmem:[#allocation4 + $0x198] sm:$0xff]
      %v3446 = vld [vmem:[#allocation4 + $0x1a0] sm:$0xff]
      %v3447 = vld [vmem:[#allocation4 + $0x1a8] sm:$0xff]
      %v3448 = vld [vmem:[#allocation4 + $0x1b0] sm:$0xff]
      %v3449 = vld [vmem:[#allocation4 + $0x1b8] sm:$0xff]
      %v3450 = vld [vmem:[#allocation4 + $0x1c0] sm:$0xff]
      %v3451 = vld [vmem:[#allocation4 + $0x1c8] sm:$0xff]
      %v3452 = vld [vmem:[#allocation4 + $0x1d0] sm:$0xff]
      %v3453 = vld [vmem:[#allocation4 + $0x1d8] sm:$0xff]
      %v3454 = vld [vmem:[#allocation4 + $0x1e0] sm:$0xff]
      %v3455 = vld [vmem:[#allocation4 + $0x1e8] sm:$0xff]
      %v3456 = vld [vmem:[#allocation4 + $0x1f0] sm:$0xff]
      %v3457 = vld [vmem:[#allocation4 + $0x1f8] sm:$0xff]
      %v3458 = vld [vmem:[#allocation4 + $0x200] sm:$0xff]
      %v3459 = vld [vmem:[#allocation4 + $0x208] sm:$0xff]
      %v3460 = vld [vmem:[#allocation4 + $0x210] sm:$0xff]
      %v3461 = vld [vmem:[#allocation4 + $0x218] sm:$0xff]
      %v3462 = vld [vmem:[#allocation4 + $0x220] sm:$0xff]
      %v3463 = vld [vmem:[#allocation4 + $0x228] sm:$0xff]
      %v3464 = vld [vmem:[#allocation4 + $0x230] sm:$0xff]
      %v3465 = vld [vmem:[#allocation4 + $0x238] sm:$0xff]
      %v3466 = vld [vmem:[#allocation4 + $0x240] sm:$0xff]
      %v3467 = vld [vmem:[#allocation4 + $0x248] sm:$0xff]
      %v3468 = vld [vmem:[#allocation4 + $0x250] sm:$0xff]
      %v3469 = vld [vmem:[#allocation4 + $0x258] sm:$0xff]
      %v3470 = vld [vmem:[#allocation4 + $0x260] sm:$0xff]
      %v3471 = vld [vmem:[#allocation4 + $0x268] sm:$0xff]
      %v3472 = vld [vmem:[#allocation4 + $0x270] sm:$0xff]
      %v3473 = vld [vmem:[#allocation4 + $0x278] sm:$0xff]
      %v3474 = vld [vmem:[#allocation4 + $0x280] sm:$0xff]
      %v3475 = vld [vmem:[#allocation4 + $0x288] sm:$0xff]
      %v3476 = vld [vmem:[#allocation4 + $0x290] sm:$0xff]
      %v3477 = vld [vmem:[#allocation4 + $0x298] sm:$0xff]
      %v3478 = vld [vmem:[#allocation4 + $0x2a0] sm:$0xff]
      %v3479 = vld [vmem:[#allocation4 + $0x2a8] sm:$0xff]
      %v3480 = vld [vmem:[#allocation4 + $0x2b0] sm:$0xff]
      %v3481 = vld [vmem:[#allocation4 + $0x2b8] sm:$0xff]
      %v3482 = vld [vmem:[#allocation4 + $0x2c0] sm:$0xff]
      %v3483 = vld [vmem:[#allocation4 + $0x2c8] sm:$0xff]
      %v3484 = vld [vmem:[#allocation4 + $0x2d0] sm:$0xff]
      %v3485 = vld [vmem:[#allocation4 + $0x2d8] sm:$0xff]
      %v3486 = vld [vmem:[#allocation4 + $0x2e0] sm:$0xff]
      %v3487 = vld [vmem:[#allocation4 + $0x2e8] sm:$0xff]
      %v3488 = vld [vmem:[#allocation4 + $0x2f0] sm:$0xff]
      %v3489 = vld [vmem:[#allocation4 + $0x2f8] sm:$0xff]
      %v3490 = vld [vmem:[#allocation4 + $0x300] sm:$0xff]
      %v3491 = vld [vmem:[#allocation4 + $0x308] sm:$0xff]
      %v3492 = vld [vmem:[#allocation4 + $0x310] sm:$0xff]
      %v3493 = vld [vmem:[#allocation4 + $0x318] sm:$0xff]
      %v3494 = vld [vmem:[#allocation4 + $0x320] sm:$0xff]
      %v3495 = vld [vmem:[#allocation4 + $0x328] sm:$0xff]
      %v3496 = vld [vmem:[#allocation4 + $0x330] sm:$0xff]
      %v3497 = vld [vmem:[#allocation4 + $0x338] sm:$0xff]
      %v3498 = vld [vmem:[#allocation4 + $0x340] sm:$0xff]
      %v3499 = vld [vmem:[#allocation4 + $0x348] sm:$0xff]
      %v3500 = vld [vmem:[#allocation4 + $0x350] sm:$0xff]
      %v3501 = vld [vmem:[#allocation4 + $0x358] sm:$0xff]
      %v3502 = vld [vmem:[#allocation4 + $0x360] sm:$0xff]
      %v3503 = vld [vmem:[#allocation4 + $0x368] sm:$0xff]
      %v3504 = vld [vmem:[#allocation4 + $0x370] sm:$0xff]
      %v3505 = vld [vmem:[#allocation4 + $0x378] sm:$0xff]
      %v3506 = vld [vmem:[#allocation4 + $0x380] sm:$0xff]
      %v3507 = vld [vmem:[#allocation4 + $0x388] sm:$0xff]
      %v3508 = vld [vmem:[#allocation4 + $0x390] sm:$0xff]
      %v3509 = vld [vmem:[#allocation4 + $0x398] sm:$0xff]
      %v3510 = vld [vmem:[#allocation4 + $0x3a0] sm:$0xff]
      %v3511 = vld [vmem:[#allocation4 + $0x3a8] sm:$0xff]
      %v3512 = vld [vmem:[#allocation4 + $0x3b0] sm:$0xff]
      %v3513 = vld [vmem:[#allocation4 + $0x3b8] sm:$0xff]
      %v3514 = vld [vmem:[#allocation4 + $0x3c0] sm:$0xff]
      %v3515 = vld [vmem:[#allocation4 + $0x3c8] sm:$0xff]
      %v3516 = vld [vmem:[#allocation4 + $0x3d0] sm:$0xff]
      %v3517 = vld [vmem:[#allocation4 + $0x3d8] sm:$0xff]
      %v3518 = vld [vmem:[#allocation4 + $0x3e0] sm:$0xff]
      %v3519 = vld [vmem:[#allocation4 + $0x3e8] sm:$0xff]
      %v3520 = vld [vmem:[#allocation4 + $0x3f0] sm:$0xff]
      %v3521 = vld [vmem:[#allocation4 + $0x3f8] sm:$0xff]
      %v3522 = vld [vmem:[#allocation4 + $0x400] sm:$0xff]
      %v3523 = vld [vmem:[#allocation4 + $0x408] sm:$0xff]
      %v3524 = vld [vmem:[#allocation4 + $0x410] sm:$0xff]
      %v3525 = vld [vmem:[#allocation4 + $0x418] sm:$0xff]
      %v3526 = vld [vmem:[#allocation4 + $0x420] sm:$0xff]
      %v3527 = vld [vmem:[#allocation4 + $0x428] sm:$0xff]
      %v3528 = vld [vmem:[#allocation4 + $0x430] sm:$0xff]
      %v3529 = vld [vmem:[#allocation4 + $0x438] sm:$0xff]
      %v3530 = vld [vmem:[#allocation4 + $0x440] sm:$0xff]
      %v3531 = vld [vmem:[#allocation4 + $0x448] sm:$0xff]
      %v3532 = vld [vmem:[#allocation4 + $0x450] sm:$0xff]
      %v3533 = vld [vmem:[#allocation4 + $0x458] sm:$0xff]
      %v3534 = vld [vmem:[#allocation4 + $0x460] sm:$0xff]
      %v3535 = vld [vmem:[#allocation4 + $0x468] sm:$0xff]
      %v3536 = vld [vmem:[#allocation4 + $0x470] sm:$0xff]
      %v3537 = vld [vmem:[#allocation4 + $0x478] sm:$0xff]
      %v3538 = vld [vmem:[#allocation4 + $0x480] sm:$0xff]
      %v3539 = vld [vmem:[#allocation4 + $0x488] sm:$0xff]
      %v3540 = vld [vmem:[#allocation4 + $0x490] sm:$0xff]
      %v3541 = vld [vmem:[#allocation4 + $0x498] sm:$0xff]
      %v3542 = vld [vmem:[#allocation4 + $0x4a0] sm:$0xff]
      %v3543 = vld [vmem:[#allocation4 + $0x4a8] sm:$0xff]
      %v3544 = vld [vmem:[#allocation4 + $0x4b0] sm:$0xff]
      %v3545 = vld [vmem:[#allocation4 + $0x4b8] sm:$0xff]
      %v3546 = vld [vmem:[#allocation4 + $0x4c0] sm:$0xff]
      %v3547 = vld [vmem:[#allocation4 + $0x4c8] sm:$0xff]
      %v3548 = vld [vmem:[#allocation4 + $0x4d0] sm:$0xff]
      %v3549 = vld [vmem:[#allocation4 + $0x4d8] sm:$0xff]
      %v3550 = vld [vmem:[#allocation4 + $0x4e0] sm:$0xff]
      %v3551 = vld [vmem:[#allocation4 + $0x4e8] sm:$0xff]
      %v3552 = vld [vmem:[#allocation4 + $0x4f0] sm:$0xff]
      %v3553 = vld [vmem:[#allocation4 + $0x4f8] sm:$0xff]
      %v3554 = vld [vmem:[#allocation4 + $0x500] sm:$0xff]
      %v3555 = vld [vmem:[#allocation4 + $0x508] sm:$0xff]
      %v3556 = vld [vmem:[#allocation4 + $0x510] sm:$0xff]
      %v3557 = vld [vmem:[#allocation4 + $0x518] sm:$0xff]
      %v3558 = vld [vmem:[#allocation4 + $0x520] sm:$0xff]
      %v3559 = vld [vmem:[#allocation4 + $0x528] sm:$0xff]
      %v3560 = vld [vmem:[#allocation4 + $0x530] sm:$0xff]
      %v3561 = vld [vmem:[#allocation4 + $0x538] sm:$0xff]
      %v3562 = vld [vmem:[#allocation4 + $0x540] sm:$0xff]
      %v3563 = vld [vmem:[#allocation4 + $0x548] sm:$0xff]
      %v3564 = vld [vmem:[#allocation4 + $0x550] sm:$0xff]
      %v3565 = vld [vmem:[#allocation4 + $0x558] sm:$0xff]
      %v3566 = vld [vmem:[#allocation4 + $0x560] sm:$0xff]
      %v3567 = vld [vmem:[#allocation4 + $0x568] sm:$0xff]
      %v3568 = vld [vmem:[#allocation4 + $0x570] sm:$0xff]
      %v3569 = vld [vmem:[#allocation4 + $0x578] sm:$0xff]
      %v3570 = vld [vmem:[#allocation4 + $0x580] sm:$0xff]
      %v3571 = vld [vmem:[#allocation4 + $0x588] sm:$0xff]
      %v3572 = vld [vmem:[#allocation4 + $0x590] sm:$0xff]
      %v3573 = vld [vmem:[#allocation4 + $0x598] sm:$0xff]
      %v3574 = vld [vmem:[#allocation4 + $0x5a0] sm:$0xff]
      %v3575 = vld [vmem:[#allocation4 + $0x5a8] sm:$0xff]
      %v3576 = vld [vmem:[#allocation4 + $0x5b0] sm:$0xff]
      %v3577 = vld [vmem:[#allocation4 + $0x5b8] sm:$0xff]
      %v3578 = vld [vmem:[#allocation4 + $0x5c0] sm:$0xff]
      %v3579 = vld [vmem:[#allocation4 + $0x5c8] sm:$0xff]
      %v3580 = vld [vmem:[#allocation4 + $0x5d0] sm:$0xff]
      %v3581 = vld [vmem:[#allocation4 + $0x5d8] sm:$0xff]
      %v3582 = vld [vmem:[#allocation4 + $0x5e0] sm:$0xff]
      %v3583 = vld [vmem:[#allocation4 + $0x5e8] sm:$0xff]
      %v3584 = vld [vmem:[#allocation4 + $0x5f0] sm:$0xff]
      %v3585 = vld [vmem:[#allocation4 + $0x5f8] sm:$0xff]
      %v3586 = vld [vmem:[#allocation4 + $0x600] sm:$0xff]
      %v3587 = vld [vmem:[#allocation4 + $0x608] sm:$0xff]
      %v3588 = vld [vmem:[#allocation4 + $0x610] sm:$0xff]
      %v3589 = vld [vmem:[#allocation4 + $0x618] sm:$0xff]
      %v3590 = vld [vmem:[#allocation4 + $0x620] sm:$0xff]
      %v3591 = vld [vmem:[#allocation4 + $0x628] sm:$0xff]
      %v3592 = vld [vmem:[#allocation4 + $0x630] sm:$0xff]
      %v3593 = vld [vmem:[#allocation4 + $0x638] sm:$0xff]
      %v3594 = vld [vmem:[#allocation4 + $0x640] sm:$0xff]
      %v3595 = vld [vmem:[#allocation4 + $0x648] sm:$0xff]
      %v3596 = vld [vmem:[#allocation4 + $0x650] sm:$0xff]
      %v3597 = vld [vmem:[#allocation4 + $0x658] sm:$0xff]
      %v3598 = vld [vmem:[#allocation4 + $0x660] sm:$0xff]
      %v3599 = vld [vmem:[#allocation4 + $0x668] sm:$0xff]
      %v3600 = vld [vmem:[#allocation4 + $0x670] sm:$0xff]
      %v3601 = vld [vmem:[#allocation4 + $0x678] sm:$0xff]
      %v3602 = vld [vmem:[#allocation4 + $0x680] sm:$0xff]
      %v3603 = vld [vmem:[#allocation4 + $0x688] sm:$0xff]
      %v3604 = vld [vmem:[#allocation4 + $0x690] sm:$0xff]
      %v3605 = vld [vmem:[#allocation4 + $0x698] sm:$0xff]
      %v3606 = vld [vmem:[#allocation4 + $0x6a0] sm:$0xff]
      %v3607 = vld [vmem:[#allocation4 + $0x6a8] sm:$0xff]
      %v3608 = vld [vmem:[#allocation4 + $0x6b0] sm:$0xff]
      %v3609 = vld [vmem:[#allocation4 + $0x6b8] sm:$0xff]
      %v3610 = vld [vmem:[#allocation4 + $0x6c0] sm:$0xff]
      %v3611 = vld [vmem:[#allocation4 + $0x6c8] sm:$0xff]
      %v3612 = vld [vmem:[#allocation4 + $0x6d0] sm:$0xff]
      %v3613 = vld [vmem:[#allocation4 + $0x6d8] sm:$0xff]
      %v3614 = vld [vmem:[#allocation4 + $0x6e0] sm:$0xff]
      %v3615 = vld [vmem:[#allocation4 + $0x6e8] sm:$0xff]
      %v3616 = vld [vmem:[#allocation4 + $0x6f0] sm:$0xff]
      %v3617 = vld [vmem:[#allocation4 + $0x6f8] sm:$0xff]
      %v3618 = vld [vmem:[#allocation4 + $0x700] sm:$0xff]
      %v3619 = vld [vmem:[#allocation4 + $0x708] sm:$0xff]
      %v3620 = vld [vmem:[#allocation4 + $0x710] sm:$0xff]
      %v3621 = vld [vmem:[#allocation4 + $0x718] sm:$0xff]
      %v3622 = vld [vmem:[#allocation4 + $0x720] sm:$0xff]
      %v3623 = vld [vmem:[#allocation4 + $0x728] sm:$0xff]
      %v3624 = vld [vmem:[#allocation4 + $0x730] sm:$0xff]
      %v3625 = vld [vmem:[#allocation4 + $0x738] sm:$0xff]
      %v3626 = vld [vmem:[#allocation4 + $0x740] sm:$0xff]
      %v3627 = vld [vmem:[#allocation4 + $0x748] sm:$0xff]
      %v3628 = vld [vmem:[#allocation4 + $0x750] sm:$0xff]
      %v3629 = vld [vmem:[#allocation4 + $0x758] sm:$0xff]
      %v3630 = vld [vmem:[#allocation4 + $0x760] sm:$0xff]
      %v3631 = vld [vmem:[#allocation4 + $0x768] sm:$0xff]
      %v3632 = vld [vmem:[#allocation4 + $0x770] sm:$0xff]
      %v3633 = vld [vmem:[#allocation4 + $0x778] sm:$0xff]
      %v3634 = vld [vmem:[#allocation4 + $0x780] sm:$0xff]
      %v3635 = vld [vmem:[#allocation4 + $0x788] sm:$0xff]
      %v3636 = vld [vmem:[#allocation4 + $0x790] sm:$0xff]
      %v3637 = vld [vmem:[#allocation4 + $0x798] sm:$0xff]
      %v3638 = vld [vmem:[#allocation4 + $0x7a0] sm:$0xff]
      %v3639 = vld [vmem:[#allocation4 + $0x7a8] sm:$0xff]
      %v3640 = vld [vmem:[#allocation4 + $0x7b0] sm:$0xff]
      %v3641 = vld [vmem:[#allocation4 + $0x7b8] sm:$0xff]
      %v3642 = vld [vmem:[#allocation4 + $0x7c0] sm:$0xff]
      %v3643 = vld [vmem:[#allocation4 + $0x7c8] sm:$0xff]
      %v3644 = vld [vmem:[#allocation4 + $0x7d0] sm:$0xff]
      %v3645 = vld [vmem:[#allocation4 + $0x7d8] sm:$0xff]
      %v3646 = vld [vmem:[#allocation4 + $0x7e0] sm:$0xff]
      %v3647 = vld [vmem:[#allocation4 + $0x7e8] sm:$0xff]
      %v3648 = vld [vmem:[#allocation4 + $0x7f0] sm:$0xff]
      %v3649 = vld [vmem:[#allocation4 + $0x7f8] sm:$0xff]
      %v3650 = vld [vmem:[#allocation4 + $0x800] sm:$0xff]
      %v3651 = vld [vmem:[#allocation4 + $0x808] sm:$0xff]
      %v3652 = vld [vmem:[#allocation4 + $0x810] sm:$0xff]
      %v3653 = vld [vmem:[#allocation4 + $0x818] sm:$0xff]
      %v3654 = vld [vmem:[#allocation4 + $0x820] sm:$0xff]
      %v3655 = vld [vmem:[#allocation4 + $0x828] sm:$0xff]
      %v3656 = vld [vmem:[#allocation4 + $0x830] sm:$0xff]
      %v3657 = vld [vmem:[#allocation4 + $0x838] sm:$0xff]
      %v3658 = vld [vmem:[#allocation4 + $0x840] sm:$0xff]
      %v3659 = vld [vmem:[#allocation4 + $0x848] sm:$0xff]
      %v3660 = vld [vmem:[#allocation4 + $0x850] sm:$0xff]
      %v3661 = vld [vmem:[#allocation4 + $0x858] sm:$0xff]
      %v3662 = vld [vmem:[#allocation4 + $0x860] sm:$0xff]
      %v3663 = vld [vmem:[#allocation4 + $0x868] sm:$0xff]
      %v3664 = vpack.c.bf16 %v3404, %v3394
      %v3665 = vpack.c.bf16 %v3405, %v3395
      %v3666 = vpack.c.bf16 %v3406, %v3396
      %v3667 = vpack.c.bf16 %v3407, %v3397
      %v3668 = vpack.c.bf16 %v3408, %v3398
      %v3669 = vpack.c.bf16 %v3409, %v3399
      %v3670 = vpack.c.bf16 %v3410, %v3400
      %v3671 = vpack.c.bf16 %v3411, %v3401
      %v3672 = vpack.c.bf16 %v3412, %v3402
      %v3673 = vpack.c.bf16 %v3413, %v3403
      %v3674 = vpack.c.bf16 %v3424, %v3414
      %v3675 = vpack.c.bf16 %v3425, %v3415
      %v3676 = vpack.c.bf16 %v3426, %v3416
      %v3677 = vpack.c.bf16 %v3427, %v3417
      %v3678 = vpack.c.bf16 %v3428, %v3418
      %v3679 = vpack.c.bf16 %v3429, %v3419
      %v3680 = vpack.c.bf16 %v3430, %v3420
      %v3681 = vpack.c.bf16 %v3431, %v3421
      %v3682 = vpack.c.bf16 %v3432, %v3422
      %v3683 = vpack.c.bf16 %v3433, %v3423
      %v3684 = vpack.c.bf16 %v3444, %v3434
      %v3685 = vpack.c.bf16 %v3445, %v3435
      %v3686 = vpack.c.bf16 %v3446, %v3436
      %v3687 = vpack.c.bf16 %v3447, %v3437
      %v3688 = vpack.c.bf16 %v3448, %v3438
      %v3689 = vpack.c.bf16 %v3449, %v3439
      %v3690 = vpack.c.bf16 %v3450, %v3440
      %v3691 = vpack.c.bf16 %v3451, %v3441
      %v3692 = vpack.c.bf16 %v3452, %v3442
      %v3693 = vpack.c.bf16 %v3453, %v3443
      %v3694 = vpack.c.bf16 %v3464, %v3454
      %v3695 = vpack.c.bf16 %v3465, %v3455
      %v3696 = vpack.c.bf16 %v3466, %v3456
      %v3697 = vpack.c.bf16 %v3467, %v3457
      %v3698 = vpack.c.bf16 %v3468, %v3458
      %v3699 = vpack.c.bf16 %v3469, %v3459
      %v3700 = vpack.c.bf16 %v3470, %v3460
      %v3701 = vpack.c.bf16 %v3471, %v3461
      %v3702 = vpack.c.bf16 %v3472, %v3462
      %v3703 = vpack.c.bf16 %v3473, %v3463
      %v3704 = vpack.c.bf16 %v3484, %v3474
      %v3705 = vpack.c.bf16 %v3485, %v3475
      %v3706 = vpack.c.bf16 %v3486, %v3476
      %v3707 = vpack.c.bf16 %v3487, %v3477
      %v3708 = vpack.c.bf16 %v3488, %v3478
      %v3709 = vpack.c.bf16 %v3489, %v3479
      %v3710 = vpack.c.bf16 %v3490, %v3480
      %v3711 = vpack.c.bf16 %v3491, %v3481
      %v3712 = vpack.c.bf16 %v3492, %v3482
      %v3713 = vpack.c.bf16 %v3493, %v3483
      %v3714 = vpack.c.bf16 %v3504, %v3494
      %v3715 = vpack.c.bf16 %v3505, %v3495
      %v3716 = vpack.c.bf16 %v3506, %v3496
      %v3717 = vpack.c.bf16 %v3507, %v3497
      %v3718 = vpack.c.bf16 %v3508, %v3498
      %v3719 = vpack.c.bf16 %v3509, %v3499
      %v3720 = vpack.c.bf16 %v3510, %v3500
      %v3721 = vpack.c.bf16 %v3511, %v3501
      %v3722 = vpack.c.bf16 %v3512, %v3502
      %v3723 = vpack.c.bf16 %v3513, %v3503
      %v3724 = vpack.c.bf16 %v3524, %v3514
      %v3725 = vpack.c.bf16 %v3525, %v3515
      %v3726 = vpack.c.bf16 %v3526, %v3516
      %v3727 = vpack.c.bf16 %v3527, %v3517
      %v3728 = vpack.c.bf16 %v3528, %v3518
      %v3729 = vpack.c.bf16 %v3529, %v3519
      %v3730 = vpack.c.bf16 %v3530, %v3520
      %v3731 = vpack.c.bf16 %v3531, %v3521
      %v3732 = vpack.c.bf16 %v3532, %v3522
      %v3733 = vpack.c.bf16 %v3533, %v3523
      %v3734 = vpack.c.bf16 %v3544, %v3534
      %v3735 = vpack.c.bf16 %v3545, %v3535
      %v3736 = vpack.c.bf16 %v3546, %v3536
      %v3737 = vpack.c.bf16 %v3547, %v3537
      %v3738 = vpack.c.bf16 %v3548, %v3538
      %v3739 = vpack.c.bf16 %v3549, %v3539
      %v3740 = vpack.c.bf16 %v3550, %v3540
      %v3741 = vpack.c.bf16 %v3551, %v3541
      %v3742 = vpack.c.bf16 %v3552, %v3542
      %v3743 = vpack.c.bf16 %v3553, %v3543
      %v3744 = vpack.c.bf16 %v3564, %v3554
      %v3745 = vpack.c.bf16 %v3565, %v3555
      %v3746 = vpack.c.bf16 %v3566, %v3556
      %v3747 = vpack.c.bf16 %v3567, %v3557
      %v3748 = vpack.c.bf16 %v3568, %v3558
      %v3749 = vpack.c.bf16 %v3569, %v3559
      %v3750 = vpack.c.bf16 %v3570, %v3560
      %v3751 = vpack.c.bf16 %v3571, %v3561
      %v3752 = vpack.c.bf16 %v3572, %v3562
      %v3753 = vpack.c.bf16 %v3573, %v3563
      %v3754 = vpack.c.bf16 %v3584, %v3574
      %v3755 = vpack.c.bf16 %v3585, %v3575
      %v3756 = vpack.c.bf16 %v3586, %v3576
      %v3757 = vpack.c.bf16 %v3587, %v3577
      %v3758 = vpack.c.bf16 %v3588, %v3578
      %v3759 = vpack.c.bf16 %v3589, %v3579
      %v3760 = vpack.c.bf16 %v3590, %v3580
      %v3761 = vpack.c.bf16 %v3591, %v3581
      %v3762 = vpack.c.bf16 %v3592, %v3582
      %v3763 = vpack.c.bf16 %v3593, %v3583
      %v3764 = vpack.c.bf16 %v3604, %v3594
      %v3765 = vpack.c.bf16 %v3605, %v3595
      %v3766 = vpack.c.bf16 %v3606, %v3596
      %v3767 = vpack.c.bf16 %v3607, %v3597
      %v3768 = vpack.c.bf16 %v3608, %v3598
      %v3769 = vpack.c.bf16 %v3609, %v3599
      %v3770 = vpack.c.bf16 %v3610, %v3600
      %v3771 = vpack.c.bf16 %v3611, %v3601
      %v3772 = vpack.c.bf16 %v3612, %v3602
      %v3773 = vpack.c.bf16 %v3613, %v3603
      %v3774 = vpack.c.bf16 %v3624, %v3614
      %v3775 = vpack.c.bf16 %v3625, %v3615
      %v3776 = vpack.c.bf16 %v3626, %v3616
      %v3777 = vpack.c.bf16 %v3627, %v3617
      %v3778 = vpack.c.bf16 %v3628, %v3618
      %v3779 = vpack.c.bf16 %v3629, %v3619
      %v3780 = vpack.c.bf16 %v3630, %v3620
      %v3781 = vpack.c.bf16 %v3631, %v3621
      %v3782 = vpack.c.bf16 %v3632, %v3622
      %v3783 = vpack.c.bf16 %v3633, %v3623
      %v3784 = vpack.c.bf16 %v3644, %v3634
      %v3785 = vpack.c.bf16 %v3645, %v3635
      %v3786 = vpack.c.bf16 %v3646, %v3636
      %v3787 = vpack.c.bf16 %v3647, %v3637
      %v3788 = vpack.c.bf16 %v3648, %v3638
      %v3789 = vpack.c.bf16 %v3649, %v3639
      %v3790 = vpack.c.bf16 %v3650, %v3640
      %v3791 = vpack.c.bf16 %v3651, %v3641
      %v3792 = vpack.c.bf16 %v3652, %v3642
      %v3793 = vpack.c.bf16 %v3653, %v3643
      %v3794 = vpack.c.bf16 %v3654, %v3654
      %v3795 = vpack.c.bf16 %v3655, %v3655
      %v3796 = vpack.c.bf16 %v3656, %v3656
      %v3797 = vpack.c.bf16 %v3657, %v3657
      %v3798 = vpack.c.bf16 %v3658, %v3658
      %v3799 = vpack.c.bf16 %v3659, %v3659
      %v3800 = vpack.c.bf16 %v3660, %v3660
      %v3801 = vpack.c.bf16 %v3661, %v3661
      %v3802 = vpack.c.bf16 %v3662, %v3662
      %v3803 = vpack.c.bf16 %v3663, %v3663
      %v3812 = vunpack.c.l.b16 %v3386
      %v3813 = vunpack.c.h.b16 %v3386
      %v3814 = vunpack.c.l.b16 %v3387
      %v3815 = vunpack.c.h.b16 %v3387
      %v3816 = vunpack.c.l.b16 %v3388
      %v3817 = vunpack.c.h.b16 %v3388
      %v3818 = vunpack.c.l.b16 %v3389
      %v3819 = vunpack.c.h.b16 %v3389
      %v3820 = vunpack.c.l.b16 %v3390
      %v3821 = vunpack.c.h.b16 %v3390
      %v3822 = vunpack.c.l.b16 %v3391
      %v3823 = vunpack.c.h.b16 %v3391
      %v3824 = vunpack.c.l.b16 %v3392
      %v3825 = vunpack.c.h.b16 %v3392
      %v3826 = vunpack.c.l.b16 %v3393
      %v3827 = vunpack.c.h.b16 %v3393
      %v3828 = vpack.c.b16 %v3814, %v3812
      %v3829 = vpack.c.b16 %v3815, %v3813
      %v3830 = vpack.c.b16 %v3818, %v3816
      %v3831 = vpack.c.b16 %v3819, %v3817
      %v3832 = vpack.c.b16 %v3822, %v3820
      %v3833 = vpack.c.b16 %v3823, %v3821
      %v3834 = vpack.c.b16 %v3826, %v3824
      %v3835 = vpack.c.b16 %v3827, %v3825
      %vm3840 = vcmask 719872
      %v3842 = vsel %vm3840, %v3829, 0
      %v3845 = vsel %vm3840, %v3831, 0
      %v3848 = vsel %vm3840, %v3833, 0
      %v3851 = vsel %vm3840, %v3835, 0
      %v3854 = vsel %vm460, %v3794, 0
      %v3857 = vsel %vm460, %v3795, 0
      %v3860 = vsel %vm460, %v3796, 0
      %v3863 = vsel %vm460, %v3797, 0
      %v3866 = vsel %vm460, %v3798, 0
      %v3869 = vsel %vm460, %v3799, 0
      %v3872 = vsel %vm460, %v3800, 0
      %v3875 = vsel %vm460, %v3801, 0
      %v3878 = vsel %vm460, %v3802, 0
      %v3881 = vsel %vm460, %v3803, 0
      %3883 = vmatpush.bf16.msra.mxu0 %v3734
      %3884 = vmatpush.bf16.msra.mxu0 %v3724
      %3885 = vmatpush.bf16.msra.mxu0 %v3714
      %3886 = vmatpush.bf16.msra.mxu0 %v3704
      %3887 = vmatpush.bf16.msra.mxu0 %v3694
      %3888 = vmatpush.bf16.msra.mxu0 %v3684
      %3889 = vmatpush.bf16.msra.mxu0 %v3674
      %3890 = vmatpush.bf16.msra.mxu0 %v3664
      %3891 = vmatmul.bf16.gmra.mxu0 %v3828
      %v3892 = vpop.f32.mrf.mxu0
      %v3893 = vadd.f32 0.0, %v3892
      %v3894 = vpop.f32.mrf.mxu0
      %v3895 = vadd.f32 0.0, %v3894
      %3896 = vmatmul.bf16.gmra.mxu0 %v3830
      %v3897 = vpop.f32.mrf.mxu0
      %v3898 = vadd.f32 0.0, %v3897
      %v3899 = vpop.f32.mrf.mxu0
      %v3900 = vadd.f32 0.0, %v3899
      %3901 = vmatmul.bf16.gmra.mxu0 %v3832
      %v3902 = vpop.f32.mrf.mxu0
      %v3903 = vadd.f32 0.0, %v3902
      %v3904 = vpop.f32.mrf.mxu0
      %v3905 = vadd.f32 0.0, %v3904
      %3906 = vmatmul.bf16.gmra.mxu0 %v3834
      %v3907 = vpop.f32.mrf.mxu0
      %v3908 = vadd.f32 0.0, %v3907
      %v3909 = vpop.f32.mrf.mxu0
      %v3910 = vadd.f32 0.0, %v3909
      %3911 = vdwg.mxu0
      %3912 = vmatpush.bf16.msra.mxu0 0
      %3913 = vmatpush.bf16.msra.mxu0 0
      %3914 = vmatpush.bf16.msra.mxu0 %v3854
      %3915 = vmatpush.bf16.msra.mxu0 %v3784
      %3916 = vmatpush.bf16.msra.mxu0 %v3774
      %3917 = vmatpush.bf16.msra.mxu0 %v3764
      %3918 = vmatpush.bf16.msra.mxu0 %v3754
      %3919 = vmatpush.bf16.msra.mxu0 %v3744
      %3920 = vmatmul.bf16.gmra.mxu0 %v3842
      %v3921 = vpop.f32.mrf.mxu0
      %v3922 = vadd.f32 %v3893, %v3921
      %v3923 = vpop.f32.mrf.mxu0
      %v3924 = vadd.f32 %v3895, %v3923
      %3925 = vmatmul.bf16.gmra.mxu0 %v3845
      %v3926 = vpop.f32.mrf.mxu0
      %v3927 = vadd.f32 %v3898, %v3926
      %v3928 = vpop.f32.mrf.mxu0
      %v3929 = vadd.f32 %v3900, %v3928
      %3930 = vmatmul.bf16.gmra.mxu0 %v3848
      %v3931 = vpop.f32.mrf.mxu0
      %v3932 = vadd.f32 %v3903, %v3931
      %v3933 = vpop.f32.mrf.mxu0
      %v3934 = vadd.f32 %v3905, %v3933
      %3935 = vmatmul.bf16.gmra.mxu0 %v3851
      %v3936 = vpop.f32.mrf.mxu0
      %v3937 = vadd.f32 %v3908, %v3936
      %v3938 = vpop.f32.mrf.mxu0
      %v3939 = vadd.f32 %v3910, %v3938
      %3940 = vdwg.mxu0
      %3941 = vmatpush.bf16.msra.mxu0 %v3735
      %3942 = vmatpush.bf16.msra.mxu0 %v3725
      %3943 = vmatpush.bf16.msra.mxu0 %v3715
      %3944 = vmatpush.bf16.msra.mxu0 %v3705
      %3945 = vmatpush.bf16.msra.mxu0 %v3695
      %3946 = vmatpush.bf16.msra.mxu0 %v3685
      %3947 = vmatpush.bf16.msra.mxu0 %v3675
      %3948 = vmatpush.bf16.msra.mxu0 %v3665
      %3949 = vmatmul.bf16.gmra.mxu0 %v3828
      %v3950 = vpop.f32.mrf.mxu0
      %v3951 = vadd.f32 0.0, %v3950
      %v3952 = vpop.f32.mrf.mxu0
      %v3953 = vadd.f32 0.0, %v3952
      %3954 = vmatmul.bf16.gmra.mxu0 %v3830
      %v3955 = vpop.f32.mrf.mxu0
      %v3956 = vadd.f32 0.0, %v3955
      %v3957 = vpop.f32.mrf.mxu0
      %v3958 = vadd.f32 0.0, %v3957
      %3959 = vmatmul.bf16.gmra.mxu0 %v3832
      %v3960 = vpop.f32.mrf.mxu0
      %v3961 = vadd.f32 0.0, %v3960
      %v3962 = vpop.f32.mrf.mxu0
      %v3963 = vadd.f32 0.0, %v3962
      %3964 = vmatmul.bf16.gmra.mxu0 %v3834
      %v3965 = vpop.f32.mrf.mxu0
      %v3966 = vadd.f32 0.0, %v3965
      %v3967 = vpop.f32.mrf.mxu0
      %v3968 = vadd.f32 0.0, %v3967
      %3969 = vdwg.mxu0
      %3970 = vmatpush.bf16.msra.mxu0 0
      %3971 = vmatpush.bf16.msra.mxu0 0
      %3972 = vmatpush.bf16.msra.mxu0 %v3857
      %3973 = vmatpush.bf16.msra.mxu0 %v3785
      %3974 = vmatpush.bf16.msra.mxu0 %v3775
      %3975 = vmatpush.bf16.msra.mxu0 %v3765
      %3976 = vmatpush.bf16.msra.mxu0 %v3755
      %3977 = vmatpush.bf16.msra.mxu0 %v3745
      %3978 = vmatmul.bf16.gmra.mxu0 %v3842
      %v3979 = vpop.f32.mrf.mxu0
      %v3980 = vadd.f32 %v3951, %v3979
      %v3981 = vpop.f32.mrf.mxu0
      %v3982 = vadd.f32 %v3953, %v3981
      %3983 = vmatmul.bf16.gmra.mxu0 %v3845
      %v3984 = vpop.f32.mrf.mxu0
      %v3985 = vadd.f32 %v3956, %v3984
      %v3986 = vpop.f32.mrf.mxu0
      %v3987 = vadd.f32 %v3958, %v3986
      %3988 = vmatmul.bf16.gmra.mxu0 %v3848
      %v3989 = vpop.f32.mrf.mxu0
      %v3990 = vadd.f32 %v3961, %v3989
      %v3991 = vpop.f32.mrf.mxu0
      %v3992 = vadd.f32 %v3963, %v3991
      %3993 = vmatmul.bf16.gmra.mxu0 %v3851
      %v3994 = vpop.f32.mrf.mxu0
      %v3995 = vadd.f32 %v3966, %v3994
      %v3996 = vpop.f32.mrf.mxu0
      %v3997 = vadd.f32 %v3968, %v3996
      %3998 = vdwg.mxu0
      %3999 = vmatpush.bf16.msra.mxu0 %v3736
      %4000 = vmatpush.bf16.msra.mxu0 %v3726
      %4001 = vmatpush.bf16.msra.mxu0 %v3716
      %4002 = vmatpush.bf16.msra.mxu0 %v3706
      %4003 = vmatpush.bf16.msra.mxu0 %v3696
      %4004 = vmatpush.bf16.msra.mxu0 %v3686
      %4005 = vmatpush.bf16.msra.mxu0 %v3676
      %4006 = vmatpush.bf16.msra.mxu0 %v3666
      %4007 = vmatmul.bf16.gmra.mxu0 %v3828
      %v4008 = vpop.f32.mrf.mxu0
      %v4009 = vadd.f32 0.0, %v4008
      %v4010 = vpop.f32.mrf.mxu0
      %v4011 = vadd.f32 0.0, %v4010
      %4012 = vmatmul.bf16.gmra.mxu0 %v3830
      %v4013 = vpop.f32.mrf.mxu0
      %v4014 = vadd.f32 0.0, %v4013
      %v4015 = vpop.f32.mrf.mxu0
      %v4016 = vadd.f32 0.0, %v4015
      %4017 = vmatmul.bf16.gmra.mxu0 %v3832
      %v4018 = vpop.f32.mrf.mxu0
      %v4019 = vadd.f32 0.0, %v4018
      %v4020 = vpop.f32.mrf.mxu0
      %v4021 = vadd.f32 0.0, %v4020
      %4022 = vmatmul.bf16.gmra.mxu0 %v3834
      %v4023 = vpop.f32.mrf.mxu0
      %v4024 = vadd.f32 0.0, %v4023
      %v4025 = vpop.f32.mrf.mxu0
      %v4026 = vadd.f32 0.0, %v4025
      %4027 = vdwg.mxu0
      %4028 = vmatpush.bf16.msra.mxu0 0
      %4029 = vmatpush.bf16.msra.mxu0 0
      %4030 = vmatpush.bf16.msra.mxu0 %v3860
      %4031 = vmatpush.bf16.msra.mxu0 %v3786
      %4032 = vmatpush.bf16.msra.mxu0 %v3776
      %4033 = vmatpush.bf16.msra.mxu0 %v3766
      %4034 = vmatpush.bf16.msra.mxu0 %v3756
      %4035 = vmatpush.bf16.msra.mxu0 %v3746
      %4036 = vmatmul.bf16.gmra.mxu0 %v3842
      %v4037 = vpop.f32.mrf.mxu0
      %v4038 = vadd.f32 %v4009, %v4037
      %v4039 = vpop.f32.mrf.mxu0
      %v4040 = vadd.f32 %v4011, %v4039
      %4041 = vmatmul.bf16.gmra.mxu0 %v3845
      %v4042 = vpop.f32.mrf.mxu0
      %v4043 = vadd.f32 %v4014, %v4042
      %v4044 = vpop.f32.mrf.mxu0
      %v4045 = vadd.f32 %v4016, %v4044
      %4046 = vmatmul.bf16.gmra.mxu0 %v3848
      %v4047 = vpop.f32.mrf.mxu0
      %v4048 = vadd.f32 %v4019, %v4047
      %v4049 = vpop.f32.mrf.mxu0
      %v4050 = vadd.f32 %v4021, %v4049
      %4051 = vmatmul.bf16.gmra.mxu0 %v3851
      %v4052 = vpop.f32.mrf.mxu0
      %v4053 = vadd.f32 %v4024, %v4052
      %v4054 = vpop.f32.mrf.mxu0
      %v4055 = vadd.f32 %v4026, %v4054
      %4056 = vdwg.mxu0
      %4057 = vmatpush.bf16.msra.mxu0 %v3737
      %4058 = vmatpush.bf16.msra.mxu0 %v3727
      %4059 = vmatpush.bf16.msra.mxu0 %v3717
      %4060 = vmatpush.bf16.msra.mxu0 %v3707
      %4061 = vmatpush.bf16.msra.mxu0 %v3697
      %4062 = vmatpush.bf16.msra.mxu0 %v3687
      %4063 = vmatpush.bf16.msra.mxu0 %v3677
      %4064 = vmatpush.bf16.msra.mxu0 %v3667
      %4065 = vmatmul.bf16.gmra.mxu0 %v3828
      %v4066 = vpop.f32.mrf.mxu0
      %v4067 = vadd.f32 0.0, %v4066
      %v4068 = vpop.f32.mrf.mxu0
      %v4069 = vadd.f32 0.0, %v4068
      %4070 = vmatmul.bf16.gmra.mxu0 %v3830
      %v4071 = vpop.f32.mrf.mxu0
      %v4072 = vadd.f32 0.0, %v4071
      %v4073 = vpop.f32.mrf.mxu0
      %v4074 = vadd.f32 0.0, %v4073
      %4075 = vmatmul.bf16.gmra.mxu0 %v3832
      %v4076 = vpop.f32.mrf.mxu0
      %v4077 = vadd.f32 0.0, %v4076
      %v4078 = vpop.f32.mrf.mxu0
      %v4079 = vadd.f32 0.0, %v4078
      %4080 = vmatmul.bf16.gmra.mxu0 %v3834
      %v4081 = vpop.f32.mrf.mxu0
      %v4082 = vadd.f32 0.0, %v4081
      %v4083 = vpop.f32.mrf.mxu0
      %v4084 = vadd.f32 0.0, %v4083
      %4085 = vdwg.mxu0
      %4086 = vmatpush.bf16.msra.mxu0 0
      %4087 = vmatpush.bf16.msra.mxu0 0
      %4088 = vmatpush.bf16.msra.mxu0 %v3863
      %4089 = vmatpush.bf16.msra.mxu0 %v3787
      %4090 = vmatpush.bf16.msra.mxu0 %v3777
      %4091 = vmatpush.bf16.msra.mxu0 %v3767
      %4092 = vmatpush.bf16.msra.mxu0 %v3757
      %4093 = vmatpush.bf16.msra.mxu0 %v3747
      %4094 = vmatmul.bf16.gmra.mxu0 %v3842
      %v4095 = vpop.f32.mrf.mxu0
      %v4096 = vadd.f32 %v4067, %v4095
      %v4097 = vpop.f32.mrf.mxu0
      %v4098 = vadd.f32 %v4069, %v4097
      %4099 = vmatmul.bf16.gmra.mxu0 %v3845
      %v4100 = vpop.f32.mrf.mxu0
      %v4101 = vadd.f32 %v4072, %v4100
      %v4102 = vpop.f32.mrf.mxu0
      %v4103 = vadd.f32 %v4074, %v4102
      %4104 = vmatmul.bf16.gmra.mxu0 %v3848
      %v4105 = vpop.f32.mrf.mxu0
      %v4106 = vadd.f32 %v4077, %v4105
      %v4107 = vpop.f32.mrf.mxu0
      %v4108 = vadd.f32 %v4079, %v4107
      %4109 = vmatmul.bf16.gmra.mxu0 %v3851
      %v4110 = vpop.f32.mrf.mxu0
      %v4111 = vadd.f32 %v4082, %v4110
      %v4112 = vpop.f32.mrf.mxu0
      %v4113 = vadd.f32 %v4084, %v4112
      %4114 = vdwg.mxu0
      %4115 = vmatpush.bf16.msra.mxu0 %v3738
      %4116 = vmatpush.bf16.msra.mxu0 %v3728
      %4117 = vmatpush.bf16.msra.mxu0 %v3718
      %4118 = vmatpush.bf16.msra.mxu0 %v3708
      %4119 = vmatpush.bf16.msra.mxu0 %v3698
      %4120 = vmatpush.bf16.msra.mxu0 %v3688
      %4121 = vmatpush.bf16.msra.mxu0 %v3678
      %4122 = vmatpush.bf16.msra.mxu0 %v3668
      %4123 = vmatmul.bf16.gmra.mxu0 %v3828
      %v4124 = vpop.f32.mrf.mxu0
      %v4125 = vadd.f32 0.0, %v4124
      %v4126 = vpop.f32.mrf.mxu0
      %v4127 = vadd.f32 0.0, %v4126
      %4128 = vmatmul.bf16.gmra.mxu0 %v3830
      %v4129 = vpop.f32.mrf.mxu0
      %v4130 = vadd.f32 0.0, %v4129
      %v4131 = vpop.f32.mrf.mxu0
      %v4132 = vadd.f32 0.0, %v4131
      %4133 = vmatmul.bf16.gmra.mxu0 %v3832
      %v4134 = vpop.f32.mrf.mxu0
      %v4135 = vadd.f32 0.0, %v4134
      %v4136 = vpop.f32.mrf.mxu0
      %v4137 = vadd.f32 0.0, %v4136
      %4138 = vmatmul.bf16.gmra.mxu0 %v3834
      %v4139 = vpop.f32.mrf.mxu0
      %v4140 = vadd.f32 0.0, %v4139
      %v4141 = vpop.f32.mrf.mxu0
      %v4142 = vadd.f32 0.0, %v4141
      %4143 = vdwg.mxu0
      %4144 = vmatpush.bf16.msra.mxu0 0
      %4145 = vmatpush.bf16.msra.mxu0 0
      %4146 = vmatpush.bf16.msra.mxu0 %v3866
      %4147 = vmatpush.bf16.msra.mxu0 %v3788
      %4148 = vmatpush.bf16.msra.mxu0 %v3778
      %4149 = vmatpush.bf16.msra.mxu0 %v3768
      %4150 = vmatpush.bf16.msra.mxu0 %v3758
      %4151 = vmatpush.bf16.msra.mxu0 %v3748
      %4152 = vmatmul.bf16.gmra.mxu0 %v3842
      %v4153 = vpop.f32.mrf.mxu0
      %v4154 = vadd.f32 %v4125, %v4153
      %v4155 = vpop.f32.mrf.mxu0
      %v4156 = vadd.f32 %v4127, %v4155
      %4157 = vmatmul.bf16.gmra.mxu0 %v3845
      %v4158 = vpop.f32.mrf.mxu0
      %v4159 = vadd.f32 %v4130, %v4158
      %v4160 = vpop.f32.mrf.mxu0
      %v4161 = vadd.f32 %v4132, %v4160
      %4162 = vmatmul.bf16.gmra.mxu0 %v3848
      %v4163 = vpop.f32.mrf.mxu0
      %v4164 = vadd.f32 %v4135, %v4163
      %v4165 = vpop.f32.mrf.mxu0
      %v4166 = vadd.f32 %v4137, %v4165
      %4167 = vmatmul.bf16.gmra.mxu0 %v3851
      %v4168 = vpop.f32.mrf.mxu0
      %v4169 = vadd.f32 %v4140, %v4168
      %v4170 = vpop.f32.mrf.mxu0
      %v4171 = vadd.f32 %v4142, %v4170
      %4172 = vdwg.mxu0
      %4173 = vmatpush.bf16.msra.mxu0 %v3739
      %4174 = vmatpush.bf16.msra.mxu0 %v3729
      %4175 = vmatpush.bf16.msra.mxu0 %v3719
      %4176 = vmatpush.bf16.msra.mxu0 %v3709
      %4177 = vmatpush.bf16.msra.mxu0 %v3699
      %4178 = vmatpush.bf16.msra.mxu0 %v3689
      %4179 = vmatpush.bf16.msra.mxu0 %v3679
      %4180 = vmatpush.bf16.msra.mxu0 %v3669
      %4181 = vmatmul.bf16.gmra.mxu0 %v3828
      %v4182 = vpop.f32.mrf.mxu0
      %v4183 = vadd.f32 0.0, %v4182
      %v4184 = vpop.f32.mrf.mxu0
      %v4185 = vadd.f32 0.0, %v4184
      %4186 = vmatmul.bf16.gmra.mxu0 %v3830
      %v4187 = vpop.f32.mrf.mxu0
      %v4188 = vadd.f32 0.0, %v4187
      %v4189 = vpop.f32.mrf.mxu0
      %v4190 = vadd.f32 0.0, %v4189
      %4191 = vmatmul.bf16.gmra.mxu0 %v3832
      %v4192 = vpop.f32.mrf.mxu0
      %v4193 = vadd.f32 0.0, %v4192
      %v4194 = vpop.f32.mrf.mxu0
      %v4195 = vadd.f32 0.0, %v4194
      %4196 = vmatmul.bf16.gmra.mxu0 %v3834
      %v4197 = vpop.f32.mrf.mxu0
      %v4198 = vadd.f32 0.0, %v4197
      %v4199 = vpop.f32.mrf.mxu0
      %v4200 = vadd.f32 0.0, %v4199
      %4201 = vdwg.mxu0
      %4202 = vmatpush.bf16.msra.mxu0 0
      %4203 = vmatpush.bf16.msra.mxu0 0
      %4204 = vmatpush.bf16.msra.mxu0 %v3869
      %4205 = vmatpush.bf16.msra.mxu0 %v3789
      %4206 = vmatpush.bf16.msra.mxu0 %v3779
      %4207 = vmatpush.bf16.msra.mxu0 %v3769
      %4208 = vmatpush.bf16.msra.mxu0 %v3759
      %4209 = vmatpush.bf16.msra.mxu0 %v3749
      %4210 = vmatmul.bf16.gmra.mxu0 %v3842
      %v4211 = vpop.f32.mrf.mxu0
      %v4212 = vadd.f32 %v4183, %v4211
      %v4213 = vpop.f32.mrf.mxu0
      %v4214 = vadd.f32 %v4185, %v4213
      %4215 = vmatmul.bf16.gmra.mxu0 %v3845
      %v4216 = vpop.f32.mrf.mxu0
      %v4217 = vadd.f32 %v4188, %v4216
      %v4218 = vpop.f32.mrf.mxu0
      %v4219 = vadd.f32 %v4190, %v4218
      %4220 = vmatmul.bf16.gmra.mxu0 %v3848
      %v4221 = vpop.f32.mrf.mxu0
      %v4222 = vadd.f32 %v4193, %v4221
      %v4223 = vpop.f32.mrf.mxu0
      %v4224 = vadd.f32 %v4195, %v4223
      %4225 = vmatmul.bf16.gmra.mxu0 %v3851
      %v4226 = vpop.f32.mrf.mxu0
      %v4227 = vadd.f32 %v4198, %v4226
      %v4228 = vpop.f32.mrf.mxu0
      %v4229 = vadd.f32 %v4200, %v4228
      %4230 = vdwg.mxu0
      %4231 = vmatpush.bf16.msra.mxu0 %v3740
      %4232 = vmatpush.bf16.msra.mxu0 %v3730
      %4233 = vmatpush.bf16.msra.mxu0 %v3720
      %4234 = vmatpush.bf16.msra.mxu0 %v3710
      %4235 = vmatpush.bf16.msra.mxu0 %v3700
      %4236 = vmatpush.bf16.msra.mxu0 %v3690
      %4237 = vmatpush.bf16.msra.mxu0 %v3680
      %4238 = vmatpush.bf16.msra.mxu0 %v3670
      %4239 = vmatmul.bf16.gmra.mxu0 %v3828
      %v4240 = vpop.f32.mrf.mxu0
      %v4241 = vadd.f32 0.0, %v4240
      %v4242 = vpop.f32.mrf.mxu0
      %v4243 = vadd.f32 0.0, %v4242
      %4244 = vmatmul.bf16.gmra.mxu0 %v3830
      %v4245 = vpop.f32.mrf.mxu0
      %v4246 = vadd.f32 0.0, %v4245
      %v4247 = vpop.f32.mrf.mxu0
      %v4248 = vadd.f32 0.0, %v4247
      %4249 = vmatmul.bf16.gmra.mxu0 %v3832
      %v4250 = vpop.f32.mrf.mxu0
      %v4251 = vadd.f32 0.0, %v4250
      %v4252 = vpop.f32.mrf.mxu0
      %v4253 = vadd.f32 0.0, %v4252
      %4254 = vmatmul.bf16.gmra.mxu0 %v3834
      %v4255 = vpop.f32.mrf.mxu0
      %v4256 = vadd.f32 0.0, %v4255
      %v4257 = vpop.f32.mrf.mxu0
      %v4258 = vadd.f32 0.0, %v4257
      %4259 = vdwg.mxu0
      %4260 = vmatpush.bf16.msra.mxu0 0
      %4261 = vmatpush.bf16.msra.mxu0 0
      %4262 = vmatpush.bf16.msra.mxu0 %v3872
      %4263 = vmatpush.bf16.msra.mxu0 %v3790
      %4264 = vmatpush.bf16.msra.mxu0 %v3780
      %4265 = vmatpush.bf16.msra.mxu0 %v3770
      %4266 = vmatpush.bf16.msra.mxu0 %v3760
      %4267 = vmatpush.bf16.msra.mxu0 %v3750
      %4268 = vmatmul.bf16.gmra.mxu0 %v3842
      %v4269 = vpop.f32.mrf.mxu0
      %v4270 = vadd.f32 %v4241, %v4269
      %v4271 = vpop.f32.mrf.mxu0
      %v4272 = vadd.f32 %v4243, %v4271
      %4273 = vmatmul.bf16.gmra.mxu0 %v3845
      %v4274 = vpop.f32.mrf.mxu0
      %v4275 = vadd.f32 %v4246, %v4274
      %v4276 = vpop.f32.mrf.mxu0
      %v4277 = vadd.f32 %v4248, %v4276
      %4278 = vmatmul.bf16.gmra.mxu0 %v3848
      %v4279 = vpop.f32.mrf.mxu0
      %v4280 = vadd.f32 %v4251, %v4279
      %v4281 = vpop.f32.mrf.mxu0
      %v4282 = vadd.f32 %v4253, %v4281
      %4283 = vmatmul.bf16.gmra.mxu0 %v3851
      %v4284 = vpop.f32.mrf.mxu0
      %v4285 = vadd.f32 %v4256, %v4284
      %v4286 = vpop.f32.mrf.mxu0
      %v4287 = vadd.f32 %v4258, %v4286
      %4288 = vdwg.mxu0
      %4289 = vmatpush.bf16.msra.mxu0 %v3741
      %4290 = vmatpush.bf16.msra.mxu0 %v3731
      %4291 = vmatpush.bf16.msra.mxu0 %v3721
      %4292 = vmatpush.bf16.msra.mxu0 %v3711
      %4293 = vmatpush.bf16.msra.mxu0 %v3701
      %4294 = vmatpush.bf16.msra.mxu0 %v3691
      %4295 = vmatpush.bf16.msra.mxu0 %v3681
      %4296 = vmatpush.bf16.msra.mxu0 %v3671
      %4297 = vmatmul.bf16.gmra.mxu0 %v3828
      %v4298 = vpop.f32.mrf.mxu0
      %v4299 = vadd.f32 0.0, %v4298
      %v4300 = vpop.f32.mrf.mxu0
      %v4301 = vadd.f32 0.0, %v4300
      %4302 = vmatmul.bf16.gmra.mxu0 %v3830
      %v4303 = vpop.f32.mrf.mxu0
      %v4304 = vadd.f32 0.0, %v4303
      %v4305 = vpop.f32.mrf.mxu0
      %v4306 = vadd.f32 0.0, %v4305
      %4307 = vmatmul.bf16.gmra.mxu0 %v3832
      %v4308 = vpop.f32.mrf.mxu0
      %v4309 = vadd.f32 0.0, %v4308
      %v4310 = vpop.f32.mrf.mxu0
      %v4311 = vadd.f32 0.0, %v4310
      %4312 = vmatmul.bf16.gmra.mxu0 %v3834
      %v4313 = vpop.f32.mrf.mxu0
      %v4314 = vadd.f32 0.0, %v4313
      %v4315 = vpop.f32.mrf.mxu0
      %v4316 = vadd.f32 0.0, %v4315
      %4317 = vdwg.mxu0
      %4318 = vmatpush.bf16.msra.mxu0 0
      %4319 = vmatpush.bf16.msra.mxu0 0
      %4320 = vmatpush.bf16.msra.mxu0 %v3875
      %4321 = vmatpush.bf16.msra.mxu0 %v3791
      %4322 = vmatpush.bf16.msra.mxu0 %v3781
      %4323 = vmatpush.bf16.msra.mxu0 %v3771
      %4324 = vmatpush.bf16.msra.mxu0 %v3761
      %4325 = vmatpush.bf16.msra.mxu0 %v3751
      %4326 = vmatmul.bf16.gmra.mxu0 %v3842
      %v4327 = vpop.f32.mrf.mxu0
      %v4328 = vadd.f32 %v4299, %v4327
      %v4329 = vpop.f32.mrf.mxu0
      %v4330 = vadd.f32 %v4301, %v4329
      %4331 = vmatmul.bf16.gmra.mxu0 %v3845
      %v4332 = vpop.f32.mrf.mxu0
      %v4333 = vadd.f32 %v4304, %v4332
      %v4334 = vpop.f32.mrf.mxu0
      %v4335 = vadd.f32 %v4306, %v4334
      %4336 = vmatmul.bf16.gmra.mxu0 %v3848
      %v4337 = vpop.f32.mrf.mxu0
      %v4338 = vadd.f32 %v4309, %v4337
      %v4339 = vpop.f32.mrf.mxu0
      %v4340 = vadd.f32 %v4311, %v4339
      %4341 = vmatmul.bf16.gmra.mxu0 %v3851
      %v4342 = vpop.f32.mrf.mxu0
      %v4343 = vadd.f32 %v4314, %v4342
      %v4344 = vpop.f32.mrf.mxu0
      %v4345 = vadd.f32 %v4316, %v4344
      %4346 = vdwg.mxu0
      %4347 = vmatpush.bf16.msra.mxu0 %v3742
      %4348 = vmatpush.bf16.msra.mxu0 %v3732
      %4349 = vmatpush.bf16.msra.mxu0 %v3722
      %4350 = vmatpush.bf16.msra.mxu0 %v3712
      %4351 = vmatpush.bf16.msra.mxu0 %v3702
      %4352 = vmatpush.bf16.msra.mxu0 %v3692
      %4353 = vmatpush.bf16.msra.mxu0 %v3682
      %4354 = vmatpush.bf16.msra.mxu0 %v3672
      %4355 = vmatmul.bf16.gmra.mxu0 %v3828
      %v4356 = vpop.f32.mrf.mxu0
      %v4357 = vadd.f32 0.0, %v4356
      %v4358 = vpop.f32.mrf.mxu0
      %v4359 = vadd.f32 0.0, %v4358
      %4360 = vmatmul.bf16.gmra.mxu0 %v3830
      %v4361 = vpop.f32.mrf.mxu0
      %v4362 = vadd.f32 0.0, %v4361
      %v4363 = vpop.f32.mrf.mxu0
      %v4364 = vadd.f32 0.0, %v4363
      %4365 = vmatmul.bf16.gmra.mxu0 %v3832
      %v4366 = vpop.f32.mrf.mxu0
      %v4367 = vadd.f32 0.0, %v4366
      %v4368 = vpop.f32.mrf.mxu0
      %v4369 = vadd.f32 0.0, %v4368
      %4370 = vmatmul.bf16.gmra.mxu0 %v3834
      %v4371 = vpop.f32.mrf.mxu0
      %v4372 = vadd.f32 0.0, %v4371
      %v4373 = vpop.f32.mrf.mxu0
      %v4374 = vadd.f32 0.0, %v4373
      %4375 = vdwg.mxu0
      %4376 = vmatpush.bf16.msra.mxu0 0
      %4377 = vmatpush.bf16.msra.mxu0 0
      %4378 = vmatpush.bf16.msra.mxu0 %v3878
      %4379 = vmatpush.bf16.msra.mxu0 %v3792
      %4380 = vmatpush.bf16.msra.mxu0 %v3782
      %4381 = vmatpush.bf16.msra.mxu0 %v3772
      %4382 = vmatpush.bf16.msra.mxu0 %v3762
      %4383 = vmatpush.bf16.msra.mxu0 %v3752
      %4384 = vmatmul.bf16.gmra.mxu0 %v3842
      %v4385 = vpop.f32.mrf.mxu0
      %v4386 = vadd.f32 %v4357, %v4385
      %v4387 = vpop.f32.mrf.mxu0
      %v4388 = vadd.f32 %v4359, %v4387
      %4389 = vmatmul.bf16.gmra.mxu0 %v3845
      %v4390 = vpop.f32.mrf.mxu0
      %v4391 = vadd.f32 %v4362, %v4390
      %v4392 = vpop.f32.mrf.mxu0
      %v4393 = vadd.f32 %v4364, %v4392
      %4394 = vmatmul.bf16.gmra.mxu0 %v3848
      %v4395 = vpop.f32.mrf.mxu0
      %v4396 = vadd.f32 %v4367, %v4395
      %v4397 = vpop.f32.mrf.mxu0
      %v4398 = vadd.f32 %v4369, %v4397
      %4399 = vmatmul.bf16.gmra.mxu0 %v3851
      %v4400 = vpop.f32.mrf.mxu0
      %v4401 = vadd.f32 %v4372, %v4400
      %v4402 = vpop.f32.mrf.mxu0
      %v4403 = vadd.f32 %v4374, %v4402
      %4404 = vdwg.mxu0
      %4405 = vmatpush.bf16.msra.mxu0 %v3743
      %4406 = vmatpush.bf16.msra.mxu0 %v3733
      %4407 = vmatpush.bf16.msra.mxu0 %v3723
      %4408 = vmatpush.bf16.msra.mxu0 %v3713
      %4409 = vmatpush.bf16.msra.mxu0 %v3703
      %4410 = vmatpush.bf16.msra.mxu0 %v3693
      %4411 = vmatpush.bf16.msra.mxu0 %v3683
      %4412 = vmatpush.bf16.msra.mxu0 %v3673
      %4413 = vmatmul.bf16.gmra.mxu0 %v3828
      %v4414 = vpop.f32.mrf.mxu0
      %v4415 = vadd.f32 0.0, %v4414
      %v4416 = vpop.f32.mrf.mxu0
      %v4417 = vadd.f32 0.0, %v4416
      %4418 = vmatmul.bf16.gmra.mxu0 %v3830
      %v4419 = vpop.f32.mrf.mxu0
      %v4420 = vadd.f32 0.0, %v4419
      %v4421 = vpop.f32.mrf.mxu0
      %v4422 = vadd.f32 0.0, %v4421
      %4423 = vmatmul.bf16.gmra.mxu0 %v3832
      %v4424 = vpop.f32.mrf.mxu0
      %v4425 = vadd.f32 0.0, %v4424
      %v4426 = vpop.f32.mrf.mxu0
      %v4427 = vadd.f32 0.0, %v4426
      %4428 = vmatmul.bf16.gmra.mxu0 %v3834
      %v4429 = vpop.f32.mrf.mxu0
      %v4430 = vadd.f32 0.0, %v4429
      %v4431 = vpop.f32.mrf.mxu0
      %v4432 = vadd.f32 0.0, %v4431
      %4433 = vdwg.mxu0
      %4434 = vmatpush.bf16.msra.mxu0 0
      %4435 = vmatpush.bf16.msra.mxu0 0
      %4436 = vmatpush.bf16.msra.mxu0 %v3881
      %4437 = vmatpush.bf16.msra.mxu0 %v3793
      %4438 = vmatpush.bf16.msra.mxu0 %v3783
      %4439 = vmatpush.bf16.msra.mxu0 %v3773
      %4440 = vmatpush.bf16.msra.mxu0 %v3763
      %4441 = vmatpush.bf16.msra.mxu0 %v3753
      %4442 = vmatmul.bf16.gmra.mxu0 %v3842
      %v4443 = vpop.f32.mrf.mxu0
      %v4444 = vadd.f32 %v4415, %v4443
      %v4445 = vpop.f32.mrf.mxu0
      %v4446 = vadd.f32 %v4417, %v4445
      %4447 = vmatmul.bf16.gmra.mxu0 %v3845
      %v4448 = vpop.f32.mrf.mxu0
      %v4449 = vadd.f32 %v4420, %v4448
      %v4450 = vpop.f32.mrf.mxu0
      %v4451 = vadd.f32 %v4422, %v4450
      %4452 = vmatmul.bf16.gmra.mxu0 %v3848
      %v4453 = vpop.f32.mrf.mxu0
      %v4454 = vadd.f32 %v4425, %v4453
      %v4455 = vpop.f32.mrf.mxu0
      %v4456 = vadd.f32 %v4427, %v4455
      %4457 = vmatmul.bf16.gmra.mxu0 %v3851
      %v4458 = vpop.f32.mrf.mxu0
      %v4459 = vadd.f32 %v4430, %v4458
      %v4460 = vpop.f32.mrf.mxu0
      %v4461 = vadd.f32 %v4432, %v4460
      %4462 = vdwg.mxu0
      %v4463 = vmax.f32 %v3922, %v3927
      %v4464 = vmax.f32 %v3980, %v3985
      %v4465 = vmax.f32 %v4038, %v4043
      %v4466 = vmax.f32 %v4096, %v4101
      %v4467 = vmax.f32 %v4154, %v4159
      %v4468 = vmax.f32 %v4212, %v4217
      %v4469 = vmax.f32 %v4270, %v4275
      %v4470 = vmax.f32 %v4328, %v4333
      %v4471 = vmax.f32 %v4386, %v4391
      %v4472 = vmax.f32 %v4444, %v4449
      %v4473 = vmax.f32 %v3924, %v3929
      %v4474 = vmax.f32 %v3982, %v3987
      %v4475 = vmax.f32 %v4040, %v4045
      %v4476 = vmax.f32 %v4098, %v4103
      %v4477 = vmax.f32 %v4156, %v4161
      %v4478 = vmax.f32 %v4214, %v4219
      %v4479 = vmax.f32 %v4272, %v4277
      %v4480 = vmax.f32 %v4330, %v4335
      %v4481 = vmax.f32 %v4388, %v4393
      %v4482 = vmax.f32 %v4446, %v4451
      %v4483 = vmax.f32 %v3932, %v3937
      %v4484 = vmax.f32 %v3990, %v3995
      %v4485 = vmax.f32 %v4048, %v4053
      %v4486 = vmax.f32 %v4106, %v4111
      %v4487 = vmax.f32 %v4164, %v4169
      %v4488 = vmax.f32 %v4222, %v4227
      %v4489 = vmax.f32 %v4280, %v4285
      %v4490 = vmax.f32 %v4338, %v4343
      %v4491 = vmax.f32 %v4396, %v4401
      %v4492 = vmax.f32 %v4454, %v4459
      %v4493 = vmax.f32 %v3934, %v3939
      %v4494 = vmax.f32 %v3992, %v3997
      %v4495 = vmax.f32 %v4050, %v4055
      %v4496 = vmax.f32 %v4108, %v4113
      %v4497 = vmax.f32 %v4166, %v4171
      %v4498 = vmax.f32 %v4224, %v4229
      %v4499 = vmax.f32 %v4282, %v4287
      %v4500 = vmax.f32 %v4340, %v4345
      %v4501 = vmax.f32 %v4398, %v4403
      %v4502 = vmax.f32 %v4456, %v4461
      %v4503 = vmax.f32 %v4463, %v4483
      %v4504 = vmax.f32 %v4464, %v4484
      %v4505 = vmax.f32 %v4465, %v4485
      %v4506 = vmax.f32 %v4466, %v4486
      %v4507 = vmax.f32 %v4467, %v4487
      %v4508 = vmax.f32 %v4468, %v4488
      %v4509 = vmax.f32 %v4469, %v4489
      %v4510 = vmax.f32 %v4470, %v4490
      %v4511 = vmax.f32 %v4471, %v4491
      %v4512 = vmax.f32 %v4472, %v4492
      %v4513 = vmax.f32 %v4473, %v4493
      %v4514 = vmax.f32 %v4474, %v4494
      %v4515 = vmax.f32 %v4475, %v4495
      %v4516 = vmax.f32 %v4476, %v4496
      %v4517 = vmax.f32 %v4477, %v4497
      %v4518 = vmax.f32 %v4478, %v4498
      %v4519 = vmax.f32 %v4479, %v4499
      %v4520 = vmax.f32 %v4480, %v4500
      %v4521 = vmax.f32 %v4481, %v4501
      %v4522 = vmax.f32 %v4482, %v4502
      %v4523 = vld [vmem:[%s4] sm:$0xff]
      %v4524 = vld [vmem:[%s4 + $0x8] sm:$0xff]
      %4526 = vset.pattern.permute.xlu0 0
      %4527 = vperm.xlu0 %4526, %v4523
      %v4528 = vpop.permute.xlu0 %4527
      %4531 = vset.pattern.permute.xlu0 0
      %4532 = vperm.xlu0 %4531, %v4524
      %v4533 = vpop.permute.xlu0 %4532
      %v4535 = vadd.f32 %v4503, %v4528
      %v4536 = vadd.f32 %v4504, %v4528
      %v4537 = vadd.f32 %v4505, %v4528
      %v4538 = vadd.f32 %v4506, %v4528
      %v4539 = vadd.f32 %v4507, %v4528
      %v4540 = vadd.f32 %v4508, %v4528
      %v4541 = vadd.f32 %v4509, %v4528
      %v4542 = vadd.f32 %v4510, %v4528
      %v4543 = vadd.f32 %v4511, %v4528
      %v4544 = vadd.f32 %v4512, %v4528
      %v4545 = vadd.f32 %v4513, %v4533
      %v4546 = vadd.f32 %v4514, %v4533
      %v4547 = vadd.f32 %v4515, %v4533
      %v4548 = vadd.f32 %v4516, %v4533
      %v4549 = vadd.f32 %v4517, %v4533
      %v4550 = vadd.f32 %v4518, %v4533
      %v4551 = vadd.f32 %v4519, %v4533
      %v4552 = vadd.f32 %v4520, %v4533
      %v4553 = vadd.f32 %v4521, %v4533
      %v4554 = vadd.f32 %v4522, %v4533
      %v4555 = vmax.f32 %v4535, 0.0
      %v4556 = vmax.f32 %v4536, 0.0
      %v4557 = vmax.f32 %v4537, 0.0
      %v4558 = vmax.f32 %v4538, 0.0
      %v4559 = vmax.f32 %v4539, 0.0
      %v4560 = vmax.f32 %v4540, 0.0
      %v4561 = vmax.f32 %v4541, 0.0
      %v4562 = vmax.f32 %v4542, 0.0
      %v4563 = vmax.f32 %v4543, 0.0
      %v4564 = vmax.f32 %v4544, 0.0
      %v4565 = vmax.f32 %v4545, 0.0
      %v4566 = vmax.f32 %v4546, 0.0
      %v4567 = vmax.f32 %v4547, 0.0
      %v4568 = vmax.f32 %v4548, 0.0
      %v4569 = vmax.f32 %v4549, 0.0
      %v4570 = vmax.f32 %v4550, 0.0
      %v4571 = vmax.f32 %v4551, 0.0
      %v4572 = vmax.f32 %v4552, 0.0
      %v4573 = vmax.f32 %v4553, 0.0
      %v4574 = vmax.f32 %v4554, 0.0
      %v4575 = vpack.c.bf16 %v4556, %v4555
      %v4576 = vpack.c.bf16 %v4558, %v4557
      %v4577 = vpack.c.bf16 %v4560, %v4559
      %v4578 = vpack.c.bf16 %v4562, %v4561
      %v4579 = vpack.c.bf16 %v4564, %v4563
      %v4580 = vpack.c.bf16 %v4566, %v4565
      %v4581 = vpack.c.bf16 %v4568, %v4567
      %v4582 = vpack.c.bf16 %v4570, %v4569
      %v4583 = vpack.c.bf16 %v4572, %v4571
      %v4584 = vpack.c.bf16 %v4574, %v4573
      %4585 = vst [vmem:[#allocation5] sm:$0xff] %v4575
      %4586 = vst [vmem:[#allocation5 + $0x8] sm:$0xff] %v4576
      %4587 = vst [vmem:[#allocation5 + $0x10] sm:$0xff] %v4577
      %4588 = vst [vmem:[#allocation5 + $0x18] sm:$0xff] %v4578
      %vm4589 = vcmask 261124
      %vm4590 = vmor %vm4589, %vm460
      %4591 = vst.msk [vmem:[#allocation5 + $0x20] sm:$0xff] %vm4590, %v4579
      %4592 = vst [vmem:[#allocation5 + $0x28] sm:$0xff] %v4580
      %4593 = vst [vmem:[#allocation5 + $0x30] sm:$0xff] %v4581
      %4594 = vst [vmem:[#allocation5 + $0x38] sm:$0xff] %v4582
      %4595 = vst [vmem:[#allocation5 + $0x40] sm:$0xff] %v4583
      %4596 = vst.msk [vmem:[#allocation5 + $0x48] sm:$0xff] %vm4590, %v4584
      %v4597 = vld [vmem:[#allocation5] sm:$0xf]
      %v4598 = vld [vmem:[#allocation5 + $0x28] sm:$0xf]
      %vm4599 = vcmask 257024
      %4600 = vst.msk [vmem:[#allocation6] sm:$0xf] %vm4599, %v4597
      %4601 = vst.msk [vmem:[#allocation6 + $0x4] sm:$0xf] %vm4599, %v4598
      %v4602 = vld [vmem:[#allocation5] sm:$0xf]
      %v4603 = vld [vmem:[#allocation5 + $0x28] sm:$0xf]
      %4606 = vrot.lane.b32.xlu0 %v4602, 96
      %v4607 = vpop.permute.xlu0 %4606
      %4608 = vrot.lane.b32.xlu0 %v4603, 96
      %v4609 = vpop.permute.xlu0 %4608
      %4612 = vst.msk [vmem:[#allocation6 + $0x8] sm:$0xf] %vm4599, %v4607
      %4613 = vst.msk [vmem:[#allocation6 + $0xc] sm:$0xf] %vm4599, %v4609
      %v4614 = vld [vmem:[#allocation5] sm:$0xf]
      %v4615 = vld [vmem:[#allocation5 + $0x28] sm:$0xf]
      %4618 = vrot.lane.b32.xlu0 %v4614, 64
      %v4619 = vpop.permute.xlu0 %4618
      %4620 = vrot.lane.b32.xlu0 %v4615, 64
      %v4621 = vpop.permute.xlu0 %4620
      %4624 = vst.msk [vmem:[#allocation6 + $0x10] sm:$0xf] %vm4599, %v4619
      %4625 = vst.msk [vmem:[#allocation6 + $0x14] sm:$0xf] %vm4599, %v4621
      %v4626 = vld [vmem:[#allocation5] sm:$0xf]
      %v4627 = vld [vmem:[#allocation5 + $0x28] sm:$0xf]
      %4630 = vrot.lane.b32.xlu0 %v4626, 32
      %v4631 = vpop.permute.xlu0 %4630
      %4632 = vrot.lane.b32.xlu0 %v4627, 32
      %v4633 = vpop.permute.xlu0 %4632
      %4636 = vst.msk [vmem:[#allocation6 + $0x18] sm:$0xf] %vm4599, %v4631
      %4637 = vst.msk [vmem:[#allocation6 + $0x1c] sm:$0xf] %vm4599, %v4633
      %v4638 = vld [vmem:[#allocation5 + $0x4] sm:$0xf]
      %v4639 = vld [vmem:[#allocation5 + $0x2c] sm:$0xf]
      %4640 = vst.msk [vmem:[#allocation6 + $0x20] sm:$0xf] %vm4599, %v4638
      %4641 = vst.msk [vmem:[#allocation6 + $0x24] sm:$0xf] %vm4599, %v4639
      %v4642 = vld [vmem:[#allocation5 + $0x8] sm:$0xf]
      %v4643 = vld [vmem:[#allocation5 + $0x30] sm:$0xf]
      %4644 = vst.msk [vmem:[#allocation6 + $0x28] sm:$0xf] %vm4599, %v4642
      %4645 = vst.msk [vmem:[#allocation6 + $0x2c] sm:$0xf] %vm4599, %v4643
      %v4646 = vld [vmem:[#allocation5 + $0x8] sm:$0xf]
      %v4647 = vld [vmem:[#allocation5 + $0x30] sm:$0xf]
      %4650 = vrot.lane.b32.xlu0 %v4646, 96
      %v4651 = vpop.permute.xlu0 %4650
      %4652 = vrot.lane.b32.xlu0 %v4647, 96
      %v4653 = vpop.permute.xlu0 %4652
      %4656 = vst.msk [vmem:[#allocation6 + $0x30] sm:$0xf] %vm4599, %v4651
      %4657 = vst.msk [vmem:[#allocation6 + $0x34] sm:$0xf] %vm4599, %v4653
      %v4658 = vld [vmem:[#allocation5 + $0x8] sm:$0xf]
      %v4659 = vld [vmem:[#allocation5 + $0x30] sm:$0xf]
      %4662 = vrot.lane.b32.xlu0 %v4658, 64
      %v4663 = vpop.permute.xlu0 %4662
      %4664 = vrot.lane.b32.xlu0 %v4659, 64
      %v4665 = vpop.permute.xlu0 %4664
      %4668 = vst.msk [vmem:[#allocation6 + $0x38] sm:$0xf] %vm4599, %v4663
      %4669 = vst.msk [vmem:[#allocation6 + $0x3c] sm:$0xf] %vm4599, %v4665
      %v4670 = vld [vmem:[#allocation5 + $0x8] sm:$0xf]
      %v4671 = vld [vmem:[#allocation5 + $0x30] sm:$0xf]
      %4674 = vrot.lane.b32.xlu0 %v4670, 32
      %v4675 = vpop.permute.xlu0 %4674
      %4676 = vrot.lane.b32.xlu0 %v4671, 32
      %v4677 = vpop.permute.xlu0 %4676
      %4680 = vst.msk [vmem:[#allocation6 + $0x40] sm:$0xf] %vm4599, %v4675
      %4681 = vst.msk [vmem:[#allocation6 + $0x44] sm:$0xf] %vm4599, %v4677
      %v4682 = vld [vmem:[#allocation5 + $0xc] sm:$0xf]
      %v4683 = vld [vmem:[#allocation5 + $0x34] sm:$0xf]
      %4684 = vst.msk [vmem:[#allocation6 + $0x48] sm:$0xf] %vm4599, %v4682
      %4685 = vst.msk [vmem:[#allocation6 + $0x4c] sm:$0xf] %vm4599, %v4683
      %v4686 = vld [vmem:[#allocation5 + $0x10] sm:$0xf]
      %v4687 = vld [vmem:[#allocation5 + $0x38] sm:$0xf]
      %4688 = vst.msk [vmem:[#allocation6 + $0x50] sm:$0xf] %vm4599, %v4686
      %4689 = vst.msk [vmem:[#allocation6 + $0x54] sm:$0xf] %vm4599, %v4687
      %v4690 = vld [vmem:[#allocation5 + $0x10] sm:$0xf]
      %v4691 = vld [vmem:[#allocation5 + $0x38] sm:$0xf]
      %4694 = vrot.lane.b32.xlu0 %v4690, 96
      %v4695 = vpop.permute.xlu0 %4694
      %4696 = vrot.lane.b32.xlu0 %v4691, 96
      %v4697 = vpop.permute.xlu0 %4696
      %4700 = vst.msk [vmem:[#allocation6 + $0x58] sm:$0xf] %vm4599, %v4695
      %4701 = vst.msk [vmem:[#allocation6 + $0x5c] sm:$0xf] %vm4599, %v4697
      %v4702 = vld [vmem:[#allocation5 + $0x10] sm:$0xf]
      %v4703 = vld [vmem:[#allocation5 + $0x38] sm:$0xf]
      %4706 = vrot.lane.b32.xlu0 %v4702, 64
      %v4707 = vpop.permute.xlu0 %4706
      %4708 = vrot.lane.b32.xlu0 %v4703, 64
      %v4709 = vpop.permute.xlu0 %4708
      %4712 = vst.msk [vmem:[#allocation6 + $0x60] sm:$0xf] %vm4599, %v4707
      %4713 = vst.msk [vmem:[#allocation6 + $0x64] sm:$0xf] %vm4599, %v4709
      %v4714 = vld [vmem:[#allocation5 + $0x10] sm:$0xf]
      %v4715 = vld [vmem:[#allocation5 + $0x38] sm:$0xf]
      %4718 = vrot.lane.b32.xlu0 %v4714, 32
      %v4719 = vpop.permute.xlu0 %4718
      %4720 = vrot.lane.b32.xlu0 %v4715, 32
      %v4721 = vpop.permute.xlu0 %4720
      %4724 = vst.msk [vmem:[#allocation6 + $0x68] sm:$0xf] %vm4599, %v4719
      %4725 = vst.msk [vmem:[#allocation6 + $0x6c] sm:$0xf] %vm4599, %v4721
      %v4726 = vld [vmem:[#allocation5 + $0x14] sm:$0xf]
      %v4727 = vld [vmem:[#allocation5 + $0x3c] sm:$0xf]
      %4728 = vst.msk [vmem:[#allocation6 + $0x70] sm:$0xf] %vm4599, %v4726
      %4729 = vst.msk [vmem:[#allocation6 + $0x74] sm:$0xf] %vm4599, %v4727
      %v4730 = vld [vmem:[#allocation5 + $0x18] sm:$0xf]
      %v4731 = vld [vmem:[#allocation5 + $0x40] sm:$0xf]
      %4732 = vst.msk [vmem:[#allocation6 + $0x78] sm:$0xf] %vm4599, %v4730
      %4733 = vst.msk [vmem:[#allocation6 + $0x7c] sm:$0xf] %vm4599, %v4731
      %v4734 = vld [vmem:[#allocation5 + $0x18] sm:$0xf]
      %v4735 = vld [vmem:[#allocation5 + $0x40] sm:$0xf]
      %4738 = vrot.lane.b32.xlu0 %v4734, 96
      %v4739 = vpop.permute.xlu0 %4738
      %4740 = vrot.lane.b32.xlu0 %v4735, 96
      %v4741 = vpop.permute.xlu0 %4740
      %4744 = vst.msk [vmem:[#allocation6 + $0x80] sm:$0xf] %vm4599, %v4739
      %4745 = vst.msk [vmem:[#allocation6 + $0x84] sm:$0xf] %vm4599, %v4741
      %v4746 = vld [vmem:[#allocation5 + $0x18] sm:$0xf]
      %v4747 = vld [vmem:[#allocation5 + $0x40] sm:$0xf]
      %4750 = vrot.lane.b32.xlu0 %v4746, 64
      %v4751 = vpop.permute.xlu0 %4750
      %4752 = vrot.lane.b32.xlu0 %v4747, 64
      %v4753 = vpop.permute.xlu0 %4752
      %4756 = vst.msk [vmem:[#allocation6 + $0x88] sm:$0xf] %vm4599, %v4751
      %4757 = vst.msk [vmem:[#allocation6 + $0x8c] sm:$0xf] %vm4599, %v4753
      %v4758 = vld [vmem:[#allocation5 + $0x18] sm:$0xf]
      %v4759 = vld [vmem:[#allocation5 + $0x40] sm:$0xf]
      %4762 = vrot.lane.b32.xlu0 %v4758, 32
      %v4763 = vpop.permute.xlu0 %4762
      %4764 = vrot.lane.b32.xlu0 %v4759, 32
      %v4765 = vpop.permute.xlu0 %4764
      %4768 = vst.msk [vmem:[#allocation6 + $0x90] sm:$0xf] %vm4599, %v4763
      %4769 = vst.msk [vmem:[#allocation6 + $0x94] sm:$0xf] %vm4599, %v4765
      %v4770 = vld [vmem:[#allocation5 + $0x1c] sm:$0xf]
      %v4771 = vld [vmem:[#allocation5 + $0x44] sm:$0xf]
      %4772 = vst.msk [vmem:[#allocation6 + $0x98] sm:$0xf] %vm4599, %v4770
      %4773 = vst.msk [vmem:[#allocation6 + $0x9c] sm:$0xf] %vm4599, %v4771
      %v4774 = vld [vmem:[#allocation5 + $0x20] sm:$0xf]
      %v4775 = vld [vmem:[#allocation5 + $0x48] sm:$0xf]
      %4776 = vst.msk [vmem:[#allocation6 + $0xa0] sm:$0xf] %vm4599, %v4774
      %4777 = vst.msk [vmem:[#allocation6 + $0xa4] sm:$0xf] %vm4599, %v4775
      %v4778 = vld [vmem:[#allocation5 + $0x20] sm:$0xf]
      %v4779 = vld [vmem:[#allocation5 + $0x48] sm:$0xf]
      %4782 = vrot.lane.b32.xlu0 %v4778, 96
      %v4783 = vpop.permute.xlu0 %4782
      %4784 = vrot.lane.b32.xlu0 %v4779, 96
      %v4785 = vpop.permute.xlu0 %4784
      %4788 = vst.msk [vmem:[#allocation6 + $0xa8] sm:$0xf] %vm4599, %v4783
      %4789 = vst.msk [vmem:[#allocation6 + $0xac] sm:$0xf] %vm4599, %v4785
      %v4790 = vld [vmem:[#allocation5 + $0x20] sm:$0xf]
      %v4791 = vld [vmem:[#allocation5 + $0x48] sm:$0xf]
      %4794 = vrot.lane.b32.xlu0 %v4790, 64
      %v4795 = vpop.permute.xlu0 %4794
      %4796 = vrot.lane.b32.xlu0 %v4791, 64
      %v4797 = vpop.permute.xlu0 %4796
      %4800 = vst.msk [vmem:[#allocation6 + $0xb0] sm:$0xf] %vm4599, %v4795
      %4801 = vst.msk [vmem:[#allocation6 + $0xb4] sm:$0xf] %vm4599, %v4797
      %v4802 = vld [vmem:[#allocation5 + $0x20] sm:$0xf]
      %v4803 = vld [vmem:[#allocation5 + $0x48] sm:$0xf]
      %4806 = vrot.lane.b32.xlu0 %v4802, 32
      %v4807 = vpop.permute.xlu0 %4806
      %4808 = vrot.lane.b32.xlu0 %v4803, 32
      %v4809 = vpop.permute.xlu0 %4808
      %4812 = vst.msk [vmem:[#allocation6 + $0xb8] sm:$0xf] %vm4599, %v4807
      %4813 = vst.msk [vmem:[#allocation6 + $0xbc] sm:$0xf] %vm4599, %v4809
      %v4814 = vld [vmem:[#allocation5 + $0x24] sm:$0xf]
      %v4815 = vld [vmem:[#allocation5 + $0x4c] sm:$0xf]
      %4816 = vst.msk [vmem:[#allocation6 + $0xc0] sm:$0xf] %vm4599, %v4814
      %4817 = vst.msk [vmem:[#allocation6 + $0xc4] sm:$0xf] %vm4599, %v4815
      %v4818 = vld [vmem:[%s5] sm:$0xff]
      %v4819 = vld [vmem:[%s5 + $0x8] sm:$0xff]
      %v4820 = vld [vmem:[%s5 + $0x10] sm:$0xff]
      %v4821 = vld [vmem:[%s5 + $0x18] sm:$0xff]
      %v4822 = vld [vmem:[%s5 + $0x20] sm:$0xff]
      %v4823 = vld [vmem:[%s5 + $0x28] sm:$0xff]
      %v4824 = vld [vmem:[%s5 + $0x30] sm:$0xff]
      %v4825 = vld [vmem:[%s5 + $0x38] sm:$0xff]
      %v4826 = vld [vmem:[%s5 + $0x40] sm:$0xff]
      %v4827 = vld [vmem:[%s5 + $0x48] sm:$0xff]
      %v4828 = vld [vmem:[%s5 + $0x50] sm:$0xff]
      %v4829 = vld [vmem:[%s5 + $0x58] sm:$0xff]
      %v4830 = vld [vmem:[%s5 + $0x60] sm:$0xff]
      %v4831 = vld [vmem:[%s5 + $0x68] sm:$0xff]
      %v4832 = vld [vmem:[%s5 + $0x70] sm:$0xff]
      %v4833 = vld [vmem:[%s5 + $0x78] sm:$0xff]
      %v4834 = vld [vmem:[%s5 + $0x80] sm:$0xff]
      %v4835 = vld [vmem:[%s5 + $0x88] sm:$0xff]
      %v4836 = vld [vmem:[%s5 + $0x90] sm:$0xff]
      %v4837 = vld [vmem:[%s5 + $0x98] sm:$0xff]
      %v4838 = vld [vmem:[%s5 + $0xa0] sm:$0xff]
      %v4839 = vld [vmem:[%s5 + $0xa8] sm:$0xff]
      %v4840 = vld [vmem:[%s5 + $0xb0] sm:$0xff]
      %v4841 = vld [vmem:[%s5 + $0xb8] sm:$0xff]
      %v4842 = vld [vmem:[%s5 + $0xc0] sm:$0xff]
      %v4843 = vld [vmem:[%s5 + $0xc8] sm:$0xff]
      %v4844 = vld [vmem:[%s5 + $0xd0] sm:$0xff]
      %v4845 = vld [vmem:[%s5 + $0xd8] sm:$0xff]
      %v4846 = vld [vmem:[%s5 + $0xe0] sm:$0xff]
      %v4847 = vld [vmem:[%s5 + $0xe8] sm:$0xff]
      %v4848 = vld [vmem:[#allocation6] sm:$0xf]
      %v4849 = vld [vmem:[#allocation6 + $0x4] sm:$0xf]
      %v4850 = vld [vmem:[#allocation6 + $0x8] sm:$0xf]
      %v4851 = vld [vmem:[#allocation6 + $0xc] sm:$0xf]
      %v4852 = vld [vmem:[#allocation6 + $0x10] sm:$0xf]
      %v4853 = vld [vmem:[#allocation6 + $0x14] sm:$0xf]
      %v4854 = vld [vmem:[#allocation6 + $0x18] sm:$0xf]
      %v4855 = vld [vmem:[#allocation6 + $0x1c] sm:$0xf]
      %v4856 = vld [vmem:[#allocation6 + $0x20] sm:$0xf]
      %v4857 = vld [vmem:[#allocation6 + $0x24] sm:$0xf]
      %v4858 = vld [vmem:[#allocation6 + $0x28] sm:$0xf]
      %v4859 = vld [vmem:[#allocation6 + $0x2c] sm:$0xf]
      %v4860 = vld [vmem:[#allocation6 + $0x30] sm:$0xf]
      %v4861 = vld [vmem:[#allocation6 + $0x34] sm:$0xf]
      %v4862 = vld [vmem:[#allocation6 + $0x38] sm:$0xf]
      %v4863 = vld [vmem:[#allocation6 + $0x3c] sm:$0xf]
      %v4864 = vld [vmem:[#allocation6 + $0x40] sm:$0xf]
      %v4865 = vld [vmem:[#allocation6 + $0x44] sm:$0xf]
      %v4866 = vld [vmem:[#allocation6 + $0x48] sm:$0xf]
      %v4867 = vld [vmem:[#allocation6 + $0x4c] sm:$0xf]
      %v4868 = vld [vmem:[#allocation6 + $0x50] sm:$0xf]
      %v4869 = vld [vmem:[#allocation6 + $0x54] sm:$0xf]
      %v4870 = vld [vmem:[#allocation6 + $0x58] sm:$0xf]
      %v4871 = vld [vmem:[#allocation6 + $0x5c] sm:$0xf]
      %v4872 = vld [vmem:[#allocation6 + $0x60] sm:$0xf]
      %v4873 = vld [vmem:[#allocation6 + $0x64] sm:$0xf]
      %v4874 = vld [vmem:[#allocation6 + $0x68] sm:$0xf]
      %v4875 = vld [vmem:[#allocation6 + $0x6c] sm:$0xf]
      %v4876 = vld [vmem:[#allocation6 + $0x70] sm:$0xf]
      %v4877 = vld [vmem:[#allocation6 + $0x74] sm:$0xf]
      %v4878 = vld [vmem:[#allocation6 + $0x78] sm:$0xf]
      %v4879 = vld [vmem:[#allocation6 + $0x7c] sm:$0xf]
      %v4880 = vld [vmem:[#allocation6 + $0x80] sm:$0xf]
      %v4881 = vld [vmem:[#allocation6 + $0x84] sm:$0xf]
      %v4882 = vld [vmem:[#allocation6 + $0x88] sm:$0xf]
      %v4883 = vld [vmem:[#allocation6 + $0x8c] sm:$0xf]
      %v4884 = vld [vmem:[#allocation6 + $0x90] sm:$0xf]
      %v4885 = vld [vmem:[#allocation6 + $0x94] sm:$0xf]
      %v4886 = vld [vmem:[#allocation6 + $0x98] sm:$0xf]
      %v4887 = vld [vmem:[#allocation6 + $0x9c] sm:$0xf]
      %v4888 = vld [vmem:[#allocation6 + $0xa0] sm:$0xf]
      %v4889 = vld [vmem:[#allocation6 + $0xa4] sm:$0xf]
      %v4890 = vld [vmem:[#allocation6 + $0xa8] sm:$0xf]
      %v4891 = vld [vmem:[#allocation6 + $0xac] sm:$0xf]
      %v4892 = vld [vmem:[#allocation6 + $0xb0] sm:$0xf]
      %v4893 = vld [vmem:[#allocation6 + $0xb4] sm:$0xf]
      %v4894 = vld [vmem:[#allocation6 + $0xb8] sm:$0xf]
      %v4895 = vld [vmem:[#allocation6 + $0xbc] sm:$0xf]
      %v4896 = vld [vmem:[#allocation6 + $0xc0] sm:$0xf]
      %v4897 = vld [vmem:[#allocation6 + $0xc4] sm:$0xf]
      %v4898 = vld [vmem:[%s6] sm:$0xff]
      %v4899 = vld [vmem:[%s6 + $0x8] sm:$0xff]
      %v4900 = vld [vmem:[%s6 + $0x10] sm:$0xff]
      %v4901 = vld [vmem:[%s6 + $0x18] sm:$0xff]
      %v4902 = vld [vmem:[%s6 + $0x20] sm:$0xff]
      %v4903 = vld [vmem:[%s6 + $0x28] sm:$0xff]
      %v4904 = vld [vmem:[%s6 + $0x30] sm:$0xff]
      %v4905 = vld [vmem:[%s6 + $0x38] sm:$0xff]
      %v4906 = vld [vmem:[%s6 + $0x40] sm:$0xff]
      %v4907 = vld [vmem:[%s6 + $0x48] sm:$0xff]
      %v4908 = vld [vmem:[%s6 + $0x50] sm:$0xff]
      %v4909 = vld [vmem:[%s6 + $0x58] sm:$0xff]
      %v4910 = vld [vmem:[%s6 + $0x60] sm:$0xff]
      %v4911 = vld [vmem:[%s6 + $0x68] sm:$0xff]
      %v4912 = vld [vmem:[%s6 + $0x70] sm:$0xff]
      %4914 = vset.pattern.permute.xlu0 0
      %4915 = vperm.xlu0 %4914, %v4898
      %v4916 = vpop.permute.xlu0 %4915
      %4919 = vset.pattern.permute.xlu0 0
      %4920 = vperm.xlu0 %4919, %v4899
      %v4921 = vpop.permute.xlu0 %4920
      %4924 = vset.pattern.permute.xlu0 0
      %4925 = vperm.xlu0 %4924, %v4900
      %v4926 = vpop.permute.xlu0 %4925
      %4929 = vset.pattern.permute.xlu0 0
      %4930 = vperm.xlu0 %4929, %v4901
      %v4931 = vpop.permute.xlu0 %4930
      %4934 = vset.pattern.permute.xlu0 0
      %4935 = vperm.xlu0 %4934, %v4902
      %v4936 = vpop.permute.xlu0 %4935
      %4939 = vset.pattern.permute.xlu0 0
      %4940 = vperm.xlu0 %4939, %v4903
      %v4941 = vpop.permute.xlu0 %4940
      %4944 = vset.pattern.permute.xlu0 0
      %4945 = vperm.xlu0 %4944, %v4904
      %v4946 = vpop.permute.xlu0 %4945
      %4949 = vset.pattern.permute.xlu0 0
      %4950 = vperm.xlu0 %4949, %v4905
      %v4951 = vpop.permute.xlu0 %4950
      %4954 = vset.pattern.permute.xlu0 0
      %4955 = vperm.xlu0 %4954, %v4906
      %v4956 = vpop.permute.xlu0 %4955
      %4959 = vset.pattern.permute.xlu0 0
      %4960 = vperm.xlu0 %4959, %v4907
      %v4961 = vpop.permute.xlu0 %4960
      %4964 = vset.pattern.permute.xlu0 0
      %4965 = vperm.xlu0 %4964, %v4908
      %v4966 = vpop.permute.xlu0 %4965
      %4969 = vset.pattern.permute.xlu0 0
      %4970 = vperm.xlu0 %4969, %v4909
      %v4971 = vpop.permute.xlu0 %4970
      %4974 = vset.pattern.permute.xlu0 0
      %4975 = vperm.xlu0 %4974, %v4910
      %v4976 = vpop.permute.xlu0 %4975
      %4979 = vset.pattern.permute.xlu0 0
      %4980 = vperm.xlu0 %4979, %v4911
      %v4981 = vpop.permute.xlu0 %4980
      %4984 = vset.pattern.permute.xlu0 0
      %4985 = vperm.xlu0 %4984, %v4912
      %v4986 = vpop.permute.xlu0 %4985
      %v5018 = vunpack.c.l.b16 %v4818
      %v5019 = vunpack.c.h.b16 %v4818
      %v5020 = vunpack.c.l.b16 %v4819
      %v5021 = vunpack.c.h.b16 %v4819
      %v5022 = vunpack.c.l.b16 %v4820
      %v5023 = vunpack.c.h.b16 %v4820
      %v5024 = vunpack.c.l.b16 %v4821
      %v5025 = vunpack.c.h.b16 %v4821
      %v5026 = vunpack.c.l.b16 %v4822
      %v5027 = vunpack.c.h.b16 %v4822
      %v5028 = vunpack.c.l.b16 %v4823
      %v5029 = vunpack.c.h.b16 %v4823
      %v5030 = vunpack.c.l.b16 %v4824
      %v5031 = vunpack.c.h.b16 %v4824
      %v5032 = vunpack.c.l.b16 %v4825
      %v5033 = vunpack.c.h.b16 %v4825
      %v5034 = vunpack.c.l.b16 %v4826
      %v5035 = vunpack.c.h.b16 %v4826
      %v5036 = vunpack.c.l.b16 %v4827
      %v5037 = vunpack.c.h.b16 %v4827
      %v5038 = vunpack.c.l.b16 %v4828
      %v5039 = vunpack.c.h.b16 %v4828
      %v5040 = vunpack.c.l.b16 %v4829
      %v5041 = vunpack.c.h.b16 %v4829
      %v5042 = vunpack.c.l.b16 %v4830
      %v5043 = vunpack.c.h.b16 %v4830
      %v5044 = vunpack.c.l.b16 %v4831
      %v5045 = vunpack.c.h.b16 %v4831
      %v5046 = vunpack.c.l.b16 %v4832
      %v5047 = vunpack.c.h.b16 %v4832
      %v5048 = vunpack.c.l.b16 %v4833
      %v5049 = vunpack.c.h.b16 %v4833
      %v5050 = vunpack.c.l.b16 %v4834
      %v5051 = vunpack.c.h.b16 %v4834
      %v5052 = vunpack.c.l.b16 %v4835
      %v5053 = vunpack.c.h.b16 %v4835
      %v5054 = vunpack.c.l.b16 %v4836
      %v5055 = vunpack.c.h.b16 %v4836
      %v5056 = vunpack.c.l.b16 %v4837
      %v5057 = vunpack.c.h.b16 %v4837
      %v5058 = vunpack.c.l.b16 %v4838
      %v5059 = vunpack.c.h.b16 %v4838
      %v5060 = vunpack.c.l.b16 %v4839
      %v5061 = vunpack.c.h.b16 %v4839
      %v5062 = vunpack.c.l.b16 %v4840
      %v5063 = vunpack.c.h.b16 %v4840
      %v5064 = vunpack.c.l.b16 %v4841
      %v5065 = vunpack.c.h.b16 %v4841
      %v5066 = vunpack.c.l.b16 %v4842
      %v5067 = vunpack.c.h.b16 %v4842
      %v5068 = vunpack.c.l.b16 %v4843
      %v5069 = vunpack.c.h.b16 %v4843
      %v5070 = vunpack.c.l.b16 %v4844
      %v5071 = vunpack.c.h.b16 %v4844
      %v5072 = vunpack.c.l.b16 %v4845
      %v5073 = vunpack.c.h.b16 %v4845
      %v5074 = vunpack.c.l.b16 %v4846
      %v5075 = vunpack.c.h.b16 %v4846
      %v5076 = vunpack.c.l.b16 %v4847
      %v5077 = vunpack.c.h.b16 %v4847
      %v5078 = vpack.c.b16 %v5022, %v5018
      %v5079 = vpack.c.b16 %v5023, %v5019
      %v5080 = vpack.c.b16 %v5024, %v5020
      %v5081 = vpack.c.b16 %v5025, %v5021
      %v5082 = vpack.c.b16 %v5030, %v5026
      %v5083 = vpack.c.b16 %v5031, %v5027
      %v5084 = vpack.c.b16 %v5032, %v5028
      %v5085 = vpack.c.b16 %v5033, %v5029
      %v5086 = vpack.c.b16 %v5038, %v5034
      %v5087 = vpack.c.b16 %v5039, %v5035
      %v5088 = vpack.c.b16 %v5040, %v5036
      %v5089 = vpack.c.b16 %v5041, %v5037
      %v5090 = vpack.c.b16 %v5046, %v5042
      %v5091 = vpack.c.b16 %v5047, %v5043
      %v5092 = vpack.c.b16 %v5048, %v5044
      %v5093 = vpack.c.b16 %v5049, %v5045
      %v5094 = vpack.c.b16 %v5054, %v5050
      %v5095 = vpack.c.b16 %v5055, %v5051
      %v5096 = vpack.c.b16 %v5056, %v5052
      %v5097 = vpack.c.b16 %v5057, %v5053
      %v5098 = vpack.c.b16 %v5062, %v5058
      %v5099 = vpack.c.b16 %v5063, %v5059
      %v5100 = vpack.c.b16 %v5064, %v5060
      %v5101 = vpack.c.b16 %v5065, %v5061
      %v5102 = vpack.c.b16 %v5070, %v5066
      %v5103 = vpack.c.b16 %v5071, %v5067
      %v5104 = vpack.c.b16 %v5072, %v5068
      %v5105 = vpack.c.b16 %v5073, %v5069
      %v5106 = vpack.c.b16 %v5074, %v5074
      %v5107 = vpack.c.b16 %v5075, %v5075
      %v5108 = vpack.c.b16 %v5076, %v5076
      %v5109 = vpack.c.b16 %v5077, %v5077
      %v5184 = vunpack.c.l.b16 %v4848
      %v5185 = vunpack.c.l.b16 %v4849
      %v5186 = vunpack.c.l.b16 %v4850
      %v5187 = vunpack.c.l.b16 %v4851
      %v5188 = vunpack.c.l.b16 %v4852
      %v5189 = vunpack.c.l.b16 %v4853
      %v5190 = vunpack.c.l.b16 %v4854
      %v5191 = vunpack.c.l.b16 %v4855
      %v5192 = vunpack.c.l.b16 %v4856
      %v5193 = vunpack.c.l.b16 %v4857
      %v5194 = vunpack.c.l.b16 %v4858
      %v5195 = vunpack.c.l.b16 %v4859
      %v5196 = vunpack.c.l.b16 %v4860
      %v5197 = vunpack.c.l.b16 %v4861
      %v5198 = vunpack.c.l.b16 %v4862
      %v5199 = vunpack.c.l.b16 %v4863
      %v5200 = vunpack.c.l.b16 %v4864
      %v5201 = vunpack.c.l.b16 %v4865
      %v5202 = vunpack.c.l.b16 %v4866
      %v5203 = vunpack.c.l.b16 %v4867
      %v5204 = vunpack.c.l.b16 %v4868
      %v5205 = vunpack.c.l.b16 %v4869
      %v5206 = vunpack.c.l.b16 %v4870
      %v5207 = vunpack.c.l.b16 %v4871
      %v5208 = vunpack.c.l.b16 %v4872
      %v5209 = vunpack.c.l.b16 %v4873
      %v5210 = vunpack.c.l.b16 %v4874
      %v5211 = vunpack.c.l.b16 %v4875
      %v5212 = vunpack.c.l.b16 %v4876
      %v5213 = vunpack.c.l.b16 %v4877
      %v5214 = vunpack.c.l.b16 %v4878
      %v5215 = vunpack.c.l.b16 %v4879
      %v5216 = vunpack.c.l.b16 %v4880
      %v5217 = vunpack.c.l.b16 %v4881
      %v5218 = vunpack.c.l.b16 %v4882
      %v5219 = vunpack.c.l.b16 %v4883
      %v5220 = vunpack.c.l.b16 %v4884
      %v5221 = vunpack.c.l.b16 %v4885
      %v5222 = vunpack.c.l.b16 %v4886
      %v5223 = vunpack.c.l.b16 %v4887
      %v5224 = vunpack.c.l.b16 %v4888
      %v5225 = vunpack.c.l.b16 %v4889
      %v5226 = vunpack.c.l.b16 %v4890
      %v5227 = vunpack.c.l.b16 %v4891
      %v5228 = vunpack.c.l.b16 %v4892
      %v5229 = vunpack.c.l.b16 %v4893
      %v5230 = vunpack.c.l.b16 %v4894
      %v5231 = vunpack.c.l.b16 %v4895
      %v5232 = vunpack.c.l.b16 %v4896
      %v5233 = vunpack.c.l.b16 %v4897
      %v5234 = vpack.c.b16 %v5185, %v5184
      %v5235 = vpack.c.b16 %v5187, %v5186
      %v5236 = vpack.c.b16 %v5189, %v5188
      %v5237 = vpack.c.b16 %v5191, %v5190
      %v5238 = vpack.c.b16 %v5193, %v5192
      %v5239 = vpack.c.b16 %v5195, %v5194
      %v5240 = vpack.c.b16 %v5197, %v5196
      %v5241 = vpack.c.b16 %v5199, %v5198
      %v5242 = vpack.c.b16 %v5201, %v5200
      %v5243 = vpack.c.b16 %v5203, %v5202
      %v5244 = vpack.c.b16 %v5205, %v5204
      %v5245 = vpack.c.b16 %v5207, %v5206
      %v5246 = vpack.c.b16 %v5209, %v5208
      %v5247 = vpack.c.b16 %v5211, %v5210
      %v5248 = vpack.c.b16 %v5213, %v5212
      %v5249 = vpack.c.b16 %v5215, %v5214
      %v5250 = vpack.c.b16 %v5217, %v5216
      %v5251 = vpack.c.b16 %v5219, %v5218
      %v5252 = vpack.c.b16 %v5221, %v5220
      %v5253 = vpack.c.b16 %v5223, %v5222
      %v5254 = vpack.c.b16 %v5225, %v5224
      %v5255 = vpack.c.b16 %v5227, %v5226
      %v5256 = vpack.c.b16 %v5229, %v5228
      %v5257 = vpack.c.b16 %v5231, %v5230
      %v5258 = vpack.c.b16 %v5233, %v5232
      %vm5284 = vcmask 130048
      %v5286 = vsel %vm5284, %v5081, 0
      %v5289 = vsel %vm5284, %v5085, 0
      %v5292 = vsel %vm5284, %v5089, 0
      %v5295 = vsel %vm5284, %v5093, 0
      %v5298 = vsel %vm5284, %v5097, 0
      %v5301 = vsel %vm5284, %v5101, 0
      %v5304 = vsel %vm5284, %v5105, 0
      %v5307 = vsel %vm5284, %v5109, 0
      %5309 = vmatpush.bf16.msra.mxu0 %v5241
      %5310 = vmatpush.bf16.msra.mxu0 %v5240
      %5311 = vmatpush.bf16.msra.mxu0 %v5239
      %5312 = vmatpush.bf16.msra.mxu0 %v5238
      %5313 = vmatpush.bf16.msra.mxu0 %v5237
      %5314 = vmatpush.bf16.msra.mxu0 %v5236
      %5315 = vmatpush.bf16.msra.mxu0 %v5235
      %5316 = vmatpush.bf16.msra.mxu0 %v5234
      %5317 = vmatmul.bf16.gmra.mxu0 %v5078
      %v5318 = vpop.f32.mrf.mxu0
      %v5319 = vadd.f32 %v4916, %v5318
      %v5320 = vpop.f32.mrf.mxu0
      %v5321 = vadd.f32 %v4921, %v5320
      %5322 = vmatmul.bf16.gmra.mxu0 %v5082
      %v5323 = vpop.f32.mrf.mxu0
      %v5324 = vadd.f32 %v4926, %v5323
      %v5325 = vpop.f32.mrf.mxu0
      %v5326 = vadd.f32 %v4931, %v5325
      %5327 = vmatmul.bf16.gmra.mxu0 %v5086
      %v5328 = vpop.f32.mrf.mxu0
      %v5329 = vadd.f32 %v4936, %v5328
      %v5330 = vpop.f32.mrf.mxu0
      %v5331 = vadd.f32 %v4941, %v5330
      %5332 = vmatmul.bf16.gmra.mxu0 %v5090
      %v5333 = vpop.f32.mrf.mxu0
      %v5334 = vadd.f32 %v4946, %v5333
      %v5335 = vpop.f32.mrf.mxu0
      %v5336 = vadd.f32 %v4951, %v5335
      %5337 = vmatmul.bf16.gmra.mxu0 %v5094
      %v5338 = vpop.f32.mrf.mxu0
      %v5339 = vadd.f32 %v4956, %v5338
      %v5340 = vpop.f32.mrf.mxu0
      %v5341 = vadd.f32 %v4961, %v5340
      %5342 = vmatmul.bf16.gmra.mxu0 %v5098
      %v5343 = vpop.f32.mrf.mxu0
      %v5344 = vadd.f32 %v4966, %v5343
      %v5345 = vpop.f32.mrf.mxu0
      %v5346 = vadd.f32 %v4971, %v5345
      %5347 = vmatmul.bf16.gmra.mxu0 %v5102
      %v5348 = vpop.f32.mrf.mxu0
      %v5349 = vadd.f32 %v4976, %v5348
      %v5350 = vpop.f32.mrf.mxu0
      %v5351 = vadd.f32 %v4981, %v5350
      %5352 = vmatmul.bf16.gmra.mxu0 %v5106
      %v5353 = vpop.f32.mrf.mxu0
      %v5354 = vadd.f32 %v4986, %v5353
      %v5355 = vpop.f32.mrf.mxu0
      %5356 = vdwg.mxu0
      %5357 = vmatpush.bf16.msra.mxu0 %v5249
      %5358 = vmatpush.bf16.msra.mxu0 %v5248
      %5359 = vmatpush.bf16.msra.mxu0 %v5247
      %5360 = vmatpush.bf16.msra.mxu0 %v5246
      %5361 = vmatpush.bf16.msra.mxu0 %v5245
      %5362 = vmatpush.bf16.msra.mxu0 %v5244
      %5363 = vmatpush.bf16.msra.mxu0 %v5243
      %5364 = vmatpush.bf16.msra.mxu0 %v5242
      %5365 = vmatmul.bf16.gmra.mxu0 %v5079
      %v5366 = vpop.f32.mrf.mxu0
      %v5367 = vadd.f32 %v5319, %v5366
      %v5368 = vpop.f32.mrf.mxu0
      %v5369 = vadd.f32 %v5321, %v5368
      %5370 = vmatmul.bf16.gmra.mxu0 %v5083
      %v5371 = vpop.f32.mrf.mxu0
      %v5372 = vadd.f32 %v5324, %v5371
      %v5373 = vpop.f32.mrf.mxu0
      %v5374 = vadd.f32 %v5326, %v5373
      %5375 = vmatmul.bf16.gmra.mxu0 %v5087
      %v5376 = vpop.f32.mrf.mxu0
      %v5377 = vadd.f32 %v5329, %v5376
      %v5378 = vpop.f32.mrf.mxu0
      %v5379 = vadd.f32 %v5331, %v5378
      %5380 = vmatmul.bf16.gmra.mxu0 %v5091
      %v5381 = vpop.f32.mrf.mxu0
      %v5382 = vadd.f32 %v5334, %v5381
      %v5383 = vpop.f32.mrf.mxu0
      %v5384 = vadd.f32 %v5336, %v5383
      %5385 = vmatmul.bf16.gmra.mxu0 %v5095
      %v5386 = vpop.f32.mrf.mxu0
      %v5387 = vadd.f32 %v5339, %v5386
      %v5388 = vpop.f32.mrf.mxu0
      %v5389 = vadd.f32 %v5341, %v5388
      %5390 = vmatmul.bf16.gmra.mxu0 %v5099
      %v5391 = vpop.f32.mrf.mxu0
      %v5392 = vadd.f32 %v5344, %v5391
      %v5393 = vpop.f32.mrf.mxu0
      %v5394 = vadd.f32 %v5346, %v5393
      %5395 = vmatmul.bf16.gmra.mxu0 %v5103
      %v5396 = vpop.f32.mrf.mxu0
      %v5397 = vadd.f32 %v5349, %v5396
      %v5398 = vpop.f32.mrf.mxu0
      %v5399 = vadd.f32 %v5351, %v5398
      %5400 = vmatmul.bf16.gmra.mxu0 %v5107
      %v5401 = vpop.f32.mrf.mxu0
      %v5402 = vadd.f32 %v5354, %v5401
      %v5403 = vpop.f32.mrf.mxu0
      %5404 = vdwg.mxu0
      %5405 = vmatpush.bf16.msra.mxu0 %v5257
      %5406 = vmatpush.bf16.msra.mxu0 %v5256
      %5407 = vmatpush.bf16.msra.mxu0 %v5255
      %5408 = vmatpush.bf16.msra.mxu0 %v5254
      %5409 = vmatpush.bf16.msra.mxu0 %v5253
      %5410 = vmatpush.bf16.msra.mxu0 %v5252
      %5411 = vmatpush.bf16.msra.mxu0 %v5251
      %5412 = vmatpush.bf16.msra.mxu0 %v5250
      %5413 = vmatmul.bf16.gmra.mxu0 %v5080
      %v5414 = vpop.f32.mrf.mxu0
      %v5415 = vadd.f32 %v5367, %v5414
      %v5416 = vpop.f32.mrf.mxu0
      %v5417 = vadd.f32 %v5369, %v5416
      %5418 = vmatmul.bf16.gmra.mxu0 %v5084
      %v5419 = vpop.f32.mrf.mxu0
      %v5420 = vadd.f32 %v5372, %v5419
      %v5421 = vpop.f32.mrf.mxu0
      %v5422 = vadd.f32 %v5374, %v5421
      %5423 = vmatmul.bf16.gmra.mxu0 %v5088
      %v5424 = vpop.f32.mrf.mxu0
      %v5425 = vadd.f32 %v5377, %v5424
      %v5426 = vpop.f32.mrf.mxu0
      %v5427 = vadd.f32 %v5379, %v5426
      %5428 = vmatmul.bf16.gmra.mxu0 %v5092
      %v5429 = vpop.f32.mrf.mxu0
      %v5430 = vadd.f32 %v5382, %v5429
      %v5431 = vpop.f32.mrf.mxu0
      %v5432 = vadd.f32 %v5384, %v5431
      %5433 = vmatmul.bf16.gmra.mxu0 %v5096
      %v5434 = vpop.f32.mrf.mxu0
      %v5435 = vadd.f32 %v5387, %v5434
      %v5436 = vpop.f32.mrf.mxu0
      %v5437 = vadd.f32 %v5389, %v5436
      %5438 = vmatmul.bf16.gmra.mxu0 %v5100
      %v5439 = vpop.f32.mrf.mxu0
      %v5440 = vadd.f32 %v5392, %v5439
      %v5441 = vpop.f32.mrf.mxu0
      %v5442 = vadd.f32 %v5394, %v5441
      %5443 = vmatmul.bf16.gmra.mxu0 %v5104
      %v5444 = vpop.f32.mrf.mxu0
      %v5445 = vadd.f32 %v5397, %v5444
      %v5446 = vpop.f32.mrf.mxu0
      %v5447 = vadd.f32 %v5399, %v5446
      %5448 = vmatmul.bf16.gmra.mxu0 %v5108
      %v5449 = vpop.f32.mrf.mxu0
      %v5450 = vadd.f32 %v5402, %v5449
      %v5451 = vpop.f32.mrf.mxu0
      %5452 = vdwg.mxu0
      %5453 = vmatpush.bf16.msra.mxu0 0
      %5454 = vmatpush.bf16.msra.mxu0 0
      %5455 = vmatpush.bf16.msra.mxu0 0
      %5456 = vmatpush.bf16.msra.mxu0 0
      %5457 = vmatpush.bf16.msra.mxu0 0
      %5458 = vmatpush.bf16.msra.mxu0 0
      %5459 = vmatpush.bf16.msra.mxu0 0
      %5460 = vmatpush.bf16.msra.mxu0 %v5258
      %5461 = vmatmul.bf16.gmra.mxu0 %v5286
      %v5462 = vpop.f32.mrf.mxu0
      %v5463 = vadd.f32 %v5415, %v5462
      %v5464 = vpop.f32.mrf.mxu0
      %v5465 = vadd.f32 %v5417, %v5464
      %5466 = vmatmul.bf16.gmra.mxu0 %v5289
      %v5467 = vpop.f32.mrf.mxu0
      %v5468 = vadd.f32 %v5420, %v5467
      %v5469 = vpop.f32.mrf.mxu0
      %v5470 = vadd.f32 %v5422, %v5469
      %5471 = vmatmul.bf16.gmra.mxu0 %v5292
      %v5472 = vpop.f32.mrf.mxu0
      %v5473 = vadd.f32 %v5425, %v5472
      %v5474 = vpop.f32.mrf.mxu0
      %v5475 = vadd.f32 %v5427, %v5474
      %5476 = vmatmul.bf16.gmra.mxu0 %v5295
      %v5477 = vpop.f32.mrf.mxu0
      %v5478 = vadd.f32 %v5430, %v5477
      %v5479 = vpop.f32.mrf.mxu0
      %v5480 = vadd.f32 %v5432, %v5479
      %5481 = vmatmul.bf16.gmra.mxu0 %v5298
      %v5482 = vpop.f32.mrf.mxu0
      %v5483 = vadd.f32 %v5435, %v5482
      %v5484 = vpop.f32.mrf.mxu0
      %v5485 = vadd.f32 %v5437, %v5484
      %5486 = vmatmul.bf16.gmra.mxu0 %v5301
      %v5487 = vpop.f32.mrf.mxu0
      %v5488 = vadd.f32 %v5440, %v5487
      %v5489 = vpop.f32.mrf.mxu0
      %v5490 = vadd.f32 %v5442, %v5489
      %5491 = vmatmul.bf16.gmra.mxu0 %v5304
      %v5492 = vpop.f32.mrf.mxu0
      %v5493 = vadd.f32 %v5445, %v5492
      %v5494 = vpop.f32.mrf.mxu0
      %v5495 = vadd.f32 %v5447, %v5494
      %5496 = vmatmul.bf16.gmra.mxu0 %v5307
      %v5497 = vpop.f32.mrf.mxu0
      %v5498 = vadd.f32 %v5450, %v5497
      %v5499 = vpop.f32.mrf.mxu0
      %5500 = vdwg.mxu0
      %v5501 = vmax.f32 %v5463, 0.0
      %v5502 = vmax.f32 %v5465, 0.0
      %v5503 = vmax.f32 %v5468, 0.0
      %v5504 = vmax.f32 %v5470, 0.0
      %v5505 = vmax.f32 %v5473, 0.0
      %v5506 = vmax.f32 %v5475, 0.0
      %v5507 = vmax.f32 %v5478, 0.0
      %v5508 = vmax.f32 %v5480, 0.0
      %v5509 = vmax.f32 %v5483, 0.0
      %v5510 = vmax.f32 %v5485, 0.0
      %v5511 = vmax.f32 %v5488, 0.0
      %v5512 = vmax.f32 %v5490, 0.0
      %v5513 = vmax.f32 %v5493, 0.0
      %v5514 = vmax.f32 %v5495, 0.0
      %v5515 = vmax.f32 %v5498, 0.0
      %v5516 = vpack.c.bf16 %v5502, %v5501
      %v5517 = vpack.c.bf16 %v5504, %v5503
      %v5518 = vpack.c.bf16 %v5506, %v5505
      %v5519 = vpack.c.bf16 %v5508, %v5507
      %v5520 = vpack.c.bf16 %v5510, %v5509
      %v5521 = vpack.c.bf16 %v5512, %v5511
      %v5522 = vpack.c.bf16 %v5514, %v5513
      %v5523 = vpack.c.bf16 %v5515, %v5515
      %v5524 = vld [vmem:[%s7] sm:$0xf]
      %v5525 = vld [vmem:[%s7 + $0x4] sm:$0xf]
      %v5526 = vld [vmem:[%s7 + $0x8] sm:$0xf]
      %v5527 = vld [vmem:[%s7 + $0xc] sm:$0xf]
      %v5528 = vld [vmem:[%s7 + $0x10] sm:$0xf]
      %v5529 = vld [vmem:[%s7 + $0x14] sm:$0xf]
      %v5530 = vld [vmem:[%s7 + $0x18] sm:$0xf]
      %v5531 = vld [vmem:[%s7 + $0x1c] sm:$0x3]
      %v5532 = vld [vmem:[%s8] sm:$0xff]
      %v5533 = vld [vmem:[%s8 + $0x8] sm:$0xff]
      %v5534 = vld [vmem:[%s8 + $0x10] sm:$0xff]
      %v5535 = vld [vmem:[%s8 + $0x18] sm:$0xff]
      %v5536 = vld [vmem:[%s8 + $0x20] sm:$0xff]
      %v5537 = vld [vmem:[%s8 + $0x28] sm:$0xff]
      %v5538 = vld [vmem:[%s8 + $0x30] sm:$0xff]
      %v5539 = vld [vmem:[%s8 + $0x38] sm:$0xf]
      %5541 = vset.pattern.permute.xlu0 0
      %5542 = vperm.xlu0 %5541, %v5532
      %v5543 = vpop.permute.xlu0 %5542
      %5546 = vset.pattern.permute.xlu0 0
      %5547 = vperm.xlu0 %5546, %v5533
      %v5548 = vpop.permute.xlu0 %5547
      %5551 = vset.pattern.permute.xlu0 0
      %5552 = vperm.xlu0 %5551, %v5534
      %v5553 = vpop.permute.xlu0 %5552
      %5556 = vset.pattern.permute.xlu0 0
      %5557 = vperm.xlu0 %5556, %v5535
      %v5558 = vpop.permute.xlu0 %5557
      %5561 = vset.pattern.permute.xlu0 0
      %5562 = vperm.xlu0 %5561, %v5536
      %v5563 = vpop.permute.xlu0 %5562
      %5566 = vset.pattern.permute.xlu0 0
      %5567 = vperm.xlu0 %5566, %v5537
      %v5568 = vpop.permute.xlu0 %5567
      %5571 = vset.pattern.permute.xlu0 0
      %5572 = vperm.xlu0 %5571, %v5538
      %v5573 = vpop.permute.xlu0 %5572
      %5576 = vset.pattern.permute.xlu0 0
      %5577 = vperm.xlu0 %5576, %v5539
      %v5578 = vpop.permute.xlu0 %5577
      %v5588 = vunpack.c.l.b16 %v5524
      %v5589 = vunpack.c.l.b16 %v5525
      %v5590 = vunpack.c.l.b16 %v5526
      %v5591 = vunpack.c.l.b16 %v5527
      %v5592 = vunpack.c.l.b16 %v5528
      %v5593 = vunpack.c.l.b16 %v5529
      %v5594 = vunpack.c.l.b16 %v5530
      %v5595 = vunpack.c.l.b16 %v5531
      %v5596 = vpack.c.b16 %v5589, %v5588
      %v5597 = vpack.c.b16 %v5591, %v5590
      %v5598 = vpack.c.b16 %v5593, %v5592
      %v5599 = vpack.c.b16 %v5595, %v5594
      %vm5600 = vcmask 982016
      %v5602 = vsel %vm5600, %v5596, 0
      %v5605 = vsel %vm5600, %v5597, 0
      %v5608 = vsel %vm5600, %v5598, 0
      %v5611 = vsel %vm5600, %v5599, 0
      %v5614 = vsel %vm460, %v5523, 0
      %5616 = vmatpush.bf16.msra.mxu0 %v5614
      %5617 = vmatpush.bf16.msra.mxu0 %v5522
      %5618 = vmatpush.bf16.msra.mxu0 %v5521
      %5619 = vmatpush.bf16.msra.mxu0 %v5520
      %5620 = vmatpush.bf16.msra.mxu0 %v5519
      %5621 = vmatpush.bf16.msra.mxu0 %v5518
      %5622 = vmatpush.bf16.msra.mxu0 %v5517
      %5623 = vmatpush.bf16.msra.mxu0 %v5516
      %5624 = vmatmul.bf16.gmra.mxu0 %v5602
      %v5625 = vpop.f32.mrf.mxu0
      %v5626 = vadd.f32 %v5543, %v5625
      %v5627 = vpop.f32.mrf.mxu0
      %v5628 = vadd.f32 %v5548, %v5627
      %5629 = vmatmul.bf16.gmra.mxu0 %v5605
      %v5630 = vpop.f32.mrf.mxu0
      %v5631 = vadd.f32 %v5553, %v5630
      %v5632 = vpop.f32.mrf.mxu0
      %v5633 = vadd.f32 %v5558, %v5632
      %5634 = vmatmul.bf16.gmra.mxu0 %v5608
      %v5635 = vpop.f32.mrf.mxu0
      %v5636 = vadd.f32 %v5563, %v5635
      %v5637 = vpop.f32.mrf.mxu0
      %v5638 = vadd.f32 %v5568, %v5637
      %5639 = vmatmul.bf16.gmra.mxu0 %v5611
      %v5640 = vpop.f32.mrf.mxu0
      %v5641 = vadd.f32 %v5573, %v5640
      %v5642 = vpop.f32.mrf.mxu0
      %v5643 = vadd.f32 %v5578, %v5642
      %5644 = vdwg.mxu0
      %v5645 = vmax.f32 %v5626, 0.0
      %v5646 = vmax.f32 %v5628, 0.0
      %v5647 = vmax.f32 %v5631, 0.0
      %v5648 = vmax.f32 %v5633, 0.0
      %v5649 = vmax.f32 %v5636, 0.0
      %v5650 = vmax.f32 %v5638, 0.0
      %v5651 = vmax.f32 %v5641, 0.0
      %v5652 = vmax.f32 %v5643, 0.0
      %v5653 = vpack.c.bf16 %v5646, %v5645
      %v5654 = vpack.c.bf16 %v5648, %v5647
      %v5655 = vpack.c.bf16 %v5650, %v5649
      %v5656 = vpack.c.bf16 %v5652, %v5651
      %v5657 = vld [vmem:[%s9] sm:$0xf]
      %v5658 = vld [vmem:[%s9 + $0x4] sm:$0xf]
      %v5659 = vld [vmem:[%s10] sm:$0xff]
      %v5660 = vld [vmem:[%s10 + $0x8] sm:$0xff]
      %5662 = vset.pattern.permute.xlu0 0
      %5663 = vperm.xlu0 %5662, %v5659
      %v5664 = vpop.permute.xlu0 %5663
      %5667 = vset.pattern.permute.xlu0 0
      %5668 = vperm.xlu0 %5667, %v5660
      %v5669 = vpop.permute.xlu0 %5668
      %v5673 = vunpack.c.l.b16 %v5657
      %v5674 = vunpack.c.l.b16 %v5658
      %v5675 = vpack.c.b16 %v5674, %v5673
      %vm5676 = vcmask 490496
      %v5678 = vsel %vm5676, %v5675, 0
      %vm5680 = vcmask 1045504
      %v5682 = vsel %vm5680, %v5656, 0
      %5684 = vmatpush.bf16.msra.mxu0 0
      %5685 = vmatpush.bf16.msra.mxu0 0
      %5686 = vmatpush.bf16.msra.mxu0 0
      %5687 = vmatpush.bf16.msra.mxu0 0
      %5688 = vmatpush.bf16.msra.mxu0 %v5682
      %5689 = vmatpush.bf16.msra.mxu0 %v5655
      %5690 = vmatpush.bf16.msra.mxu0 %v5654
      %5691 = vmatpush.bf16.msra.mxu0 %v5653
      %5692 = vmatmul.bf16.gmra.mxu0 %v5678
      %v5693 = vpop.f32.mrf.mxu0
      %v5694 = vadd.f32 %v5664, %v5693
      %v5695 = vpop.f32.mrf.mxu0
      %v5696 = vadd.f32 %v5669, %v5695
      %5697 = vdwg.mxu0
      %v5698 = vmax.f32 %v5694, 0.0
      %v5699 = vmax.f32 %v5696, 0.0
      %v5700 = vpack.c.bf16 %v5699, %v5698
      %v5701 = vld [vmem:[%s11] sm:$0xf]
      %v5702 = vld [vmem:[%s12] sm:$0xff]
      %5704 = vset.pattern.permute.xlu0 0
      %5705 = vperm.xlu0 %5704, %v5702
      %v5706 = vpop.permute.xlu0 %5705
      %v5709 = vsel %vm5284, %v5701, 0
      %5711 = vmatpush.bf16.msra.mxu0 0
      %5712 = vmatpush.bf16.msra.mxu0 0
      %5713 = vmatpush.bf16.msra.mxu0 0
      %5714 = vmatpush.bf16.msra.mxu0 0
      %5715 = vmatpush.bf16.msra.mxu0 0
      %5716 = vmatpush.bf16.msra.mxu0 0
      %5717 = vmatpush.bf16.msra.mxu0 0
      %5718 = vmatpush.bf16.msra.mxu0 %v5700
      %5719 = vmatmul.bf16.gmra.mxu0 %v5709
      %v5720 = vpop.f32.mrf.mxu0
      %v5721 = vadd.f32 %v5706, %v5720
      %v5722 = vpop.f32.mrf.mxu0
      %5723 = vdwg.mxu0
      %5724 = vst.msk [vmem:[%s438] sm:$0xff] %vm2002, %v5721
      %p5725 = scmp.lt.s32.totalorder %s24, 1
      %s5726 = scalar_select %p5725, %s24, 1
      %s5727 = smul.addr %s5726, 8
      %s5728 = scalar_lea.vmem %s13, %s5727
      // Predicated region
      $region73: #{network_forward.1} parent=71 // pred_check
        %p5729 = pneg %p320
      $region74: #{network_forward.1} parent=71 // pred_check_branch
        %5731 = sbr.rel (%p5729) target = $region76
      $region75: #{network_forward.1} parent=71 // pred_region
        _
      $region76: #{network_forward.1} parent=71 // pred_fallthru
        _
    $region72: #{network_forward.1} parent=5 // pred_fallthru
      _
    %p5732 = scmp.le.s32.totalorder 2, %s19
    // Predicated region
    $region77: #{network_forward.1} parent=5 // pred_check
      %p5733 = pneg %p5732
    $region78: #{network_forward.1} parent=5 // pred_check_branch
      %5735 = sbr.rel (%p5733) target = $region80
    $region79: #{network_forward.1} parent=5 // pred_region
      %s5736 = ssub.s32 %s19, 2
      // Predicated region
      $region81: #{network_forward.1} parent=79 // pred_check
        %p5737 = pneg %p326
      $region82: #{network_forward.1} parent=79 // pred_check_branch
        %5739 = sbr.rel (%p5737) target = $region84
      $region83: #{network_forward.1} parent=79 // pred_region
        %p5740 = scmp.lt.s32.totalorder %s25, 1
        %s5741 = scalar_select %p5740, %s25, 1
        %s5742 = smul.addr %s5741, 8
        %s5743 = scalar_lea.vmem %s13, %s5742
      $region84: #{network_forward.1} parent=79 // pred_fallthru
        _
    $region80: #{network_forward.1} parent=5 // pred_fallthru
      _
  $region6: #{network_forward.1} parent=0 // loop_footer
    %s23 = sadd.s32 1, %s19
  $region7: #{network_forward.1} parent=0 // loop_footer_branch
    %18 = sbr.rel target = $region3
  $region8: #{network_forward.1} parent=0 // loop_exit
    _

</llo_original>
